<compile_context>
chip_gen: v7x
topology: tpu7x:2x2x1
jax: 0.10.0
libtpu: 0.0.40
codegen_flags: <defaults>
</compile_context>

<pallas_src>
import functools
import math
import re

import jax
import jax.numpy as jnp
from jax import lax
from jax.experimental import pallas as pl
from jax.experimental.pallas import tpu as pltpu


VMEM_LIMIT = 32 * 1024 * 1024   # safe scoped-VMEM cap on v5e / v6e / v7x
LN_EPS = 1e-5


def sanitize(x: str) -> str:
    return re.sub('[^A-Za-z0-9_]', '_', x)


def _cparams(*sems):
    return pltpu.CompilerParams(dimension_semantics=sems,
                                vmem_limit_bytes=VMEM_LIMIT)


def _full_spec(shape):
    """BlockSpec covering the whole array (grid=(1,) -> everything VMEM resident)."""
    nd = len(shape)
    return pl.BlockSpec(shape, lambda *_: (0,) * nd)


# ----------------------------- in-kernel helpers -----------------------------

def _layernorm(y, w, b, eps):
    """Single-pass LayerNorm: var = E[y^2] - E[y]^2 (one traversal, two overlapping reduces)."""
    mean = jnp.mean(y, axis=-1, keepdims=True)
    meansq = jnp.mean(y * y, axis=-1, keepdims=True)
    var = meansq - mean * mean
    return (y - mean) * lax.rsqrt(var + eps) * w + b


def _mha(q, k, v, bias, num_heads):
    """Multi-head attention on batch-flattened 2-D activations.

    q: (Rq, D), k/v: (Rk, D) f32 (Q already carries the 1/sqrt(dh) scale).
    bias: (Rq, Rk) additive block-diagonal mask (0 within a batch, -1e30 across batches),
    so the flattened-batch score matrix computes exactly per-batch attention with one
    MXU matmul per head instead of per-batch loops.
    """
    D = q.shape[-1]
    dh = D // num_heads
    outs = []
    for h in range(num_heads):                      # static unroll over heads
        sl = slice(h * dh, (h + 1) * dh)
        qh = q[:, sl].astype(jnp.bfloat16)
        kh = k[:, sl].astype(jnp.bfloat16)
        vh = v[:, sl].astype(jnp.bfloat16)
        s = lax.dot_general(qh, kh, (((1,), (1,)), ((), ())),
                            preferred_element_type=jnp.float32) + bias   # (Rq, Rk)
        m = jnp.max(s, axis=-1, keepdims=True)
        p = jnp.exp(s - m)
        denom = jnp.sum(p, axis=-1, keepdims=True)
        oh = jnp.dot(p.astype(jnp.bfloat16), vh,
                     preferred_element_type=jnp.float32)                 # (Rq, dh)
        outs.append(oh * pl.reciprocal(denom, approx=True))
    return jnp.concatenate(outs, axis=-1)                                # (Rq, D)


# ----------------------------- Pallas kernels -----------------------------

def _encoder_kernel(x_ref, pe_ref, bias_ref, pw_ref, pb_ref,
                    wqkv_ref, bqkv_ref, wo_ref, bo_ref, ln1w_ref, ln1b_ref,
                    w1_ref, b1_ref, w2_ref, b2_ref, ln2w_ref, ln2b_ref,
                    mem_ref, *, num_layers, num_heads, eps):
    """Projector + PE add + full transformer-encoder stack (all in VMEM)."""
    D = pw_ref.shape[1]
    bias = bias_ref[...]                                                 # (B*N, B*N)

    # projector: relu(x @ w + b) + positional encodings
    x = jnp.dot(x_ref[...], pw_ref[...], preferred_element_type=jnp.float32) + pb_ref[...]
    x = jnp.maximum(x, 0.0) + pe_ref[...]                                # (B*N, D) f32

    for l in range(num_layers):                                          # static unroll
        # --- self-attention sublayer (fused QKV proj, scale folded into Wq) ---
        qkv = jnp.dot(x.astype(jnp.bfloat16), wqkv_ref[l],
                      preferred_element_type=jnp.float32) + bqkv_ref[l]  # (B*N, 3D)
        attn = _mha(qkv[:, :D], qkv[:, D:2 * D], qkv[:, 2 * D:], bias, num_heads)
        attn = jnp.dot(attn.astype(jnp.bfloat16), wo_ref[l],
                       preferred_element_type=jnp.float32) + bo_ref[l]
        x = _layernorm(x + attn, ln1w_ref[l], ln1b_ref[l], eps)          # post-norm

        # --- FFN sublayer ---
        h = jnp.maximum(jnp.dot(x.astype(jnp.bfloat16), w1_ref[l],
                                preferred_element_type=jnp.float32) + b1_ref[l], 0.0)
        y = jnp.dot(h.astype(jnp.bfloat16), w2_ref[l],
                    preferred_element_type=jnp.float32) + b2_ref[l]
        x = _layernorm(x + y, ln2w_ref[l], ln2b_ref[l], eps)

    mem_ref[...] = x.astype(mem_ref.dtype)                               # bf16 memory


def _decoder_kernel(ct_ref, mem_ref, sbias_ref, xbias_ref,
                    wqkv_ref, bqkv_ref, wos_ref, bos_ref, ln1w_ref, ln1b_ref,
                    wqx_ref, bqx_ref, wkvx_ref, bkvx_ref, wox_ref, box_ref,
                    ln2w_ref, ln2b_ref,
                    w1_ref, b1_ref, w2_ref, b2_ref, ln3w_ref, ln3b_ref,
                    hw_ref, hb_ref, out_ref, *, num_layers, num_heads, eps):
    """Full transformer-decoder stack + fused per-label classification heads."""
    D = wos_ref.shape[-1]
    t = ct_ref[...]                                                      # (B*K, D) f32
    mem = mem_ref[...]                                                   # (B*N, D) bf16
    sbias = sbias_ref[...]                                               # (B*K, B*K)
    xbias = xbias_ref[...]                                               # (B*K, B*N)

    for l in range(num_layers):                                          # static unroll
        # --- self-attention over class tokens ---
        qkv = jnp.dot(t.astype(jnp.bfloat16), wqkv_ref[l],
                      preferred_element_type=jnp.float32) + bqkv_ref[l]  # (B*K, 3D)
        attn = _mha(qkv[:, :D], qkv[:, D:2 * D], qkv[:, 2 * D:], sbias, num_heads)
        attn = jnp.dot(attn.astype(jnp.bfloat16), wos_ref[l],
                       preferred_element_type=jnp.float32) + bos_ref[l]
        t = _layernorm(t + attn, ln1w_ref[l], ln1b_ref[l], eps)

        # --- cross-attention onto encoder memory ---
        q = jnp.dot(t.astype(jnp.bfloat16), wqx_ref[l],
                    preferred_element_type=jnp.float32) + bqx_ref[l]     # (B*K, D)
        kv = jnp.dot(mem, wkvx_ref[l],
                     preferred_element_type=jnp.float32) + bkvx_ref[l]   # (B*N, 2D)
        attn = _mha(q, kv[:, :D], kv[:, D:], xbias, num_heads)
        attn = jnp.dot(attn.astype(jnp.bfloat16), wox_ref[l],
                       preferred_element_type=jnp.float32) + box_ref[l]
        t = _layernorm(t + attn, ln2w_ref[l], ln2b_ref[l], eps)

        # --- FFN sublayer ---
        h = jnp.maximum(jnp.dot(t.astype(jnp.bfloat16), w1_ref[l],
                                preferred_element_type=jnp.float32) + b1_ref[l], 0.0)
        y = jnp.dot(h.astype(jnp.bfloat16), w2_ref[l],
                    preferred_element_type=jnp.float32) + b2_ref[l]
        t = _layernorm(t + y, ln3w_ref[l], ln3b_ref[l], eps)

    # all per-label heads fused into a single lane-dense (D, n_pad) matmul
    out_ref[...] = (jnp.dot(t.astype(jnp.bfloat16), hw_ref[...],
                            preferred_element_type=jnp.float32) + hb_ref[...]
                    ).astype(out_ref.dtype)


# ----------------------------- pallas_call wrappers -----------------------------

def encoder_forward(x_tok, pe, bias, p, *, num_heads):
    M, _ = x_tok.shape
    D = p["proj_w"].shape[1]
    L = p["enc_wqkv"].shape[0]
    kernel = functools.partial(_encoder_kernel, num_layers=L,
                               num_heads=num_heads, eps=LN_EPS)
    args = (x_tok, pe, bias, p["proj_w"], p["proj_b"],
            p["enc_wqkv"], p["enc_bqkv"], p["enc_wo"], p["enc_bo"],
            p["enc_ln1w"], p["enc_ln1b"],
            p["enc_w1"], p["enc_b1"], p["enc_w2"], p["enc_b2"],
            p["enc_ln2w"], p["enc_ln2b"])
    return pl.pallas_call(
        kernel,
        out_shape=jax.ShapeDtypeStruct((M, D), jnp.bfloat16),
        grid=(1,),
        in_specs=[_full_spec(a.shape) for a in args],
        out_specs=_full_spec((M, D)),
        compiler_params=_cparams("arbitrary"),
    )(*args)


def decoder_forward(ct, mem, sbias, xbias, p, *, num_heads):
    M, _ = ct.shape
    n_lane = p["heads_w"].shape[1]
    L = p["dec_wqkv"].shape[0]
    kernel = functools.partial(_decoder_kernel, num_layers=L,
                               num_heads=num_heads, eps=LN_EPS)
    args = (ct, mem, sbias, xbias,
            p["dec_wqkv"], p["dec_bqkv"], p["dec_wo"], p["dec_bo"],
            p["dec_ln1w"], p["dec_ln1b"],
            p["dec_wqx"], p["dec_bqx"], p["dec_wkvx"], p["dec_bkvx"],
            p["dec_wox"], p["dec_box"], p["dec_ln2w"], p["dec_ln2b"],
            p["dec_w1"], p["dec_b1"], p["dec_w2"], p["dec_b2"],
            p["dec_ln3w"], p["dec_ln3b"],
            p["heads_w"], p["heads_b"])
    return pl.pallas_call(
        kernel,
        out_shape=jax.ShapeDtypeStruct((M, n_lane), jnp.float32),
        grid=(1,),
        in_specs=[_full_spec(a.shape) for a in args],
        out_specs=_full_spec((M, n_lane)),
        compiler_params=_cparams("arbitrary"),
    )(*args)


# ----------------------------- full forward -----------------------------

def enc_dec_transformer_forward(params, tile_tokens, tile_positions, *,
                                num_encoder_heads, num_decoder_heads,
                                positional_encoding=True):
    B, N, d_feat = tile_tokens.shape
    d_pad, D = params["proj_w"].shape
    K = params["class_tokens"].shape[0]

    # sinusoidal positional encodings (same formula as the torch reference, base 100000)
    if positional_encoding:
        denom = 100000.0 ** (jnp.arange(D // 4, dtype=jnp.float32) / D)
        pe_arg = tile_positions[..., None] / denom                       # (B, N, 2, D//4)
        pe = jnp.concatenate([jnp.sin(pe_arg).reshape(B, N, -1),
                              jnp.cos(pe_arg).reshape(B, N, -1)], axis=-1)
    else:
        pe = jnp.zeros((B, N, D), jnp.float32)

    # zero-pad the feature dim to a lane-friendly 128 width and pre-cast tokens to bf16
    x_tok = jnp.zeros((B * N, d_pad), jnp.bfloat16)
    x_tok = x_tok.at[:, :d_feat].set(tile_tokens.reshape(B * N, d_feat).astype(jnp.bfloat16))

    # additive block-diagonal masks: batch structure is handled with masked full-width
    # attention so the kernels operate on batch-flattened 2-D activations everywhere
    tok_b = jnp.arange(B * N) // N
    ct_b = jnp.arange(B * K) // K
    neg = jnp.float32(-1e30)
    enc_bias = jnp.where(tok_b[:, None] == tok_b[None, :], 0.0, neg).astype(jnp.float32)
    dec_self_bias = jnp.where(ct_b[:, None] == ct_b[None, :], 0.0, neg).astype(jnp.float32)
    dec_cross_bias = jnp.where(ct_b[:, None] == tok_b[None, :], 0.0, neg).astype(jnp.float32)

    # kernel 1: projector + PE + full encoder stack
    memory = encoder_forward(x_tok, pe.reshape(B * N, D).astype(jnp.float32),
                             enc_bias, params, num_heads=num_encoder_heads)

    # kernel 2: full decoder stack + fused heads
    ct = jnp.broadcast_to(params["class_tokens"][None], (B, K, D)).reshape(B * K, D)
    out = decoder_forward(ct, memory, dec_self_bias, dec_cross_bias, params,
                          num_heads=num_decoder_heads)
    out = out.reshape(B, K, -1)

    logits = {}
    off = 0
    for idx, (label, n_out) in enumerate(zip(params["target_labels"],
                                             params["target_n_outs"])):
        h = out[:, idx, off:off + n_out]            # (B, n_out)
        if n_out == 1:                              # matches torch .squeeze(dim=1)
            h = h[:, 0]
        logits[label] = h
        off += n_out
    return logits


# ----------------------------- deterministic init (packed, kernel-ready) -----------------------------

def init_params(key, *, d_features, target_n_outs, d_model, dim_feedforward,
                num_encoder_layers, num_decoder_layers,
                num_encoder_heads, num_decoder_heads):
    keys = iter(jax.random.split(key, 4096))
    f32 = jnp.float32
    bf = lambda a: a.astype(jnp.bfloat16)

    def w(shape, scale=0.1):
        return jax.random.normal(next(keys), shape, f32) * scale

    def stack(make, n):
        return jnp.stack([make() for _ in range(n)], axis=0)

    ones = lambda n: jnp.ones((n, 1, d_model), f32)
    zeros = lambda n: jnp.zeros((n, 1, d_model), f32)

    # projector weight zero-padded on the contraction dim to 128 lanes
    d_pad = max(128, ((d_features + 127) // 128) * 128)
    proj_w = jnp.zeros((d_pad, d_model), f32).at[:d_features].set(w((d_features, d_model)))

    enc_scale = 1.0 / math.sqrt(d_model // num_encoder_heads)
    dec_scale = 1.0 / math.sqrt(d_model // num_decoder_heads)

    def qkv_w(s):   # fused (D, 3D) projection, softmax scale folded into the Q columns
        return w((d_model, 3 * d_model)).at[:, :d_model].mul(s)

    def qkv_b(s):
        return w((1, 3 * d_model), 0.02).at[:, :d_model].mul(s)

    # all per-label heads fused into one (D, n_pad) weight, zero padded to 128 lanes
    labels = list(target_n_outs.keys())
    n_outs = [target_n_outs[l] for l in labels]
    n_total = sum(n_outs)
    n_lane = max(128, ((n_total + 127) // 128) * 128)
    heads_w = jnp.zeros((d_model, n_lane), f32)
    heads_b = jnp.zeros((1, n_lane), f32)
    off = 0
    for n in n_outs:
        heads_w = heads_w.at[:, off:off + n].set(w((d_model, n)))
        heads_b = heads_b.at[:, off:off + n].set(w((1, n), 0.02))
        off += n

    ne, nd = num_encoder_layers, num_decoder_layers
    return dict(
        proj_w=bf(proj_w), proj_b=w((1, d_model), 0.02),
        # encoder stack (layer axis leading, weights bf16)
        enc_wqkv=bf(stack(lambda: qkv_w(enc_scale), ne)),
        enc_bqkv=stack(lambda: qkv_b(enc_scale), ne),
        enc_wo=bf(stack(lambda: w((d_model, d_model)), ne)),
        enc_bo=stack(lambda: w((1, d_model), 0.02), ne),
        enc_ln1w=ones(ne), enc_ln1b=zeros(ne),
        enc_w1=bf(stack(lambda: w((d_model, dim_feedforward)), ne)),
        enc_b1=stack(lambda: w((1, dim_feedforward), 0.02), ne),
        enc_w2=bf(stack(lambda: w((dim_feedforward, d_model)), ne)),
        enc_b2=stack(lambda: w((1, d_model), 0.02), ne),
        enc_ln2w=ones(ne), enc_ln2b=zeros(ne),
        # decoder stack
        dec_wqkv=bf(stack(lambda: qkv_w(dec_scale), nd)),
        dec_bqkv=stack(lambda: qkv_b(dec_scale), nd),
        dec_wo=bf(stack(lambda: w((d_model, d_model)), nd)),
        dec_bo=stack(lambda: w((1, d_model), 0.02), nd),
        dec_ln1w=ones(nd), dec_ln1b=zeros(nd),
        dec_wqx=bf(stack(lambda: w((d_model, d_model)) * dec_scale, nd)),
        dec_bqx=stack(lambda: w((1, d_model), 0.02) * dec_scale, nd),
        dec_wkvx=bf(stack(lambda: w((d_model, 2 * d_model)), nd)),
        dec_bkvx=stack(lambda: w((1, 2 * d_model), 0.02), nd),
        dec_wox=bf(stack(lambda: w((d_model, d_model)), nd)),
        dec_box=stack(lambda: w((1, d_model), 0.02), nd),
        dec_ln2w=ones(nd), dec_ln2b=zeros(nd),
        dec_w1=bf(stack(lambda: w((d_model, dim_feedforward)), nd)),
        dec_b1=stack(lambda: w((1, dim_feedforward), 0.02), nd),
        dec_w2=bf(stack(lambda: w((dim_feedforward, d_model)), nd)),
        dec_b2=stack(lambda: w((1, d_model), 0.02), nd),
        dec_ln3w=ones(nd), dec_ln3b=zeros(nd),
        class_tokens=jax.random.uniform(next(keys), (len(labels), d_model), f32),
        heads_w=bf(heads_w), heads_b=heads_b,
        target_labels=labels, target_n_outs=n_outs,
    )


# ----------------------------- main -----------------------------

if __name__ == "__main__":
    # small, lane-friendly hyper-params (torch default d_model=256/nhead=5 is not divisible;
    # we use d_model=128 / 4 heads so dh=32 and the residual stream is 128-lane dense)
    d_features = 24
    d_model = 128
    num_encoder_heads = 4
    num_decoder_heads = 4
    num_encoder_layers = 2
    num_decoder_layers = 2
    dim_feedforward = 256
    target_n_outs = {"isMSIH": 2, "grade (g1 vs g2/3)": 1}
    B, N = 2, 16

    key = jax.random.PRNGKey(0)
    k_params, k_tok, k_pos = jax.random.split(key, 3)
    params = init_params(k_params, d_features=d_features,
                         target_n_outs=target_n_outs, d_model=d_model,
                         dim_feedforward=dim_feedforward,
                         num_encoder_layers=num_encoder_layers,
                         num_decoder_layers=num_decoder_layers,
                         num_encoder_heads=num_encoder_heads,
                         num_decoder_heads=num_decoder_heads)

    tile_tokens = jax.random.normal(k_tok, (B, N, d_features), jnp.float32)
    tile_positions = jax.random.uniform(k_pos, (B, N, 2), jnp.float32) * 10.0

    logits = enc_dec_transformer_forward(
        params, tile_tokens, tile_positions,
        num_encoder_heads=num_encoder_heads,
        num_decoder_heads=num_decoder_heads,
        positional_encoding=True)

    jax.block_until_ready(logits)
    assert logits["isMSIH"].shape == (B, 2)
    assert logits["grade (g1 vs g2/3)"].shape == (B,)
    print("KERNEL_OK")
</pallas_src>

<mosaic_0001>
module attributes {stable_mosaic.version = 11 : i64} {
  func.func @_encoder_kernel(%arg0: i32, %arg1: memref<32x128xbf16, #tpu.memory_space<vmem>>, %arg2: memref<32x128xf32, #tpu.memory_space<vmem>>, %arg3: memref<32x32xf32, #tpu.memory_space<vmem>>, %arg4: memref<128x128xbf16, #tpu.memory_space<vmem>>, %arg5: memref<1x128xf32, #tpu.memory_space<vmem>>, %arg6: memref<2x128x384xbf16, #tpu.memory_space<vmem>>, %arg7: memref<2x1x384xf32, #tpu.memory_space<vmem>>, %arg8: memref<2x128x128xbf16, #tpu.memory_space<vmem>>, %arg9: memref<2x1x128xf32, #tpu.memory_space<vmem>>, %arg10: memref<2x1x128xf32, #tpu.memory_space<vmem>>, %arg11: memref<2x1x128xf32, #tpu.memory_space<vmem>>, %arg12: memref<2x128x256xbf16, #tpu.memory_space<vmem>>, %arg13: memref<2x1x256xf32, #tpu.memory_space<vmem>>, %arg14: memref<2x256x128xbf16, #tpu.memory_space<vmem>>, %arg15: memref<2x1x128xf32, #tpu.memory_space<vmem>>, %arg16: memref<2x1x128xf32, #tpu.memory_space<vmem>>, %arg17: memref<2x1x128xf32, #tpu.memory_space<vmem>>, %arg18: memref<32x128xbf16, #tpu.memory_space<vmem>>) attributes {dimension_semantics = [#tpu.dimension_semantics<arbitrary>], iteration_bounds = array<i64: 1>, scalar_prefetch = 0 : i64, scratch_operands = 0 : i64, tpu.core_type = #tpu.core_type<tc>, window_params = [{pipeline_mode = #tpu.pipeline_mode<synchronous>, transform_indices = @transform_0, window_bounds = array<i64: 32, 128>}, {pipeline_mode = #tpu.pipeline_mode<synchronous>, transform_indices = @transform_1, window_bounds = array<i64: 32, 128>}, {pipeline_mode = #tpu.pipeline_mode<synchronous>, transform_indices = @transform_2, window_bounds = array<i64: 32, 32>}, {pipeline_mode = #tpu.pipeline_mode<synchronous>, transform_indices = @transform_3, window_bounds = array<i64: 128, 128>}, {pipeline_mode = #tpu.pipeline_mode<synchronous>, transform_indices = @transform_4, window_bounds = array<i64: 1, 128>}, {pipeline_mode = #tpu.pipeline_mode<synchronous>, transform_indices = @transform_5, window_bounds = array<i64: 2, 128, 384>}, {pipeline_mode = #tpu.pipeline_mode<synchronous>, transform_indices = @transform_6, window_bounds = array<i64: 2, 1, 384>}, {pipeline_mode = #tpu.pipeline_mode<synchronous>, transform_indices = @transform_7, window_bounds = array<i64: 2, 128, 128>}, {pipeline_mode = #tpu.pipeline_mode<synchronous>, transform_indices = @transform_8, window_bounds = array<i64: 2, 1, 128>}, {pipeline_mode = #tpu.pipeline_mode<synchronous>, transform_indices = @transform_9, window_bounds = array<i64: 2, 1, 128>}, {pipeline_mode = #tpu.pipeline_mode<synchronous>, transform_indices = @transform_10, window_bounds = array<i64: 2, 1, 128>}, {pipeline_mode = #tpu.pipeline_mode<synchronous>, transform_indices = @transform_11, window_bounds = array<i64: 2, 128, 256>}, {pipeline_mode = #tpu.pipeline_mode<synchronous>, transform_indices = @transform_12, window_bounds = array<i64: 2, 1, 256>}, {pipeline_mode = #tpu.pipeline_mode<synchronous>, transform_indices = @transform_13, window_bounds = array<i64: 2, 256, 128>}, {pipeline_mode = #tpu.pipeline_mode<synchronous>, transform_indices = @transform_14, window_bounds = array<i64: 2, 1, 128>}, {pipeline_mode = #tpu.pipeline_mode<synchronous>, transform_indices = @transform_15, window_bounds = array<i64: 2, 1, 128>}, {pipeline_mode = #tpu.pipeline_mode<synchronous>, transform_indices = @transform_16, window_bounds = array<i64: 2, 1, 128>}, {pipeline_mode = #tpu.pipeline_mode<synchronous>, transform_indices = @transform_17, window_bounds = array<i64: 32, 128>}]} {
    %c0 = arith.constant 0 : index
    %c0_0 = arith.constant 0 : index
    %0 = vector.load %arg3[%c0, %c0_0] : memref<32x32xf32, #tpu.memory_space<vmem>>, vector<32x32xf32>
    %c0_1 = arith.constant 0 : index
    %c0_2 = arith.constant 0 : index
    %1 = vector.load %arg1[%c0_1, %c0_2] : memref<32x128xbf16, #tpu.memory_space<vmem>>, vector<32x128xbf16>
    %c0_3 = arith.constant 0 : index
    %c0_4 = arith.constant 0 : index
    %2 = vector.load %arg4[%c0_3, %c0_4] : memref<128x128xbf16, #tpu.memory_space<vmem>>, vector<128x128xbf16>
    %cst = arith.constant dense<0.000000e+00> : vector<32x128xf32>
    %3 = tpu.matmul %1, %2, %cst {dimension_numbers = #tpu.dot_dimension_numbers<[1], [0], [0], [1], [0, 0, 1, 1], [], []>} : vector<32x128xbf16>, vector<128x128xbf16>, vector<32x128xf32> -> vector<32x128xf32>
    %c0_5 = arith.constant 0 : index
    %c0_6 = arith.constant 0 : index
    %4 = vector.load %arg5[%c0_5, %c0_6] : memref<1x128xf32, #tpu.memory_space<vmem>>, vector<1x128xf32>
    %5 = vector.broadcast %4 : vector<1x128xf32> to vector<32x128xf32>
    %6 = arith.addf %3, %5 : vector<32x128xf32>
    %cst_7 = arith.constant 0.000000e+00 : f32
    %7 = vector.broadcast %cst_7 : f32 to vector<32x128xf32>
    %8 = arith.maximumf %6, %7 : vector<32x128xf32>
    %c0_8 = arith.constant 0 : index
    %c0_9 = arith.constant 0 : index
    %9 = vector.load %arg2[%c0_8, %c0_9] : memref<32x128xf32, #tpu.memory_space<vmem>>, vector<32x128xf32>
    %10 = arith.addf %8, %9 : vector<32x128xf32>
    %11 = arith.truncf %10 : vector<32x128xf32> to vector<32x128xbf16>
    %c0_10 = arith.constant 0 : index
    %c0_11 = arith.constant 0 : index
    %c0_12 = arith.constant 0 : index
    %12 = vector.load %arg6[%c0_10, %c0_11, %c0_12] : memref<2x128x384xbf16, #tpu.memory_space<vmem>>, vector<1x128x384xbf16>
    %13 = vector.shape_cast %12 : vector<1x128x384xbf16> to vector<128x384xbf16>
    %cst_13 = arith.constant dense<0.000000e+00> : vector<32x384xf32>
    %14 = tpu.matmul %11, %13, %cst_13 {dimension_numbers = #tpu.dot_dimension_numbers<[1], [0], [0], [1], [0, 0, 1, 1], [], []>} : vector<32x128xbf16>, vector<128x384xbf16>, vector<32x384xf32> -> vector<32x384xf32>
    %c0_14 = arith.constant 0 : index
    %c0_15 = arith.constant 0 : index
    %c0_16 = arith.constant 0 : index
    %15 = vector.load %arg7[%c0_14, %c0_15, %c0_16] : memref<2x1x384xf32, #tpu.memory_space<vmem>>, vector<1x1x384xf32>
    %16 = vector.shape_cast %15 : vector<1x1x384xf32> to vector<1x384xf32>
    %17 = vector.broadcast %16 : vector<1x384xf32> to vector<32x384xf32>
    %18 = arith.addf %14, %17 : vector<32x384xf32>
    %19 = vector.extract_strided_slice %18 {offsets = [0, 0], sizes = [32, 128], strides = [1, 1]} : vector<32x384xf32> to vector<32x128xf32>
    %20 = vector.extract_strided_slice %18 {offsets = [0, 128], sizes = [32, 128], strides = [1, 1]} : vector<32x384xf32> to vector<32x128xf32>
    %21 = vector.extract_strided_slice %18 {offsets = [0, 256], sizes = [32, 128], strides = [1, 1]} : vector<32x384xf32> to vector<32x128xf32>
    %22 = vector.extract_strided_slice %19 {offsets = [0, 0], sizes = [32, 32], strides = [1, 1]} : vector<32x128xf32> to vector<32x32xf32>
    %23 = arith.truncf %22 : vector<32x32xf32> to vector<32x32xbf16>
    %24 = vector.extract_strided_slice %20 {offsets = [0, 0], sizes = [32, 32], strides = [1, 1]} : vector<32x128xf32> to vector<32x32xf32>
    %25 = arith.truncf %24 : vector<32x32xf32> to vector<32x32xbf16>
    %26 = vector.extract_strided_slice %21 {offsets = [0, 0], sizes = [32, 32], strides = [1, 1]} : vector<32x128xf32> to vector<32x32xf32>
    %27 = arith.truncf %26 : vector<32x32xf32> to vector<32x32xbf16>
    %cst_17 = arith.constant dense<0.000000e+00> : vector<32x32xf32>
    %28 = tpu.matmul %23, %25, %cst_17 {dimension_numbers = #tpu.dot_dimension_numbers<[1], [1], [0], [0], [0, 0, 1, 0], [], []>} : vector<32x32xbf16>, vector<32x32xbf16>, vector<32x32xf32> -> vector<32x32xf32>
    %29 = arith.addf %28, %0 : vector<32x32xf32>
    %cst_18 = arith.constant dense<0xFF800000> : vector<32xf32>
    %30 = vector.multi_reduction <maximumf>, %29, %cst_18 [1] : vector<32x32xf32> to vector<32xf32>
    %31 = vector.shape_cast %30 : vector<32xf32> to vector<32x1xf32>
    %32 = vector.broadcast %31 : vector<32x1xf32> to vector<32x32xf32>
    %33 = arith.subf %29, %32 : vector<32x32xf32>
    %34 = math.exp %33 : vector<32x32xf32>
    %cst_19 = arith.constant dense<0.000000e+00> : vector<32xf32>
    %35 = vector.multi_reduction <add>, %34, %cst_19 [1] : vector<32x32xf32> to vector<32xf32>
    %36 = vector.shape_cast %35 : vector<32xf32> to vector<32x1xf32>
    %37 = arith.truncf %34 : vector<32x32xf32> to vector<32x32xbf16>
    %cst_20 = arith.constant dense<0.000000e+00> : vector<32x32xf32>
    %38 = tpu.matmul %37, %27, %cst_20 {dimension_numbers = #tpu.dot_dimension_numbers<[1], [0], [0], [1], [0, 0, 1, 1], [], []>} : vector<32x32xbf16>, vector<32x32xbf16>, vector<32x32xf32> -> vector<32x32xf32>
    %39 = tpu.reciprocal %36 {approx = true} : vector<32x1xf32> -> vector<32x1xf32>
    %40 = vector.broadcast %39 : vector<32x1xf32> to vector<32x32xf32>
    %41 = arith.mulf %38, %40 : vector<32x32xf32>
    %42 = vector.extract_strided_slice %19 {offsets = [0, 32], sizes = [32, 32], strides = [1, 1]} : vector<32x128xf32> to vector<32x32xf32>
    %43 = arith.truncf %42 : vector<32x32xf32> to vector<32x32xbf16>
    %44 = vector.extract_strided_slice %20 {offsets = [0, 32], sizes = [32, 32], strides = [1, 1]} : vector<32x128xf32> to vector<32x32xf32>
    %45 = arith.truncf %44 : vector<32x32xf32> to vector<32x32xbf16>
    %46 = vector.extract_strided_slice %21 {offsets = [0, 32], sizes = [32, 32], strides = [1, 1]} : vector<32x128xf32> to vector<32x32xf32>
    %47 = arith.truncf %46 : vector<32x32xf32> to vector<32x32xbf16>
    %cst_21 = arith.constant dense<0.000000e+00> : vector<32x32xf32>
    %48 = tpu.matmul %43, %45, %cst_21 {dimension_numbers = #tpu.dot_dimension_numbers<[1], [1], [0], [0], [0, 0, 1, 0], [], []>} : vector<32x32xbf16>, vector<32x32xbf16>, vector<32x32xf32> -> vector<32x32xf32>
    %49 = arith.addf %48, %0 : vector<32x32xf32>
    %cst_22 = arith.constant dense<0xFF800000> : vector<32xf32>
    %50 = vector.multi_reduction <maximumf>, %49, %cst_22 [1] : vector<32x32xf32> to vector<32xf32>
    %51 = vector.shape_cast %50 : vector<32xf32> to vector<32x1xf32>
    %52 = vector.broadcast %51 : vector<32x1xf32> to vector<32x32xf32>
    %53 = arith.subf %49, %52 : vector<32x32xf32>
    %54 = math.exp %53 : vector<32x32xf32>
    %cst_23 = arith.constant dense<0.000000e+00> : vector<32xf32>
    %55 = vector.multi_reduction <add>, %54, %cst_23 [1] : vector<32x32xf32> to vector<32xf32>
    %56 = vector.shape_cast %55 : vector<32xf32> to vector<32x1xf32>
    %57 = arith.truncf %54 : vector<32x32xf32> to vector<32x32xbf16>
    %cst_24 = arith.constant dense<0.000000e+00> : vector<32x32xf32>
    %58 = tpu.matmul %57, %47, %cst_24 {dimension_numbers = #tpu.dot_dimension_numbers<[1], [0], [0], [1], [0, 0, 1, 1], [], []>} : vector<32x32xbf16>, vector<32x32xbf16>, vector<32x32xf32> -> vector<32x32xf32>
    %59 = tpu.reciprocal %56 {approx = true} : vector<32x1xf32> -> vector<32x1xf32>
    %60 = vector.broadcast %59 : vector<32x1xf32> to vector<32x32xf32>
    %61 = arith.mulf %58, %60 : vector<32x32xf32>
    %62 = vector.extract_strided_slice %19 {offsets = [0, 64], sizes = [32, 32], strides = [1, 1]} : vector<32x128xf32> to vector<32x32xf32>
    %63 = arith.truncf %62 : vector<32x32xf32> to vector<32x32xbf16>
    %64 = vector.extract_strided_slice %20 {offsets = [0, 64], sizes = [32, 32], strides = [1, 1]} : vector<32x128xf32> to vector<32x32xf32>
    %65 = arith.truncf %64 : vector<32x32xf32> to vector<32x32xbf16>
    %66 = vector.extract_strided_slice %21 {offsets = [0, 64], sizes = [32, 32], strides = [1, 1]} : vector<32x128xf32> to vector<32x32xf32>
    %67 = arith.truncf %66 : vector<32x32xf32> to vector<32x32xbf16>
    %cst_25 = arith.constant dense<0.000000e+00> : vector<32x32xf32>
    %68 = tpu.matmul %63, %65, %cst_25 {dimension_numbers = #tpu.dot_dimension_numbers<[1], [1], [0], [0], [0, 0, 1, 0], [], []>} : vector<32x32xbf16>, vector<32x32xbf16>, vector<32x32xf32> -> vector<32x32xf32>
    %69 = arith.addf %68, %0 : vector<32x32xf32>
    %cst_26 = arith.constant dense<0xFF800000> : vector<32xf32>
    %70 = vector.multi_reduction <maximumf>, %69, %cst_26 [1] : vector<32x32xf32> to vector<32xf32>
    %71 = vector.shape_cast %70 : vector<32xf32> to vector<32x1xf32>
    %72 = vector.broadcast %71 : vector<32x1xf32> to vector<32x32xf32>
    %73 = arith.subf %69, %72 : vector<32x32xf32>
    %74 = math.exp %73 : vector<32x32xf32>
    %cst_27 = arith.constant dense<0.000000e+00> : vector<32xf32>
    %75 = vector.multi_reduction <add>, %74, %cst_27 [1] : vector<32x32xf32> to vector<32xf32>
    %76 = vector.shape_cast %75 : vector<32xf32> to vector<32x1xf32>
    %77 = arith.truncf %74 : vector<32x32xf32> to vector<32x32xbf16>
    %cst_28 = arith.constant dense<0.000000e+00> : vector<32x32xf32>
    %78 = tpu.matmul %77, %67, %cst_28 {dimension_numbers = #tpu.dot_dimension_numbers<[1], [0], [0], [1], [0, 0, 1, 1], [], []>} : vector<32x32xbf16>, vector<32x32xbf16>, vector<32x32xf32> -> vector<32x32xf32>
    %79 = tpu.reciprocal %76 {approx = true} : vector<32x1xf32> -> vector<32x1xf32>
    %80 = vector.broadcast %79 : vector<32x1xf32> to vector<32x32xf32>
    %81 = arith.mulf %78, %80 : vector<32x32xf32>
    %82 = vector.extract_strided_slice %19 {offsets = [0, 96], sizes = [32, 32], strides = [1, 1]} : vector<32x128xf32> to vector<32x32xf32>
    %83 = arith.truncf %82 : vector<32x32xf32> to vector<32x32xbf16>
    %84 = vector.extract_strided_slice %20 {offsets = [0, 96], sizes = [32, 32], strides = [1, 1]} : vector<32x128xf32> to vector<32x32xf32>
    %85 = arith.truncf %84 : vector<32x32xf32> to vector<32x32xbf16>
    %86 = vector.extract_strided_slice %21 {offsets = [0, 96], sizes = [32, 32], strides = [1, 1]} : vector<32x128xf32> to vector<32x32xf32>
    %87 = arith.truncf %86 : vector<32x32xf32> to vector<32x32xbf16>
    %cst_29 = arith.constant dense<0.000000e+00> : vector<32x32xf32>
    %88 = tpu.matmul %83, %85, %cst_29 {dimension_numbers = #tpu.dot_dimension_numbers<[1], [1], [0], [0], [0, 0, 1, 0], [], []>} : vector<32x32xbf16>, vector<32x32xbf16>, vector<32x32xf32> -> vector<32x32xf32>
    %89 = arith.addf %88, %0 : vector<32x32xf32>
    %cst_30 = arith.constant dense<0xFF800000> : vector<32xf32>
    %90 = vector.multi_reduction <maximumf>, %89, %cst_30 [1] : vector<32x32xf32> to vector<32xf32>
    %91 = vector.shape_cast %90 : vector<32xf32> to vector<32x1xf32>
    %92 = vector.broadcast %91 : vector<32x1xf32> to vector<32x32xf32>
    %93 = arith.subf %89, %92 : vector<32x32xf32>
    %94 = math.exp %93 : vector<32x32xf32>
    %cst_31 = arith.constant dense<0.000000e+00> : vector<32xf32>
    %95 = vector.multi_reduction <add>, %94, %cst_31 [1] : vector<32x32xf32> to vector<32xf32>
    %96 = vector.shape_cast %95 : vector<32xf32> to vector<32x1xf32>
    %97 = arith.truncf %94 : vector<32x32xf32> to vector<32x32xbf16>
    %cst_32 = arith.constant dense<0.000000e+00> : vector<32x32xf32>
    %98 = tpu.matmul %97, %87, %cst_32 {dimension_numbers = #tpu.dot_dimension_numbers<[1], [0], [0], [1], [0, 0, 1, 1], [], []>} : vector<32x32xbf16>, vector<32x32xbf16>, vector<32x32xf32> -> vector<32x32xf32>
    %99 = tpu.reciprocal %96 {approx = true} : vector<32x1xf32> -> vector<32x1xf32>
    %100 = vector.broadcast %99 : vector<32x1xf32> to vector<32x32xf32>
    %101 = arith.mulf %98, %100 : vector<32x32xf32>
    %102 = tpu.concatenate %41, %61, %81, %101 in 1 : vector<32x32xf32>, vector<32x32xf32>, vector<32x32xf32>, vector<32x32xf32> -> vector<32x128xf32>
    %103 = arith.truncf %102 : vector<32x128xf32> to vector<32x128xbf16>
    %c0_33 = arith.constant 0 : index
    %c0_34 = arith.constant 0 : index
    %c0_35 = arith.constant 0 : index
    %104 = vector.load %arg8[%c0_33, %c0_34, %c0_35] : memref<2x128x128xbf16, #tpu.memory_space<vmem>>, vector<1x128x128xbf16>
    %105 = vector.shape_cast %104 : vector<1x128x128xbf16> to vector<128x128xbf16>
    %cst_36 = arith.constant dense<0.000000e+00> : vector<32x128xf32>
    %106 = tpu.matmul %103, %105, %cst_36 {dimension_numbers = #tpu.dot_dimension_numbers<[1], [0], [0], [1], [0, 0, 1, 1], [], []>} : vector<32x128xbf16>, vector<128x128xbf16>, vector<32x128xf32> -> vector<32x128xf32>
    %c0_37 = arith.constant 0 : index
    %c0_38 = arith.constant 0 : index
    %c0_39 = arith.constant 0 : index
    %107 = vector.load %arg9[%c0_37, %c0_38, %c0_39] : memref<2x1x128xf32, #tpu.memory_space<vmem>>, vector<1x1x128xf32>
    %108 = vector.shape_cast %107 : vector<1x1x128xf32> to vector<1x128xf32>
    %109 = vector.broadcast %108 : vector<1x128xf32> to vector<32x128xf32>
    %110 = arith.addf %106, %109 : vector<32x128xf32>
    %111 = arith.addf %10, %110 : vector<32x128xf32>
    %c0_40 = arith.constant 0 : index
    %c0_41 = arith.constant 0 : index
    %c0_42 = arith.constant 0 : index
    %112 = vector.load %arg10[%c0_40, %c0_41, %c0_42] : memref<2x1x128xf32, #tpu.memory_space<vmem>>, vector<1x1x128xf32>
    %113 = vector.shape_cast %112 : vector<1x1x128xf32> to vector<1x128xf32>
    %c0_43 = arith.constant 0 : index
    %c0_44 = arith.constant 0 : index
    %c0_45 = arith.constant 0 : index
    %114 = vector.load %arg11[%c0_43, %c0_44, %c0_45] : memref<2x1x128xf32, #tpu.memory_space<vmem>>, vector<1x1x128xf32>
    %115 = vector.shape_cast %114 : vector<1x1x128xf32> to vector<1x128xf32>
    %cst_46 = arith.constant dense<0.000000e+00> : vector<32xf32>
    %116 = vector.multi_reduction <add>, %111, %cst_46 [1] : vector<32x128xf32> to vector<32xf32>
    %117 = vector.shape_cast %116 : vector<32xf32> to vector<32x1xf32>
    %cst_47 = arith.constant 1.280000e+02 : f32
    %118 = vector.broadcast %cst_47 : f32 to vector<32x1xf32>
    %119 = arith.divf %117, %118 : vector<32x1xf32>
    %120 = arith.mulf %111, %111 : vector<32x128xf32>
    %cst_48 = arith.constant dense<0.000000e+00> : vector<32xf32>
    %121 = vector.multi_reduction <add>, %120, %cst_48 [1] : vector<32x128xf32> to vector<32xf32>
    %122 = vector.shape_cast %121 : vector<32xf32> to vector<32x1xf32>
    %cst_49 = arith.constant 1.280000e+02 : f32
    %123 = vector.broadcast %cst_49 : f32 to vector<32x1xf32>
    %124 = arith.divf %122, %123 : vector<32x1xf32>
    %125 = arith.mulf %119, %119 : vector<32x1xf32>
    %126 = arith.subf %124, %125 : vector<32x1xf32>
    %127 = vector.broadcast %119 : vector<32x1xf32> to vector<32x128xf32>
    %128 = arith.subf %111, %127 : vector<32x128xf32>
    %cst_50 = arith.constant 9.99999974E-6 : f32
    %129 = vector.broadcast %cst_50 : f32 to vector<32x1xf32>
    %130 = arith.addf %126, %129 : vector<32x1xf32>
    %131 = math.rsqrt %130 : vector<32x1xf32>
    %132 = vector.broadcast %131 : vector<32x1xf32> to vector<32x128xf32>
    %133 = arith.mulf %128, %132 : vector<32x128xf32>
    %134 = vector.broadcast %113 : vector<1x128xf32> to vector<32x128xf32>
    %135 = arith.mulf %133, %134 : vector<32x128xf32>
    %136 = vector.broadcast %115 : vector<1x128xf32> to vector<32x128xf32>
    %137 = arith.addf %135, %136 : vector<32x128xf32>
    %138 = arith.truncf %137 : vector<32x128xf32> to vector<32x128xbf16>
    %c0_51 = arith.constant 0 : index
    %c0_52 = arith.constant 0 : index
    %c0_53 = arith.constant 0 : index
    %139 = vector.load %arg12[%c0_51, %c0_52, %c0_53] : memref<2x128x256xbf16, #tpu.memory_space<vmem>>, vector<1x128x256xbf16>
    %140 = vector.shape_cast %139 : vector<1x128x256xbf16> to vector<128x256xbf16>
    %cst_54 = arith.constant dense<0.000000e+00> : vector<32x256xf32>
    %141 = tpu.matmul %138, %140, %cst_54 {dimension_numbers = #tpu.dot_dimension_numbers<[1], [0], [0], [1], [0, 0, 1, 1], [], []>} : vector<32x128xbf16>, vector<128x256xbf16>, vector<32x256xf32> -> vector<32x256xf32>
    %c0_55 = arith.constant 0 : index
    %c0_56 = arith.constant 0 : index
    %c0_57 = arith.constant 0 : index
    %142 = vector.load %arg13[%c0_55, %c0_56, %c0_57] : memref<2x1x256xf32, #tpu.memory_space<vmem>>, vector<1x1x256xf32>
    %143 = vector.shape_cast %142 : vector<1x1x256xf32> to vector<1x256xf32>
    %144 = vector.broadcast %143 : vector<1x256xf32> to vector<32x256xf32>
    %145 = arith.addf %141, %144 : vector<32x256xf32>
    %cst_58 = arith.constant 0.000000e+00 : f32
    %146 = vector.broadcast %cst_58 : f32 to vector<32x256xf32>
    %147 = arith.maximumf %145, %146 : vector<32x256xf32>
    %148 = arith.truncf %147 : vector<32x256xf32> to vector<32x256xbf16>
    %c0_59 = arith.constant 0 : index
    %c0_60 = arith.constant 0 : index
    %c0_61 = arith.constant 0 : index
    %149 = vector.load %arg14[%c0_59, %c0_60, %c0_61] : memref<2x256x128xbf16, #tpu.memory_space<vmem>>, vector<1x256x128xbf16>
    %150 = vector.shape_cast %149 : vector<1x256x128xbf16> to vector<256x128xbf16>
    %cst_62 = arith.constant dense<0.000000e+00> : vector<32x128xf32>
    %151 = tpu.matmul %148, %150, %cst_62 {dimension_numbers = #tpu.dot_dimension_numbers<[1], [0], [0], [1], [0, 0, 1, 1], [], []>} : vector<32x256xbf16>, vector<256x128xbf16>, vector<32x128xf32> -> vector<32x128xf32>
    %c0_63 = arith.constant 0 : index
    %c0_64 = arith.constant 0 : index
    %c0_65 = arith.constant 0 : index
    %152 = vector.load %arg15[%c0_63, %c0_64, %c0_65] : memref<2x1x128xf32, #tpu.memory_space<vmem>>, vector<1x1x128xf32>
    %153 = vector.shape_cast %152 : vector<1x1x128xf32> to vector<1x128xf32>
    %154 = vector.broadcast %153 : vector<1x128xf32> to vector<32x128xf32>
    %155 = arith.addf %151, %154 : vector<32x128xf32>
    %156 = arith.addf %137, %155 : vector<32x128xf32>
    %c0_66 = arith.constant 0 : index
    %c0_67 = arith.constant 0 : index
    %c0_68 = arith.constant 0 : index
    %157 = vector.load %arg16[%c0_66, %c0_67, %c0_68] : memref<2x1x128xf32, #tpu.memory_space<vmem>>, vector<1x1x128xf32>
    %158 = vector.shape_cast %157 : vector<1x1x128xf32> to vector<1x128xf32>
    %c0_69 = arith.constant 0 : index
    %c0_70 = arith.constant 0 : index
    %c0_71 = arith.constant 0 : index
    %159 = vector.load %arg17[%c0_69, %c0_70, %c0_71] : memref<2x1x128xf32, #tpu.memory_space<vmem>>, vector<1x1x128xf32>
    %160 = vector.shape_cast %159 : vector<1x1x128xf32> to vector<1x128xf32>
    %cst_72 = arith.constant dense<0.000000e+00> : vector<32xf32>
    %161 = vector.multi_reduction <add>, %156, %cst_72 [1] : vector<32x128xf32> to vector<32xf32>
    %162 = vector.shape_cast %161 : vector<32xf32> to vector<32x1xf32>
    %cst_73 = arith.constant 1.280000e+02 : f32
    %163 = vector.broadcast %cst_73 : f32 to vector<32x1xf32>
    %164 = arith.divf %162, %163 : vector<32x1xf32>
    %165 = arith.mulf %156, %156 : vector<32x128xf32>
    %cst_74 = arith.constant dense<0.000000e+00> : vector<32xf32>
    %166 = vector.multi_reduction <add>, %165, %cst_74 [1] : vector<32x128xf32> to vector<32xf32>
    %167 = vector.shape_cast %166 : vector<32xf32> to vector<32x1xf32>
    %cst_75 = arith.constant 1.280000e+02 : f32
    %168 = vector.broadcast %cst_75 : f32 to vector<32x1xf32>
    %169 = arith.divf %167, %168 : vector<32x1xf32>
    %170 = arith.mulf %164, %164 : vector<32x1xf32>
    %171 = arith.subf %169, %170 : vector<32x1xf32>
    %172 = vector.broadcast %164 : vector<32x1xf32> to vector<32x128xf32>
    %173 = arith.subf %156, %172 : vector<32x128xf32>
    %cst_76 = arith.constant 9.99999974E-6 : f32
    %174 = vector.broadcast %cst_76 : f32 to vector<32x1xf32>
    %175 = arith.addf %171, %174 : vector<32x1xf32>
    %176 = math.rsqrt %175 : vector<32x1xf32>
    %177 = vector.broadcast %176 : vector<32x1xf32> to vector<32x128xf32>
    %178 = arith.mulf %173, %177 : vector<32x128xf32>
    %179 = vector.broadcast %158 : vector<1x128xf32> to vector<32x128xf32>
    %180 = arith.mulf %178, %179 : vector<32x128xf32>
    %181 = vector.broadcast %160 : vector<1x128xf32> to vector<32x128xf32>
    %182 = arith.addf %180, %181 : vector<32x128xf32>
    %183 = arith.truncf %182 : vector<32x128xf32> to vector<32x128xbf16>
    %c1 = arith.constant 1 : index
    %c0_77 = arith.constant 0 : index
    %c0_78 = arith.constant 0 : index
    %184 = vector.load %arg6[%c1, %c0_77, %c0_78] : memref<2x128x384xbf16, #tpu.memory_space<vmem>>, vector<1x128x384xbf16>
    %185 = vector.shape_cast %184 : vector<1x128x384xbf16> to vector<128x384xbf16>
    %cst_79 = arith.constant dense<0.000000e+00> : vector<32x384xf32>
    %186 = tpu.matmul %183, %185, %cst_79 {dimension_numbers = #tpu.dot_dimension_numbers<[1], [0], [0], [1], [0, 0, 1, 1], [], []>} : vector<32x128xbf16>, vector<128x384xbf16>, vector<32x384xf32> -> vector<32x384xf32>
    %c1_80 = arith.constant 1 : index
    %c0_81 = arith.constant 0 : index
    %c0_82 = arith.constant 0 : index
    %187 = vector.load %arg7[%c1_80, %c0_81, %c0_82] : memref<2x1x384xf32, #tpu.memory_space<vmem>>, vector<1x1x384xf32>
    %188 = vector.shape_cast %187 : vector<1x1x384xf32> to vector<1x384xf32>
    %189 = vector.broadcast %188 : vector<1x384xf32> to vector<32x384xf32>
    %190 = arith.addf %186, %189 : vector<32x384xf32>
    %191 = vector.extract_strided_slice %190 {offsets = [0, 0], sizes = [32, 128], strides = [1, 1]} : vector<32x384xf32> to vector<32x128xf32>
    %192 = vector.extract_strided_slice %190 {offsets = [0, 128], sizes = [32, 128], strides = [1, 1]} : vector<32x384xf32> to vector<32x128xf32>
    %193 = vector.extract_strided_slice %190 {offsets = [0, 256], sizes = [32, 128], strides = [1, 1]} : vector<32x384xf32> to vector<32x128xf32>
    %194 = vector.extract_strided_slice %191 {offsets = [0, 0], sizes = [32, 32], strides = [1, 1]} : vector<32x128xf32> to vector<32x32xf32>
    %195 = arith.truncf %194 : vector<32x32xf32> to vector<32x32xbf16>
    %196 = vector.extract_strided_slice %192 {offsets = [0, 0], sizes = [32, 32], strides = [1, 1]} : vector<32x128xf32> to vector<32x32xf32>
    %197 = arith.truncf %196 : vector<32x32xf32> to vector<32x32xbf16>
    %198 = vector.extract_strided_slice %193 {offsets = [0, 0], sizes = [32, 32], strides = [1, 1]} : vector<32x128xf32> to vector<32x32xf32>
    %199 = arith.truncf %198 : vector<32x32xf32> to vector<32x32xbf16>
    %cst_83 = arith.constant dense<0.000000e+00> : vector<32x32xf32>
    %200 = tpu.matmul %195, %197, %cst_83 {dimension_numbers = #tpu.dot_dimension_numbers<[1], [1], [0], [0], [0, 0, 1, 0], [], []>} : vector<32x32xbf16>, vector<32x32xbf16>, vector<32x32xf32> -> vector<32x32xf32>
    %201 = arith.addf %200, %0 : vector<32x32xf32>
    %cst_84 = arith.constant dense<0xFF800000> : vector<32xf32>
    %202 = vector.multi_reduction <maximumf>, %201, %cst_84 [1] : vector<32x32xf32> to vector<32xf32>
    %203 = vector.shape_cast %202 : vector<32xf32> to vector<32x1xf32>
    %204 = vector.broadcast %203 : vector<32x1xf32> to vector<32x32xf32>
    %205 = arith.subf %201, %204 : vector<32x32xf32>
    %206 = math.exp %205 : vector<32x32xf32>
    %cst_85 = arith.constant dense<0.000000e+00> : vector<32xf32>
    %207 = vector.multi_reduction <add>, %206, %cst_85 [1] : vector<32x32xf32> to vector<32xf32>
    %208 = vector.shape_cast %207 : vector<32xf32> to vector<32x1xf32>
    %209 = arith.truncf %206 : vector<32x32xf32> to vector<32x32xbf16>
    %cst_86 = arith.constant dense<0.000000e+00> : vector<32x32xf32>
    %210 = tpu.matmul %209, %199, %cst_86 {dimension_numbers = #tpu.dot_dimension_numbers<[1], [0], [0], [1], [0, 0, 1, 1], [], []>} : vector<32x32xbf16>, vector<32x32xbf16>, vector<32x32xf32> -> vector<32x32xf32>
    %211 = tpu.reciprocal %208 {approx = true} : vector<32x1xf32> -> vector<32x1xf32>
    %212 = vector.broadcast %211 : vector<32x1xf32> to vector<32x32xf32>
    %213 = arith.mulf %210, %212 : vector<32x32xf32>
    %214 = vector.extract_strided_slice %191 {offsets = [0, 32], sizes = [32, 32], strides = [1, 1]} : vector<32x128xf32> to vector<32x32xf32>
    %215 = arith.truncf %214 : vector<32x32xf32> to vector<32x32xbf16>
    %216 = vector.extract_strided_slice %192 {offsets = [0, 32], sizes = [32, 32], strides = [1, 1]} : vector<32x128xf32> to vector<32x32xf32>
    %217 = arith.truncf %216 : vector<32x32xf32> to vector<32x32xbf16>
    %218 = vector.extract_strided_slice %193 {offsets = [0, 32], sizes = [32, 32], strides = [1, 1]} : vector<32x128xf32> to vector<32x32xf32>
    %219 = arith.truncf %218 : vector<32x32xf32> to vector<32x32xbf16>
    %cst_87 = arith.constant dense<0.000000e+00> : vector<32x32xf32>
    %220 = tpu.matmul %215, %217, %cst_87 {dimension_numbers = #tpu.dot_dimension_numbers<[1], [1], [0], [0], [0, 0, 1, 0], [], []>} : vector<32x32xbf16>, vector<32x32xbf16>, vector<32x32xf32> -> vector<32x32xf32>
    %221 = arith.addf %220, %0 : vector<32x32xf32>
    %cst_88 = arith.constant dense<0xFF800000> : vector<32xf32>
    %222 = vector.multi_reduction <maximumf>, %221, %cst_88 [1] : vector<32x32xf32> to vector<32xf32>
    %223 = vector.shape_cast %222 : vector<32xf32> to vector<32x1xf32>
    %224 = vector.broadcast %223 : vector<32x1xf32> to vector<32x32xf32>
    %225 = arith.subf %221, %224 : vector<32x32xf32>
    %226 = math.exp %225 : vector<32x32xf32>
    %cst_89 = arith.constant dense<0.000000e+00> : vector<32xf32>
    %227 = vector.multi_reduction <add>, %226, %cst_89 [1] : vector<32x32xf32> to vector<32xf32>
    %228 = vector.shape_cast %227 : vector<32xf32> to vector<32x1xf32>
    %229 = arith.truncf %226 : vector<32x32xf32> to vector<32x32xbf16>
    %cst_90 = arith.constant dense<0.000000e+00> : vector<32x32xf32>
    %230 = tpu.matmul %229, %219, %cst_90 {dimension_numbers = #tpu.dot_dimension_numbers<[1], [0], [0], [1], [0, 0, 1, 1], [], []>} : vector<32x32xbf16>, vector<32x32xbf16>, vector<32x32xf32> -> vector<32x32xf32>
    %231 = tpu.reciprocal %228 {approx = true} : vector<32x1xf32> -> vector<32x1xf32>
    %232 = vector.broadcast %231 : vector<32x1xf32> to vector<32x32xf32>
    %233 = arith.mulf %230, %232 : vector<32x32xf32>
    %234 = vector.extract_strided_slice %191 {offsets = [0, 64], sizes = [32, 32], strides = [1, 1]} : vector<32x128xf32> to vector<32x32xf32>
    %235 = arith.truncf %234 : vector<32x32xf32> to vector<32x32xbf16>
    %236 = vector.extract_strided_slice %192 {offsets = [0, 64], sizes = [32, 32], strides = [1, 1]} : vector<32x128xf32> to vector<32x32xf32>
    %237 = arith.truncf %236 : vector<32x32xf32> to vector<32x32xbf16>
    %238 = vector.extract_strided_slice %193 {offsets = [0, 64], sizes = [32, 32], strides = [1, 1]} : vector<32x128xf32> to vector<32x32xf32>
    %239 = arith.truncf %238 : vector<32x32xf32> to vector<32x32xbf16>
    %cst_91 = arith.constant dense<0.000000e+00> : vector<32x32xf32>
    %240 = tpu.matmul %235, %237, %cst_91 {dimension_numbers = #tpu.dot_dimension_numbers<[1], [1], [0], [0], [0, 0, 1, 0], [], []>} : vector<32x32xbf16>, vector<32x32xbf16>, vector<32x32xf32> -> vector<32x32xf32>
    %241 = arith.addf %240, %0 : vector<32x32xf32>
    %cst_92 = arith.constant dense<0xFF800000> : vector<32xf32>
    %242 = vector.multi_reduction <maximumf>, %241, %cst_92 [1] : vector<32x32xf32> to vector<32xf32>
    %243 = vector.shape_cast %242 : vector<32xf32> to vector<32x1xf32>
    %244 = vector.broadcast %243 : vector<32x1xf32> to vector<32x32xf32>
    %245 = arith.subf %241, %244 : vector<32x32xf32>
    %246 = math.exp %245 : vector<32x32xf32>
    %cst_93 = arith.constant dense<0.000000e+00> : vector<32xf32>
    %247 = vector.multi_reduction <add>, %246, %cst_93 [1] : vector<32x32xf32> to vector<32xf32>
    %248 = vector.shape_cast %247 : vector<32xf32> to vector<32x1xf32>
    %249 = arith.truncf %246 : vector<32x32xf32> to vector<32x32xbf16>
    %cst_94 = arith.constant dense<0.000000e+00> : vector<32x32xf32>
    %250 = tpu.matmul %249, %239, %cst_94 {dimension_numbers = #tpu.dot_dimension_numbers<[1], [0], [0], [1], [0, 0, 1, 1], [], []>} : vector<32x32xbf16>, vector<32x32xbf16>, vector<32x32xf32> -> vector<32x32xf32>
    %251 = tpu.reciprocal %248 {approx = true} : vector<32x1xf32> -> vector<32x1xf32>
    %252 = vector.broadcast %251 : vector<32x1xf32> to vector<32x32xf32>
    %253 = arith.mulf %250, %252 : vector<32x32xf32>
    %254 = vector.extract_strided_slice %191 {offsets = [0, 96], sizes = [32, 32], strides = [1, 1]} : vector<32x128xf32> to vector<32x32xf32>
    %255 = arith.truncf %254 : vector<32x32xf32> to vector<32x32xbf16>
    %256 = vector.extract_strided_slice %192 {offsets = [0, 96], sizes = [32, 32], strides = [1, 1]} : vector<32x128xf32> to vector<32x32xf32>
    %257 = arith.truncf %256 : vector<32x32xf32> to vector<32x32xbf16>
    %258 = vector.extract_strided_slice %193 {offsets = [0, 96], sizes = [32, 32], strides = [1, 1]} : vector<32x128xf32> to vector<32x32xf32>
    %259 = arith.truncf %258 : vector<32x32xf32> to vector<32x32xbf16>
    %cst_95 = arith.constant dense<0.000000e+00> : vector<32x32xf32>
    %260 = tpu.matmul %255, %257, %cst_95 {dimension_numbers = #tpu.dot_dimension_numbers<[1], [1], [0], [0], [0, 0, 1, 0], [], []>} : vector<32x32xbf16>, vector<32x32xbf16>, vector<32x32xf32> -> vector<32x32xf32>
    %261 = arith.addf %260, %0 : vector<32x32xf32>
    %cst_96 = arith.constant dense<0xFF800000> : vector<32xf32>
    %262 = vector.multi_reduction <maximumf>, %261, %cst_96 [1] : vector<32x32xf32> to vector<32xf32>
    %263 = vector.shape_cast %262 : vector<32xf32> to vector<32x1xf32>
    %264 = vector.broadcast %263 : vector<32x1xf32> to vector<32x32xf32>
    %265 = arith.subf %261, %264 : vector<32x32xf32>
    %266 = math.exp %265 : vector<32x32xf32>
    %cst_97 = arith.constant dense<0.000000e+00> : vector<32xf32>
    %267 = vector.multi_reduction <add>, %266, %cst_97 [1] : vector<32x32xf32> to vector<32xf32>
    %268 = vector.shape_cast %267 : vector<32xf32> to vector<32x1xf32>
    %269 = arith.truncf %266 : vector<32x32xf32> to vector<32x32xbf16>
    %cst_98 = arith.constant dense<0.000000e+00> : vector<32x32xf32>
    %270 = tpu.matmul %269, %259, %cst_98 {dimension_numbers = #tpu.dot_dimension_numbers<[1], [0], [0], [1], [0, 0, 1, 1], [], []>} : vector<32x32xbf16>, vector<32x32xbf16>, vector<32x32xf32> -> vector<32x32xf32>
    %271 = tpu.reciprocal %268 {approx = true} : vector<32x1xf32> -> vector<32x1xf32>
    %272 = vector.broadcast %271 : vector<32x1xf32> to vector<32x32xf32>
    %273 = arith.mulf %270, %272 : vector<32x32xf32>
    %274 = tpu.concatenate %213, %233, %253, %273 in 1 : vector<32x32xf32>, vector<32x32xf32>, vector<32x32xf32>, vector<32x32xf32> -> vector<32x128xf32>
    %275 = arith.truncf %274 : vector<32x128xf32> to vector<32x128xbf16>
    %c1_99 = arith.constant 1 : index
    %c0_100 = arith.constant 0 : index
    %c0_101 = arith.constant 0 : index
    %276 = vector.load %arg8[%c1_99, %c0_100, %c0_101] : memref<2x128x128xbf16, #tpu.memory_space<vmem>>, vector<1x128x128xbf16>
    %277 = vector.shape_cast %276 : vector<1x128x128xbf16> to vector<128x128xbf16>
    %cst_102 = arith.constant dense<0.000000e+00> : vector<32x128xf32>
    %278 = tpu.matmul %275, %277, %cst_102 {dimension_numbers = #tpu.dot_dimension_numbers<[1], [0], [0], [1], [0, 0, 1, 1], [], []>} : vector<32x128xbf16>, vector<128x128xbf16>, vector<32x128xf32> -> vector<32x128xf32>
    %c1_103 = arith.constant 1 : index
    %c0_104 = arith.constant 0 : index
    %c0_105 = arith.constant 0 : index
    %279 = vector.load %arg9[%c1_103, %c0_104, %c0_105] : memref<2x1x128xf32, #tpu.memory_space<vmem>>, vector<1x1x128xf32>
    %280 = vector.shape_cast %279 : vector<1x1x128xf32> to vector<1x128xf32>
    %281 = vector.broadcast %280 : vector<1x128xf32> to vector<32x128xf32>
    %282 = arith.addf %278, %281 : vector<32x128xf32>
    %283 = arith.addf %182, %282 : vector<32x128xf32>
    %c1_106 = arith.constant 1 : index
    %c0_107 = arith.constant 0 : index
    %c0_108 = arith.constant 0 : index
    %284 = vector.load %arg10[%c1_106, %c0_107, %c0_108] : memref<2x1x128xf32, #tpu.memory_space<vmem>>, vector<1x1x128xf32>
    %285 = vector.shape_cast %284 : vector<1x1x128xf32> to vector<1x128xf32>
    %c1_109 = arith.constant 1 : index
    %c0_110 = arith.constant 0 : index
    %c0_111 = arith.constant 0 : index
    %286 = vector.load %arg11[%c1_109, %c0_110, %c0_111] : memref<2x1x128xf32, #tpu.memory_space<vmem>>, vector<1x1x128xf32>
    %287 = vector.shape_cast %286 : vector<1x1x128xf32> to vector<1x128xf32>
    %cst_112 = arith.constant dense<0.000000e+00> : vector<32xf32>
    %288 = vector.multi_reduction <add>, %283, %cst_112 [1] : vector<32x128xf32> to vector<32xf32>
    %289 = vector.shape_cast %288 : vector<32xf32> to vector<32x1xf32>
    %cst_113 = arith.constant 1.280000e+02 : f32
    %290 = vector.broadcast %cst_113 : f32 to vector<32x1xf32>
    %291 = arith.divf %289, %290 : vector<32x1xf32>
    %292 = arith.mulf %283, %283 : vector<32x128xf32>
    %cst_114 = arith.constant dense<0.000000e+00> : vector<32xf32>
    %293 = vector.multi_reduction <add>, %292, %cst_114 [1] : vector<32x128xf32> to vector<32xf32>
    %294 = vector.shape_cast %293 : vector<32xf32> to vector<32x1xf32>
    %cst_115 = arith.constant 1.280000e+02 : f32
    %295 = vector.broadcast %cst_115 : f32 to vector<32x1xf32>
    %296 = arith.divf %294, %295 : vector<32x1xf32>
    %297 = arith.mulf %291, %291 : vector<32x1xf32>
    %298 = arith.subf %296, %297 : vector<32x1xf32>
    %299 = vector.broadcast %291 : vector<32x1xf32> to vector<32x128xf32>
    %300 = arith.subf %283, %299 : vector<32x128xf32>
    %cst_116 = arith.constant 9.99999974E-6 : f32
    %301 = vector.broadcast %cst_116 : f32 to vector<32x1xf32>
    %302 = arith.addf %298, %301 : vector<32x1xf32>
    %303 = math.rsqrt %302 : vector<32x1xf32>
    %304 = vector.broadcast %303 : vector<32x1xf32> to vector<32x128xf32>
    %305 = arith.mulf %300, %304 : vector<32x128xf32>
    %306 = vector.broadcast %285 : vector<1x128xf32> to vector<32x128xf32>
    %307 = arith.mulf %305, %306 : vector<32x128xf32>
    %308 = vector.broadcast %287 : vector<1x128xf32> to vector<32x128xf32>
    %309 = arith.addf %307, %308 : vector<32x128xf32>
    %310 = arith.truncf %309 : vector<32x128xf32> to vector<32x128xbf16>
    %c1_117 = arith.constant 1 : index
    %c0_118 = arith.constant 0 : index
    %c0_119 = arith.constant 0 : index
    %311 = vector.load %arg12[%c1_117, %c0_118, %c0_119] : memref<2x128x256xbf16, #tpu.memory_space<vmem>>, vector<1x128x256xbf16>
    %312 = vector.shape_cast %311 : vector<1x128x256xbf16> to vector<128x256xbf16>
    %cst_120 = arith.constant dense<0.000000e+00> : vector<32x256xf32>
    %313 = tpu.matmul %310, %312, %cst_120 {dimension_numbers = #tpu.dot_dimension_numbers<[1], [0], [0], [1], [0, 0, 1, 1], [], []>} : vector<32x128xbf16>, vector<128x256xbf16>, vector<32x256xf32> -> vector<32x256xf32>
    %c1_121 = arith.constant 1 : index
    %c0_122 = arith.constant 0 : index
    %c0_123 = arith.constant 0 : index
    %314 = vector.load %arg13[%c1_121, %c0_122, %c0_123] : memref<2x1x256xf32, #tpu.memory_space<vmem>>, vector<1x1x256xf32>
    %315 = vector.shape_cast %314 : vector<1x1x256xf32> to vector<1x256xf32>
    %316 = vector.broadcast %315 : vector<1x256xf32> to vector<32x256xf32>
    %317 = arith.addf %313, %316 : vector<32x256xf32>
    %cst_124 = arith.constant 0.000000e+00 : f32
    %318 = vector.broadcast %cst_124 : f32 to vector<32x256xf32>
    %319 = arith.maximumf %317, %318 : vector<32x256xf32>
    %320 = arith.truncf %319 : vector<32x256xf32> to vector<32x256xbf16>
    %c1_125 = arith.constant 1 : index
    %c0_126 = arith.constant 0 : index
    %c0_127 = arith.constant 0 : index
    %321 = vector.load %arg14[%c1_125, %c0_126, %c0_127] : memref<2x256x128xbf16, #tpu.memory_space<vmem>>, vector<1x256x128xbf16>
    %322 = vector.shape_cast %321 : vector<1x256x128xbf16> to vector<256x128xbf16>
    %cst_128 = arith.constant dense<0.000000e+00> : vector<32x128xf32>
    %323 = tpu.matmul %320, %322, %cst_128 {dimension_numbers = #tpu.dot_dimension_numbers<[1], [0], [0], [1], [0, 0, 1, 1], [], []>} : vector<32x256xbf16>, vector<256x128xbf16>, vector<32x128xf32> -> vector<32x128xf32>
    %c1_129 = arith.constant 1 : index
    %c0_130 = arith.constant 0 : index
    %c0_131 = arith.constant 0 : index
    %324 = vector.load %arg15[%c1_129, %c0_130, %c0_131] : memref<2x1x128xf32, #tpu.memory_space<vmem>>, vector<1x1x128xf32>
    %325 = vector.shape_cast %324 : vector<1x1x128xf32> to vector<1x128xf32>
    %326 = vector.broadcast %325 : vector<1x128xf32> to vector<32x128xf32>
    %327 = arith.addf %323, %326 : vector<32x128xf32>
    %328 = arith.addf %309, %327 : vector<32x128xf32>
    %c1_132 = arith.constant 1 : index
    %c0_133 = arith.constant 0 : index
    %c0_134 = arith.constant 0 : index
    %329 = vector.load %arg16[%c1_132, %c0_133, %c0_134] : memref<2x1x128xf32, #tpu.memory_space<vmem>>, vector<1x1x128xf32>
    %330 = vector.shape_cast %329 : vector<1x1x128xf32> to vector<1x128xf32>
    %c1_135 = arith.constant 1 : index
    %c0_136 = arith.constant 0 : index
    %c0_137 = arith.constant 0 : index
    %331 = vector.load %arg17[%c1_135, %c0_136, %c0_137] : memref<2x1x128xf32, #tpu.memory_space<vmem>>, vector<1x1x128xf32>
    %332 = vector.shape_cast %331 : vector<1x1x128xf32> to vector<1x128xf32>
    %cst_138 = arith.constant dense<0.000000e+00> : vector<32xf32>
    %333 = vector.multi_reduction <add>, %328, %cst_138 [1] : vector<32x128xf32> to vector<32xf32>
    %334 = vector.shape_cast %333 : vector<32xf32> to vector<32x1xf32>
    %cst_139 = arith.constant 1.280000e+02 : f32
    %335 = vector.broadcast %cst_139 : f32 to vector<32x1xf32>
    %336 = arith.divf %334, %335 : vector<32x1xf32>
    %337 = arith.mulf %328, %328 : vector<32x128xf32>
    %cst_140 = arith.constant dense<0.000000e+00> : vector<32xf32>
    %338 = vector.multi_reduction <add>, %337, %cst_140 [1] : vector<32x128xf32> to vector<32xf32>
    %339 = vector.shape_cast %338 : vector<32xf32> to vector<32x1xf32>
    %cst_141 = arith.constant 1.280000e+02 : f32
    %340 = vector.broadcast %cst_141 : f32 to vector<32x1xf32>
    %341 = arith.divf %339, %340 : vector<32x1xf32>
    %342 = arith.mulf %336, %336 : vector<32x1xf32>
    %343 = arith.subf %341, %342 : vector<32x1xf32>
    %344 = vector.broadcast %336 : vector<32x1xf32> to vector<32x128xf32>
    %345 = arith.subf %328, %344 : vector<32x128xf32>
    %cst_142 = arith.constant 9.99999974E-6 : f32
    %346 = vector.broadcast %cst_142 : f32 to vector<32x1xf32>
    %347 = arith.addf %343, %346 : vector<32x1xf32>
    %348 = math.rsqrt %347 : vector<32x1xf32>
    %349 = vector.broadcast %348 : vector<32x1xf32> to vector<32x128xf32>
    %350 = arith.mulf %345, %349 : vector<32x128xf32>
    %351 = vector.broadcast %330 : vector<1x128xf32> to vector<32x128xf32>
    %352 = arith.mulf %350, %351 : vector<32x128xf32>
    %353 = vector.broadcast %332 : vector<1x128xf32> to vector<32x128xf32>
    %354 = arith.addf %352, %353 : vector<32x128xf32>
    %355 = arith.truncf %354 : vector<32x128xf32> to vector<32x128xbf16>
    %c0_143 = arith.constant 0 : index
    %c0_144 = arith.constant 0 : index
    %356 = vector.load %arg18[%c0_143, %c0_144] : memref<32x128xbf16, #tpu.memory_space<vmem>>, vector<32x128xbf16>
    tpu.vector_store %arg18[%c0_143, %c0_144], %355 {strides = array<i32>} : memref<32x128xbf16, #tpu.memory_space<vmem>>, vector<32x128xbf16>,
    return
  }
  func.func @transform_0(%arg0: i32) -> (i32, i32) {
    %c0_i32 = arith.constant 0 : i32
    %c0_i32_0 = arith.constant 0 : i32
    %c0_i32_1 = arith.constant 0 : i32
    return %c0_i32, %c0_i32_0 : i32, i32
  }
  func.func @transform_1(%arg0: i32) -> (i32, i32) {
    %c0_i32 = arith.constant 0 : i32
    %c0_i32_0 = arith.constant 0 : i32
    %c0_i32_1 = arith.constant 0 : i32
    return %c0_i32, %c0_i32_0 : i32, i32
  }
  func.func @transform_2(%arg0: i32) -> (i32, i32) {
    %c0_i32 = arith.constant 0 : i32
    %c0_i32_0 = arith.constant 0 : i32
    %c0_i32_1 = arith.constant 0 : i32
    return %c0_i32, %c0_i32_0 : i32, i32
  }
  func.func @transform_3(%arg0: i32) -> (i32, i32) {
    %c0_i32 = arith.constant 0 : i32
    %c0_i32_0 = arith.constant 0 : i32
    %c0_i32_1 = arith.constant 0 : i32
    return %c0_i32, %c0_i32_0 : i32, i32
  }
  func.func @transform_4(%arg0: i32) -> (i32, i32) {
    %c0_i32 = arith.constant 0 : i32
    %c0_i32_0 = arith.constant 0 : i32
    %c0_i32_1 = arith.constant 0 : i32
    return %c0_i32, %c0_i32_0 : i32, i32
  }
  func.func @transform_5(%arg0: i32) -> (i32, i32, i32) {
    %c0_i32 = arith.constant 0 : i32
    %c0_i32_0 = arith.constant 0 : i32
    %c0_i32_1 = arith.constant 0 : i32
    %c0_i32_2 = arith.constant 0 : i32
    return %c0_i32, %c0_i32_0, %c0_i32_1 : i32, i32, i32
  }
  func.func @transform_6(%arg0: i32) -> (i32, i32, i32) {
    %c0_i32 = arith.constant 0 : i32
    %c0_i32_0 = arith.constant 0 : i32
    %c0_i32_1 = arith.constant 0 : i32
    %c0_i32_2 = arith.constant 0 : i32
    return %c0_i32, %c0_i32_0, %c0_i32_1 : i32, i32, i32
  }
  func.func @transform_7(%arg0: i32) -> (i32, i32, i32) {
    %c0_i32 = arith.constant 0 : i32
    %c0_i32_0 = arith.constant 0 : i32
    %c0_i32_1 = arith.constant 0 : i32
    %c0_i32_2 = arith.constant 0 : i32
    return %c0_i32, %c0_i32_0, %c0_i32_1 : i32, i32, i32
  }
  func.func @transform_8(%arg0: i32) -> (i32, i32, i32) {
    %c0_i32 = arith.constant 0 : i32
    %c0_i32_0 = arith.constant 0 : i32
    %c0_i32_1 = arith.constant 0 : i32
    %c0_i32_2 = arith.constant 0 : i32
    return %c0_i32, %c0_i32_0, %c0_i32_1 : i32, i32, i32
  }
  func.func @transform_9(%arg0: i32) -> (i32, i32, i32) {
    %c0_i32 = arith.constant 0 : i32
    %c0_i32_0 = arith.constant 0 : i32
    %c0_i32_1 = arith.constant 0 : i32
    %c0_i32_2 = arith.constant 0 : i32
    return %c0_i32, %c0_i32_0, %c0_i32_1 : i32, i32, i32
  }
  func.func @transform_10(%arg0: i32) -> (i32, i32, i32) {
    %c0_i32 = arith.constant 0 : i32
    %c0_i32_0 = arith.constant 0 : i32
    %c0_i32_1 = arith.constant 0 : i32
    %c0_i32_2 = arith.constant 0 : i32
    return %c0_i32, %c0_i32_0, %c0_i32_1 : i32, i32, i32
  }
  func.func @transform_11(%arg0: i32) -> (i32, i32, i32) {
    %c0_i32 = arith.constant 0 : i32
    %c0_i32_0 = arith.constant 0 : i32
    %c0_i32_1 = arith.constant 0 : i32
    %c0_i32_2 = arith.constant 0 : i32
    return %c0_i32, %c0_i32_0, %c0_i32_1 : i32, i32, i32
  }
  func.func @transform_12(%arg0: i32) -> (i32, i32, i32) {
    %c0_i32 = arith.constant 0 : i32
    %c0_i32_0 = arith.constant 0 : i32
    %c0_i32_1 = arith.constant 0 : i32
    %c0_i32_2 = arith.constant 0 : i32
    return %c0_i32, %c0_i32_0, %c0_i32_1 : i32, i32, i32
  }
  func.func @transform_13(%arg0: i32) -> (i32, i32, i32) {
    %c0_i32 = arith.constant 0 : i32
    %c0_i32_0 = arith.constant 0 : i32
    %c0_i32_1 = arith.constant 0 : i32
    %c0_i32_2 = arith.constant 0 : i32
    return %c0_i32, %c0_i32_0, %c0_i32_1 : i32, i32, i32
  }
  func.func @transform_14(%arg0: i32) -> (i32, i32, i32) {
    %c0_i32 = arith.constant 0 : i32
    %c0_i32_0 = arith.constant 0 : i32
    %c0_i32_1 = arith.constant 0 : i32
    %c0_i32_2 = arith.constant 0 : i32
    return %c0_i32, %c0_i32_0, %c0_i32_1 : i32, i32, i32
  }
  func.func @transform_15(%arg0: i32) -> (i32, i32, i32) {
    %c0_i32 = arith.constant 0 : i32
    %c0_i32_0 = arith.constant 0 : i32
    %c0_i32_1 = arith.constant 0 : i32
    %c0_i32_2 = arith.constant 0 : i32
    return %c0_i32, %c0_i32_0, %c0_i32_1 : i32, i32, i32
  }
  func.func @transform_16(%arg0: i32) -> (i32, i32, i32) {
    %c0_i32 = arith.constant 0 : i32
    %c0_i32_0 = arith.constant 0 : i32
    %c0_i32_1 = arith.constant 0 : i32
    %c0_i32_2 = arith.constant 0 : i32
    return %c0_i32, %c0_i32_0, %c0_i32_1 : i32, i32, i32
  }
  func.func @transform_17(%arg0: i32) -> (i32, i32) {
    %c0_i32 = arith.constant 0 : i32
    %c0_i32_0 = arith.constant 0 : i32
    %c0_i32_1 = arith.constant 0 : i32
    return %c0_i32, %c0_i32_0 : i32, i32
  }
}

</mosaic_0001>

<llo_original>
// kernel: tpu_custom_call.1
$region0: #{tpu_custom_call.1}
  #allocation0 [shape = 'u32[]', space=smem, size = 0x4, offset = 0x4, fixed_abs, tag = 'smem constant byte address 0x4 - core index']
  #allocation1 [shape = 'u32[144,128]{1,0:T(1,128)}', space=vmem, size = 0x12000, scoped, tag = 'internal scratch']
  %s0 = inlined_call_operand.hbm [shape: bf16[32,128], index: 0, kind: input, shape index: {}]
  %s1 = inlined_call_operand.hbm [shape: f32[32,128], index: 1, kind: input, shape index: {}]
  %s2 = inlined_call_operand.hbm [shape: f32[32,32], index: 2, kind: input, shape index: {}]
  %s3 = inlined_call_operand.hbm [shape: bf16[128,128], index: 3, kind: input, shape index: {}]
  %s4 = inlined_call_operand.hbm [shape: f32[1,128], index: 4, kind: input, shape index: {}]
  %s5 = inlined_call_operand.hbm [shape: bf16[2,128,384], index: 5, kind: input, shape index: {}]
  %s6 = inlined_call_operand.vmem [shape: f32[2,1,384], index: 6, kind: input, shape index: {}]
  %s7 = inlined_call_operand.hbm [shape: bf16[2,128,128], index: 7, kind: input, shape index: {}]
  %s8 = inlined_call_operand.vmem [shape: f32[2,1,128], index: 8, kind: input, shape index: {}]
  %s9 = inlined_call_operand.vmem [shape: f32[2,1,128], index: 9, kind: input, shape index: {}]
  %s10 = inlined_call_operand.vmem [shape: f32[2,1,128], index: 10, kind: input, shape index: {}]
  %s11 = inlined_call_operand.hbm [shape: bf16[2,128,256], index: 11, kind: input, shape index: {}]
  %s12 = inlined_call_operand.vmem [shape: f32[2,1,256], index: 12, kind: input, shape index: {}]
  %s13 = inlined_call_operand.hbm [shape: bf16[2,256,128], index: 13, kind: input, shape index: {}]
  %s14 = inlined_call_operand.vmem [shape: f32[2,1,128], index: 14, kind: input, shape index: {}]
  %s15 = inlined_call_operand.vmem [shape: f32[2,1,128], index: 15, kind: input, shape index: {}]
  %s16 = inlined_call_operand.vmem [shape: f32[2,1,128], index: 16, kind: input, shape index: {}]
  %s17 = inlined_call_operand.hbm [shape: bf16[32,128], index: 17, kind: output, shape index: {}]
  %s18 = sld [smem:[#allocation0]]
  $region114: #{tpu_custom_call.1} parent=0
    _
  %s20 = ssub.s32 1, %s18
  %s21 = scalar_select 0, %s20, %s18
  $region1: #{tpu_custom_call.1} parent=0
    #allocation2 [shape = 'u8[8192]{0}', space=vmem, size = 0x2000, scoped, tag = 'input window, operand 0, single buffered']
    #allocation3 [shape = 's32[1]{0}', space=sflag, size = 0x4, scoped, tag = 'scoped memory for tpu_custom_call.1']
    #allocation4 [shape = 's32[1]{0}', space=sflag, size = 0x4, scoped, tag = 'scoped memory for tpu_custom_call.1']
    #allocation5 [shape = 'u8[16384]{0}', space=vmem, size = 0x4000, scoped, tag = 'input window, operand 1, single buffered']
    #allocation6 [shape = 's32[1]{0}', space=sflag, size = 0x4, scoped, tag = 'scoped memory for tpu_custom_call.1']
    #allocation7 [shape = 'u8[16384]{0}', space=vmem, size = 0x4000, scoped, tag = 'input window, operand 2, single buffered']
    #allocation8 [shape = 'u8[32768]{0}', space=vmem, size = 0x8000, scoped, tag = 'input window, operand 3, single buffered']
    #allocation9 [shape = 's32[1]{0}', space=sflag, size = 0x4, scoped, tag = 'scoped memory for tpu_custom_call.1']
    #allocation10 [shape = 'u8[512]{0}', space=vmem, size = 0x400, scoped, tag = 'input window, operand 4, single buffered']
    #allocation11 [shape = 'u8[196608]{0}', space=vmem, size = 0x30000, scoped, tag = 'input window, operand 5, single buffered']
    #allocation12 [shape = 's32[1]{0}', space=sflag, size = 0x4, scoped, tag = 'scoped memory for tpu_custom_call.1']
    #allocation13 [shape = 'u8[65536]{0}', space=vmem, size = 0x10000, scoped, tag = 'input window, operand 7, single buffered']
    #allocation14 [shape = 'u8[131072]{0}', space=vmem, size = 0x20000, scoped, tag = 'input window, operand 11, single buffered']
    #allocation15 [shape = 's32[1]{0}', space=sflag, size = 0x4, scoped, tag = 'scoped memory for tpu_custom_call.1']
    #allocation16 [shape = 'u8[131072]{0}', space=vmem, size = 0x20000, scoped, tag = 'input window, operand 13, single buffered']
    #allocation17 [shape = 'u8[8192]{0}', space=vmem, size = 0x2000, scoped, tag = 'output window, operand 0, single buffered']
    %22 = vsyncpa [#allocation3], 0
    %23 = vsyncpa [#allocation6], 0
    %24 = vsyncpa [#allocation9], 0
    %25 = vsyncpa [#allocation12], 0
    %26 = vsyncpa [#allocation15], 0
    %27 = vsyncpa [#allocation4], 0
    // Predicated region
    $region2: #{tpu_custom_call.1} parent=1 // pred_check
      _
    $region3: #{tpu_custom_call.1} parent=1 // pred_check_branch
      %29 = sbr.rel (0) target = $region5
    $region4: #{tpu_custom_call.1} parent=1 // pred_region
      %s31 = ssub.s32 256, 256
      %32 = vsyncadd [#allocation3], %s31
      %s33 = sshll.u32 [#allocation2], 4
      %s34 = int_to_ptr.vmem [resolvable:$true] %s33
      %39 = dma.hbm_to_vmem [thread:$0]  %s0, 256, %s34, [#allocation3], 64, 64, 4
    $region5: #{tpu_custom_call.1} parent=1 // pred_fallthru
      _
    // Predicated region
    $region6: #{tpu_custom_call.1} parent=1 // pred_check
      _
    $region7: #{tpu_custom_call.1} parent=1 // pred_check_branch
      %41 = sbr.rel (0) target = $region9
    $region8: #{tpu_custom_call.1} parent=1 // pred_region
      %s43 = ssub.s32 512, 512
      %44 = vsyncadd [#allocation6], %s43
      %s45 = sshll.u32 [#allocation5], 4
      %s46 = int_to_ptr.vmem [resolvable:$true] %s45
      %51 = dma.hbm_to_vmem [thread:$0]  %s1, 512, %s46, [#allocation6], 128, 128, 8
    $region9: #{tpu_custom_call.1} parent=1 // pred_fallthru
      _
    // Predicated region
    $region10: #{tpu_custom_call.1} parent=1 // pred_check
      _
    $region11: #{tpu_custom_call.1} parent=1 // pred_check_branch
      %53 = sbr.rel (0) target = $region13
    $region12: #{tpu_custom_call.1} parent=1 // pred_region
      %s55 = ssub.s32 512, 512
      %56 = vsyncadd [#allocation6], %s55
      %s57 = sshll.u32 [#allocation7], 4
      %s58 = int_to_ptr.vmem [resolvable:$true] %s57
      %63 = dma.hbm_to_vmem [thread:$0]  %s2, 512, %s58, [#allocation6], 128, 128, 8
    $region13: #{tpu_custom_call.1} parent=1 // pred_fallthru
      _
    // Predicated region
    $region14: #{tpu_custom_call.1} parent=1 // pred_check
      _
    $region15: #{tpu_custom_call.1} parent=1 // pred_check_branch
      %65 = sbr.rel (0) target = $region17
    $region16: #{tpu_custom_call.1} parent=1 // pred_region
      %s67 = ssub.s32 1024, 1024
      %68 = vsyncadd [#allocation9], %s67
      %s69 = sshll.u32 [#allocation8], 4
      %s70 = int_to_ptr.vmem [resolvable:$true] %s69
      %75 = dma.hbm_to_vmem [thread:$0]  %s3, 1024, %s70, [#allocation9], 64, 64, 4
    $region17: #{tpu_custom_call.1} parent=1 // pred_fallthru
      _
    // Predicated region
    $region18: #{tpu_custom_call.1} parent=1 // pred_check
      _
    $region19: #{tpu_custom_call.1} parent=1 // pred_check_branch
      %77 = sbr.rel (0) target = $region21
    $region20: #{tpu_custom_call.1} parent=1 // pred_region
      %s79 = ssub.s32 16, 16
      %80 = vsyncadd [#allocation9], %s79
      %s82 = sshll.u32 [#allocation10], 4
      %s83 = int_to_ptr.vmem [resolvable:$true] %s82
      %85 = dma.hbm_to_vmem [thread:$0]  %s4, 16, %s83, [#allocation9]
    $region21: #{tpu_custom_call.1} parent=1 // pred_fallthru
      _
    // Predicated region
    $region22: #{tpu_custom_call.1} parent=1 // pred_check
      _
    $region23: #{tpu_custom_call.1} parent=1 // pred_check_branch
      %87 = sbr.rel (0) target = $region25
    $region24: #{tpu_custom_call.1} parent=1 // pred_region
      %s89 = ssub.s32 6144, 6144
      %90 = vsyncadd [#allocation12], %s89
      %s91 = sshll.u32 [#allocation11], 4
      %s92 = int_to_ptr.vmem [resolvable:$true] %s91
      %97 = dma.hbm_to_vmem [thread:$0]  %s5, 6144, %s92, [#allocation12], 192, 192, 12
    $region25: #{tpu_custom_call.1} parent=1 // pred_fallthru
      _
    // Predicated region
    $region26: #{tpu_custom_call.1} parent=1 // pred_check
      _
    $region27: #{tpu_custom_call.1} parent=1 // pred_check_branch
      %99 = sbr.rel (0) target = $region29
    $region28: #{tpu_custom_call.1} parent=1 // pred_region
      _
    $region29: #{tpu_custom_call.1} parent=1 // pred_fallthru
      _
    // Predicated region
    $region30: #{tpu_custom_call.1} parent=1 // pred_check
      _
    $region31: #{tpu_custom_call.1} parent=1 // pred_check_branch
      %101 = sbr.rel (0) target = $region33
    $region32: #{tpu_custom_call.1} parent=1 // pred_region
      %s103 = ssub.s32 2048, 2048
      %104 = vsyncadd [#allocation12], %s103
      %s105 = sshll.u32 [#allocation13], 4
      %s106 = int_to_ptr.vmem [resolvable:$true] %s105
      %111 = dma.hbm_to_vmem [thread:$0]  %s7, 2048, %s106, [#allocation12], 64, 64, 4
    $region33: #{tpu_custom_call.1} parent=1 // pred_fallthru
      _
    // Predicated region
    $region34: #{tpu_custom_call.1} parent=1 // pred_check
      _
    $region35: #{tpu_custom_call.1} parent=1 // pred_check_branch
      %113 = sbr.rel (0) target = $region37
    $region36: #{tpu_custom_call.1} parent=1 // pred_region
      _
    $region37: #{tpu_custom_call.1} parent=1 // pred_fallthru
      _
    // Predicated region
    $region38: #{tpu_custom_call.1} parent=1 // pred_check
      _
    $region39: #{tpu_custom_call.1} parent=1 // pred_check_branch
      %115 = sbr.rel (0) target = $region41
    $region40: #{tpu_custom_call.1} parent=1 // pred_region
      _
    $region41: #{tpu_custom_call.1} parent=1 // pred_fallthru
      _
    // Predicated region
    $region42: #{tpu_custom_call.1} parent=1 // pred_check
      _
    $region43: #{tpu_custom_call.1} parent=1 // pred_check_branch
      %117 = sbr.rel (0) target = $region45
    $region44: #{tpu_custom_call.1} parent=1 // pred_region
      _
    $region45: #{tpu_custom_call.1} parent=1 // pred_fallthru
      _
    // Predicated region
    $region46: #{tpu_custom_call.1} parent=1 // pred_check
      _
    $region47: #{tpu_custom_call.1} parent=1 // pred_check_branch
      %119 = sbr.rel (0) target = $region49
    $region48: #{tpu_custom_call.1} parent=1 // pred_region
      %s121 = ssub.s32 4096, 4096
      %122 = vsyncadd [#allocation15], %s121
      %s123 = sshll.u32 [#allocation14], 4
      %s124 = int_to_ptr.vmem [resolvable:$true] %s123
      %129 = dma.hbm_to_vmem [thread:$0]  %s11, 4096, %s124, [#allocation15], 128, 128, 8
    $region49: #{tpu_custom_call.1} parent=1 // pred_fallthru
      _
    // Predicated region
    $region50: #{tpu_custom_call.1} parent=1 // pred_check
      _
    $region51: #{tpu_custom_call.1} parent=1 // pred_check_branch
      %131 = sbr.rel (0) target = $region53
    $region52: #{tpu_custom_call.1} parent=1 // pred_region
      _
    $region53: #{tpu_custom_call.1} parent=1 // pred_fallthru
      _
    // Predicated region
    $region54: #{tpu_custom_call.1} parent=1 // pred_check
      _
    $region55: #{tpu_custom_call.1} parent=1 // pred_check_branch
      %133 = sbr.rel (0) target = $region57
    $region56: #{tpu_custom_call.1} parent=1 // pred_region
      %s135 = ssub.s32 4096, 4096
      %136 = vsyncadd [#allocation15], %s135
      %s137 = sshll.u32 [#allocation16], 4
      %s138 = int_to_ptr.vmem [resolvable:$true] %s137
      %143 = dma.hbm_to_vmem [thread:$0]  %s13, 4096, %s138, [#allocation15], 64, 64, 4
    $region57: #{tpu_custom_call.1} parent=1 // pred_fallthru
      _
    // Predicated region
    $region58: #{tpu_custom_call.1} parent=1 // pred_check
      _
    $region59: #{tpu_custom_call.1} parent=1 // pred_check_branch
      %145 = sbr.rel (0) target = $region61
    $region60: #{tpu_custom_call.1} parent=1 // pred_region
      _
    $region61: #{tpu_custom_call.1} parent=1 // pred_fallthru
      _
    // Predicated region
    $region62: #{tpu_custom_call.1} parent=1 // pred_check
      _
    $region63: #{tpu_custom_call.1} parent=1 // pred_check_branch
      %147 = sbr.rel (0) target = $region65
    $region64: #{tpu_custom_call.1} parent=1 // pred_region
      _
    $region65: #{tpu_custom_call.1} parent=1 // pred_fallthru
      _
    // Predicated region
    $region66: #{tpu_custom_call.1} parent=1 // pred_check
      _
    $region67: #{tpu_custom_call.1} parent=1 // pred_check_branch
      %149 = sbr.rel (0) target = $region69
    $region68: #{tpu_custom_call.1} parent=1 // pred_region
      _
    $region69: #{tpu_custom_call.1} parent=1 // pred_fallthru
      _
    // Predicated region
    $region70: #{tpu_custom_call.1} parent=1 // pred_check
      _
    $region71: #{tpu_custom_call.1} parent=1 // pred_check_branch
      %151 = sbr.rel (0) target = $region73
    $region72: #{tpu_custom_call.1} parent=1 // pred_region
      %152 = dma.done [#allocation3], 256
    $region73: #{tpu_custom_call.1} parent=1 // pred_fallthru
      _
    // Predicated region
    $region74: #{tpu_custom_call.1} parent=1 // pred_check
      _
    $region75: #{tpu_custom_call.1} parent=1 // pred_check_branch
      %154 = sbr.rel (0) target = $region77
    $region76: #{tpu_custom_call.1} parent=1 // pred_region
      %155 = dma.done [#allocation6], 512
    $region77: #{tpu_custom_call.1} parent=1 // pred_fallthru
      _
    // Predicated region
    $region78: #{tpu_custom_call.1} parent=1 // pred_check
      _
    $region79: #{tpu_custom_call.1} parent=1 // pred_check_branch
      %157 = sbr.rel (0) target = $region81
    $region80: #{tpu_custom_call.1} parent=1 // pred_region
      %158 = dma.done [#allocation6], 512
    $region81: #{tpu_custom_call.1} parent=1 // pred_fallthru
      _
    // Predicated region
    $region82: #{tpu_custom_call.1} parent=1 // pred_check
      _
    $region83: #{tpu_custom_call.1} parent=1 // pred_check_branch
      %160 = sbr.rel (0) target = $region85
    $region84: #{tpu_custom_call.1} parent=1 // pred_region
      %161 = dma.done [#allocation9], 1024
    $region85: #{tpu_custom_call.1} parent=1 // pred_fallthru
      _
    // Predicated region
    $region86: #{tpu_custom_call.1} parent=1 // pred_check
      _
    $region87: #{tpu_custom_call.1} parent=1 // pred_check_branch
      %163 = sbr.rel (0) target = $region89
    $region88: #{tpu_custom_call.1} parent=1 // pred_region
      %164 = dma.done [#allocation9], 16
    $region89: #{tpu_custom_call.1} parent=1 // pred_fallthru
      _
    // Predicated region
    $region90: #{tpu_custom_call.1} parent=1 // pred_check
      _
    $region91: #{tpu_custom_call.1} parent=1 // pred_check_branch
      %166 = sbr.rel (0) target = $region93
    $region92: #{tpu_custom_call.1} parent=1 // pred_region
      %167 = dma.done [#allocation12], 6144
    $region93: #{tpu_custom_call.1} parent=1 // pred_fallthru
      _
    // Predicated region
    $region94: #{tpu_custom_call.1} parent=1 // pred_check
      _
    $region95: #{tpu_custom_call.1} parent=1 // pred_check_branch
      %169 = sbr.rel (0) target = $region97
    $region96: #{tpu_custom_call.1} parent=1 // pred_region
      %170 = dma.done [#allocation12], 2048
    $region97: #{tpu_custom_call.1} parent=1 // pred_fallthru
      _
    // Predicated region
    $region98: #{tpu_custom_call.1} parent=1 // pred_check
      _
    $region99: #{tpu_custom_call.1} parent=1 // pred_check_branch
      %172 = sbr.rel (0) target = $region101
    $region100: #{tpu_custom_call.1} parent=1 // pred_region
      %173 = dma.done [#allocation15], 4096
    $region101: #{tpu_custom_call.1} parent=1 // pred_fallthru
      _
    // Predicated region
    $region102: #{tpu_custom_call.1} parent=1 // pred_check
      _
    $region103: #{tpu_custom_call.1} parent=1 // pred_check_branch
      %175 = sbr.rel (0) target = $region105
    $region104: #{tpu_custom_call.1} parent=1 // pred_region
      %176 = dma.done [#allocation15], 4096
    $region105: #{tpu_custom_call.1} parent=1 // pred_fallthru
      _
    %v178 = vld [vmem:[#allocation7] sm:$0xff]
    %v179 = vld [vmem:[#allocation7 + $0x8] sm:$0xff]
    %v180 = vld [vmem:[#allocation7 + $0x10] sm:$0xff]
    %v181 = vld [vmem:[#allocation7 + $0x18] sm:$0xff]
    %v182 = vld [vmem:[#allocation2] sm:$0xf]
    %v183 = vld [vmem:[#allocation2 + $0x4] sm:$0xf]
    %v184 = vld [vmem:[#allocation2 + $0x8] sm:$0xf]
    %v185 = vld [vmem:[#allocation2 + $0xc] sm:$0xf]
    %v186 = vld [vmem:[#allocation8] sm:$0xf]
    %v187 = vld [vmem:[#allocation8 + $0x4] sm:$0xf]
    %v188 = vld [vmem:[#allocation8 + $0x8] sm:$0xf]
    %v189 = vld [vmem:[#allocation8 + $0xc] sm:$0xf]
    %v190 = vld [vmem:[#allocation8 + $0x10] sm:$0xf]
    %v191 = vld [vmem:[#allocation8 + $0x14] sm:$0xf]
    %v192 = vld [vmem:[#allocation8 + $0x18] sm:$0xf]
    %v193 = vld [vmem:[#allocation8 + $0x1c] sm:$0xf]
    %v194 = vld [vmem:[#allocation8 + $0x20] sm:$0xf]
    %v195 = vld [vmem:[#allocation8 + $0x24] sm:$0xf]
    %v196 = vld [vmem:[#allocation8 + $0x28] sm:$0xf]
    %v197 = vld [vmem:[#allocation8 + $0x2c] sm:$0xf]
    %v198 = vld [vmem:[#allocation8 + $0x30] sm:$0xf]
    %v199 = vld [vmem:[#allocation8 + $0x34] sm:$0xf]
    %v200 = vld [vmem:[#allocation8 + $0x38] sm:$0xf]
    %v201 = vld [vmem:[#allocation8 + $0x3c] sm:$0xf]
    %v202 = vld [vmem:[#allocation10] sm:$0x1]
    %v204 = vlaneseq
    %v205 = vshrl.u32 %v204, 7
    %v206 = vsub.s32 0, %v205
    %v207 = vrot.slane %v202, %v206
    %v213 = vunpack.c.l.b16 %v182
    %v214 = vunpack.c.l.b16 %v183
    %v215 = vunpack.c.l.b16 %v184
    %v216 = vunpack.c.l.b16 %v185
    %v217 = vpack.c.b16 %v214, %v213
    %v218 = vpack.c.b16 %v216, %v215
    %v237 = vunpack.c.l.b16 %v186
    %v238 = vunpack.c.l.b16 %v187
    %v239 = vunpack.c.l.b16 %v188
    %v240 = vunpack.c.l.b16 %v189
    %v241 = vunpack.c.l.b16 %v190
    %v242 = vunpack.c.l.b16 %v191
    %v243 = vunpack.c.l.b16 %v192
    %v244 = vunpack.c.l.b16 %v193
    %v245 = vunpack.c.l.b16 %v194
    %v246 = vunpack.c.l.b16 %v195
    %v247 = vunpack.c.l.b16 %v196
    %v248 = vunpack.c.l.b16 %v197
    %v249 = vunpack.c.l.b16 %v198
    %v250 = vunpack.c.l.b16 %v199
    %v251 = vunpack.c.l.b16 %v200
    %v252 = vunpack.c.l.b16 %v201
    %v253 = vpack.c.b16 %v238, %v237
    %v254 = vpack.c.b16 %v240, %v239
    %v255 = vpack.c.b16 %v242, %v241
    %v256 = vpack.c.b16 %v244, %v243
    %v257 = vpack.c.b16 %v246, %v245
    %v258 = vpack.c.b16 %v248, %v247
    %v259 = vpack.c.b16 %v250, %v249
    %v260 = vpack.c.b16 %v252, %v251
    %269 = vmatprep.subr.bf16.mxu0 0
    %270 = vmatpush1.bf16.msra.mxu0 %v253
    %271 = vmatprep.subr.bf16.mxu0 0
    %272 = vmatpush1.bf16.msra.mxu0 %v254
    %273 = vmatprep.subr.bf16.mxu0 0
    %274 = vmatpush1.bf16.msra.mxu0 %v255
    %275 = vmatprep.subr.bf16.mxu0 0
    %276 = vmatpush1.bf16.msra.mxu0 %v256
    %277 = vmatprep.subr.bf16.mxu0 0
    %278 = vmatpush1.bf16.msra.mxu0 %v257
    %279 = vmatprep.subr.bf16.mxu0 0
    %280 = vmatpush1.bf16.msra.mxu0 %v258
    %281 = vmatprep.subr.bf16.mxu0 0
    %282 = vmatpush1.bf16.msra.mxu0 %v259
    %283 = vmatprep.subr.bf16.mxu0 0
    %284 = vmatpush1.bf16.msra.mxu0 %v260
    %285 = vmatprep.subr.bf16.mxu0 0
    %286 = vmatpush1.bf16.msra.mxu0 0
    %287 = vmatprep.subr.bf16.mxu0 0
    %288 = vmatpush1.bf16.msra.mxu0 0
    %289 = vmatprep.subr.bf16.mxu0 0
    %290 = vmatpush1.bf16.msra.mxu0 0
    %291 = vmatprep.subr.bf16.mxu0 0
    %292 = vmatpush1.bf16.msra.mxu0 0
    %293 = vmatprep.subr.bf16.mxu0 0
    %294 = vmatpush1.bf16.msra.mxu0 0
    %295 = vmatprep.subr.bf16.mxu0 0
    %296 = vmatpush1.bf16.msra.mxu0 0
    %297 = vmatprep.subr.bf16.mxu0 0
    %298 = vmatpush1.bf16.msra.mxu0 0
    %299 = vmatprep.subr.bf16.mxu0 0
    %300 = vmatpush1.bf16.msra.mxu0 0
    %301 = vmatprep.mubr.bf16.mxu0 0
    %302 = vmatmul.mubr.bf16.gmra.mrb[0].mxu0 %v217
    %v303 = vpop.f32.mrb[0].mxu0
    %v304 = vadd.f32 %v207, %v303
    %v305 = vpop.f32.mrb[0].mxu0
    %v306 = vpop.f32.mrb[0].mxu0
    %v307 = vadd.f32 %v207, %v306
    %v308 = vpop.f32.mrb[0].mxu0
    %309 = vmatprep.mubr.bf16.mxu0 0
    %310 = vmatmul.mubr.bf16.gmra.mrb[0].mxu0 %v218
    %v311 = vpop.f32.mrb[0].mxu0
    %v312 = vadd.f32 %v207, %v311
    %v313 = vpop.f32.mrb[0].mxu0
    %v314 = vpop.f32.mrb[0].mxu0
    %v315 = vadd.f32 %v207, %v314
    %v316 = vpop.f32.mrb[0].mxu0
    %317 = vdwg.mxu0
    %v318 = vmax.f32 %v304, 0.0
    %v319 = vmax.f32 %v307, 0.0
    %v320 = vmax.f32 %v312, 0.0
    %v321 = vmax.f32 %v315, 0.0
    %v322 = vld [vmem:[#allocation5] sm:$0xff]
    %v323 = vld [vmem:[#allocation5 + $0x8] sm:$0xff]
    %v324 = vld [vmem:[#allocation5 + $0x10] sm:$0xff]
    %v325 = vld [vmem:[#allocation5 + $0x18] sm:$0xff]
    %v326 = vadd.f32 %v318, %v322
    %v327 = vadd.f32 %v319, %v323
    %v328 = vadd.f32 %v320, %v324
    %v329 = vadd.f32 %v321, %v325
    %v330 = vpack.c.bf16 %v327, %v326
    %v331 = vpack.c.bf16 %v329, %v328
    %v332 = vld [vmem:[#allocation11] sm:$0xff]
    %v333 = vld [vmem:[#allocation11 + $0x8] sm:$0xf]
    %v334 = vld [vmem:[#allocation11 + $0xc] sm:$0xff]
    %v335 = vld [vmem:[#allocation11 + $0x14] sm:$0xf]
    %v336 = vld [vmem:[#allocation11 + $0x18] sm:$0xff]
    %v337 = vld [vmem:[#allocation11 + $0x20] sm:$0xf]
    %v338 = vld [vmem:[#allocation11 + $0x24] sm:$0xff]
    %v339 = vld [vmem:[#allocation11 + $0x2c] sm:$0xf]
    %v340 = vld [vmem:[#allocation11 + $0x30] sm:$0xff]
    %v341 = vld [vmem:[#allocation11 + $0x38] sm:$0xf]
    %v342 = vld [vmem:[#allocation11 + $0x3c] sm:$0xff]
    %v343 = vld [vmem:[#allocation11 + $0x44] sm:$0xf]
    %v344 = vld [vmem:[#allocation11 + $0x48] sm:$0xff]
    %v345 = vld [vmem:[#allocation11 + $0x50] sm:$0xf]
    %v346 = vld [vmem:[#allocation11 + $0x54] sm:$0xff]
    %v347 = vld [vmem:[#allocation11 + $0x5c] sm:$0xf]
    %v348 = vld [vmem:[#allocation11 + $0x60] sm:$0xff]
    %v349 = vld [vmem:[#allocation11 + $0x68] sm:$0xf]
    %v350 = vld [vmem:[#allocation11 + $0x6c] sm:$0xff]
    %v351 = vld [vmem:[#allocation11 + $0x74] sm:$0xf]
    %v352 = vld [vmem:[#allocation11 + $0x78] sm:$0xff]
    %v353 = vld [vmem:[#allocation11 + $0x80] sm:$0xf]
    %v354 = vld [vmem:[#allocation11 + $0x84] sm:$0xff]
    %v355 = vld [vmem:[#allocation11 + $0x8c] sm:$0xf]
    %v356 = vld [vmem:[#allocation11 + $0x90] sm:$0xff]
    %v357 = vld [vmem:[#allocation11 + $0x98] sm:$0xf]
    %v358 = vld [vmem:[#allocation11 + $0x9c] sm:$0xff]
    %v359 = vld [vmem:[#allocation11 + $0xa4] sm:$0xf]
    %v360 = vld [vmem:[#allocation11 + $0xa8] sm:$0xff]
    %v361 = vld [vmem:[#allocation11 + $0xb0] sm:$0xf]
    %v362 = vld [vmem:[#allocation11 + $0xb4] sm:$0xff]
    %v363 = vld [vmem:[#allocation11 + $0xbc] sm:$0xf]
    %v364 = vld [vmem:[%s6] sm:$0x7]
    %v366 = vlaneseq
    %v367 = vshrl.u32 %v366, 7
    %v368 = vsub.s32 0, %v367
    %v369 = vrot.slane %v364, %v368
    %v370 = vlaneseq
    %v371 = vshrl.u32 %v370, 7
    %v372 = vsub.s32 1, %v371
    %v373 = vrot.slane %v364, %v372
    %v374 = vlaneseq
    %v375 = vshrl.u32 %v374, 7
    %v376 = vsub.s32 2, %v375
    %v377 = vrot.slane %v364, %v376
    %v413 = vunpack.c.l.b16 %v332
    %v414 = vunpack.c.h.b16 %v332
    %v415 = vunpack.c.l.b16 %v333
    %v416 = vunpack.c.l.b16 %v334
    %v417 = vunpack.c.h.b16 %v334
    %v418 = vunpack.c.l.b16 %v335
    %v419 = vunpack.c.l.b16 %v336
    %v420 = vunpack.c.h.b16 %v336
    %v421 = vunpack.c.l.b16 %v337
    %v422 = vunpack.c.l.b16 %v338
    %v423 = vunpack.c.h.b16 %v338
    %v424 = vunpack.c.l.b16 %v339
    %v425 = vunpack.c.l.b16 %v340
    %v426 = vunpack.c.h.b16 %v340
    %v427 = vunpack.c.l.b16 %v341
    %v428 = vunpack.c.l.b16 %v342
    %v429 = vunpack.c.h.b16 %v342
    %v430 = vunpack.c.l.b16 %v343
    %v431 = vunpack.c.l.b16 %v344
    %v432 = vunpack.c.h.b16 %v344
    %v433 = vunpack.c.l.b16 %v345
    %v434 = vunpack.c.l.b16 %v346
    %v435 = vunpack.c.h.b16 %v346
    %v436 = vunpack.c.l.b16 %v347
    %v437 = vunpack.c.l.b16 %v348
    %v438 = vunpack.c.h.b16 %v348
    %v439 = vunpack.c.l.b16 %v349
    %v440 = vunpack.c.l.b16 %v350
    %v441 = vunpack.c.h.b16 %v350
    %v442 = vunpack.c.l.b16 %v351
    %v443 = vunpack.c.l.b16 %v352
    %v444 = vunpack.c.h.b16 %v352
    %v445 = vunpack.c.l.b16 %v353
    %v446 = vunpack.c.l.b16 %v354
    %v447 = vunpack.c.h.b16 %v354
    %v448 = vunpack.c.l.b16 %v355
    %v449 = vunpack.c.l.b16 %v356
    %v450 = vunpack.c.h.b16 %v356
    %v451 = vunpack.c.l.b16 %v357
    %v452 = vunpack.c.l.b16 %v358
    %v453 = vunpack.c.h.b16 %v358
    %v454 = vunpack.c.l.b16 %v359
    %v455 = vunpack.c.l.b16 %v360
    %v456 = vunpack.c.h.b16 %v360
    %v457 = vunpack.c.l.b16 %v361
    %v458 = vunpack.c.l.b16 %v362
    %v459 = vunpack.c.h.b16 %v362
    %v460 = vunpack.c.l.b16 %v363
    %v461 = vpack.c.b16 %v416, %v413
    %v462 = vpack.c.b16 %v417, %v414
    %v463 = vpack.c.b16 %v418, %v415
    %v464 = vpack.c.b16 %v422, %v419
    %v465 = vpack.c.b16 %v423, %v420
    %v466 = vpack.c.b16 %v424, %v421
    %v467 = vpack.c.b16 %v428, %v425
    %v468 = vpack.c.b16 %v429, %v426
    %v469 = vpack.c.b16 %v430, %v427
    %v470 = vpack.c.b16 %v434, %v431
    %v471 = vpack.c.b16 %v435, %v432
    %v472 = vpack.c.b16 %v436, %v433
    %v473 = vpack.c.b16 %v440, %v437
    %v474 = vpack.c.b16 %v441, %v438
    %v475 = vpack.c.b16 %v442, %v439
    %v476 = vpack.c.b16 %v446, %v443
    %v477 = vpack.c.b16 %v447, %v444
    %v478 = vpack.c.b16 %v448, %v445
    %v479 = vpack.c.b16 %v452, %v449
    %v480 = vpack.c.b16 %v453, %v450
    %v481 = vpack.c.b16 %v454, %v451
    %v482 = vpack.c.b16 %v458, %v455
    %v483 = vpack.c.b16 %v459, %v456
    %v484 = vpack.c.b16 %v460, %v457
    %509 = vmatprep.subr.bf16.mxu0 %v462
    %510 = vmatpush1.bf16.msra.mxu0 %v461
    %511 = vmatprep.subr.bf16.mxu0 %v465
    %512 = vmatpush1.bf16.msra.mxu0 %v464
    %513 = vmatprep.subr.bf16.mxu0 %v468
    %514 = vmatpush1.bf16.msra.mxu0 %v467
    %515 = vmatprep.subr.bf16.mxu0 %v471
    %516 = vmatpush1.bf16.msra.mxu0 %v470
    %517 = vmatprep.subr.bf16.mxu0 %v474
    %518 = vmatpush1.bf16.msra.mxu0 %v473
    %519 = vmatprep.subr.bf16.mxu0 %v477
    %520 = vmatpush1.bf16.msra.mxu0 %v476
    %521 = vmatprep.subr.bf16.mxu0 %v480
    %522 = vmatpush1.bf16.msra.mxu0 %v479
    %523 = vmatprep.subr.bf16.mxu0 %v483
    %524 = vmatpush1.bf16.msra.mxu0 %v482
    %525 = vmatprep.subr.bf16.mxu0 0
    %526 = vmatpush1.bf16.msra.mxu0 0
    %527 = vmatprep.subr.bf16.mxu0 0
    %528 = vmatpush1.bf16.msra.mxu0 0
    %529 = vmatprep.subr.bf16.mxu0 0
    %530 = vmatpush1.bf16.msra.mxu0 0
    %531 = vmatprep.subr.bf16.mxu0 0
    %532 = vmatpush1.bf16.msra.mxu0 0
    %533 = vmatprep.subr.bf16.mxu0 0
    %534 = vmatpush1.bf16.msra.mxu0 0
    %535 = vmatprep.subr.bf16.mxu0 0
    %536 = vmatpush1.bf16.msra.mxu0 0
    %537 = vmatprep.subr.bf16.mxu0 0
    %538 = vmatpush1.bf16.msra.mxu0 0
    %539 = vmatprep.subr.bf16.mxu0 0
    %540 = vmatpush1.bf16.msra.mxu0 0
    %541 = vmatprep.mubr.bf16.mxu0 0
    %542 = vmatmul.mubr.bf16.gmra.mrb[0].mxu0 %v330
    %v543 = vpop.f32.mrb[0].mxu0
    %v544 = vadd.f32 %v369, %v543
    %v545 = vpop.f32.mrb[0].mxu0
    %v546 = vadd.f32 %v373, %v545
    %v547 = vpop.f32.mrb[0].mxu0
    %v548 = vadd.f32 %v369, %v547
    %v549 = vpop.f32.mrb[0].mxu0
    %v550 = vadd.f32 %v373, %v549
    %551 = vmatprep.mubr.bf16.mxu0 0
    %552 = vmatmul.mubr.bf16.gmra.mrb[0].mxu0 %v331
    %v553 = vpop.f32.mrb[0].mxu0
    %v554 = vadd.f32 %v369, %v553
    %v555 = vpop.f32.mrb[0].mxu0
    %v556 = vadd.f32 %v373, %v555
    %v557 = vpop.f32.mrb[0].mxu0
    %v558 = vadd.f32 %v369, %v557
    %v559 = vpop.f32.mrb[0].mxu0
    %v560 = vadd.f32 %v373, %v559
    %561 = vdwg.mxu0
    %562 = vmatprep.subr.bf16.mxu0 0
    %563 = vmatpush1.bf16.msra.mxu0 %v463
    %564 = vmatprep.subr.bf16.mxu0 0
    %565 = vmatpush1.bf16.msra.mxu0 %v466
    %566 = vmatprep.subr.bf16.mxu0 0
    %567 = vmatpush1.bf16.msra.mxu0 %v469
    %568 = vmatprep.subr.bf16.mxu0 0
    %569 = vmatpush1.bf16.msra.mxu0 %v472
    %570 = vmatprep.subr.bf16.mxu0 0
    %571 = vmatpush1.bf16.msra.mxu0 %v475
    %572 = vmatprep.subr.bf16.mxu0 0
    %573 = vmatpush1.bf16.msra.mxu0 %v478
    %574 = vmatprep.subr.bf16.mxu0 0
    %575 = vmatpush1.bf16.msra.mxu0 %v481
    %576 = vmatprep.subr.bf16.mxu0 0
    %577 = vmatpush1.bf16.msra.mxu0 %v484
    %578 = vmatprep.subr.bf16.mxu0 0
    %579 = vmatpush1.bf16.msra.mxu0 0
    %580 = vmatprep.subr.bf16.mxu0 0
    %581 = vmatpush1.bf16.msra.mxu0 0
    %582 = vmatprep.subr.bf16.mxu0 0
    %583 = vmatpush1.bf16.msra.mxu0 0
    %584 = vmatprep.subr.bf16.mxu0 0
    %585 = vmatpush1.bf16.msra.mxu0 0
    %586 = vmatprep.subr.bf16.mxu0 0
    %587 = vmatpush1.bf16.msra.mxu0 0
    %588 = vmatprep.subr.bf16.mxu0 0
    %589 = vmatpush1.bf16.msra.mxu0 0
    %590 = vmatprep.subr.bf16.mxu0 0
    %591 = vmatpush1.bf16.msra.mxu0 0
    %592 = vmatprep.subr.bf16.mxu0 0
    %593 = vmatpush1.bf16.msra.mxu0 0
    %594 = vmatprep.mubr.bf16.mxu0 0
    %595 = vmatmul.mubr.bf16.gmra.mrb[0].mxu0 %v330
    %v596 = vpop.f32.mrb[0].mxu0
    %v597 = vadd.f32 %v377, %v596
    %v598 = vpop.f32.mrb[0].mxu0
    %v599 = vpop.f32.mrb[0].mxu0
    %v600 = vadd.f32 %v377, %v599
    %v601 = vpop.f32.mrb[0].mxu0
    %602 = vmatprep.mubr.bf16.mxu0 0
    %603 = vmatmul.mubr.bf16.gmra.mrb[0].mxu0 %v331
    %v604 = vpop.f32.mrb[0].mxu0
    %v605 = vadd.f32 %v377, %v604
    %v606 = vpop.f32.mrb[0].mxu0
    %v607 = vpop.f32.mrb[0].mxu0
    %v608 = vadd.f32 %v377, %v607
    %v609 = vpop.f32.mrb[0].mxu0
    %610 = vdwg.mxu0
    %v611 = vpack.c.bf16 %v548, %v544
    %v612 = vpack.c.bf16 %v558, %v554
    %v613 = vpack.c.bf16 %v550, %v546
    %v614 = vpack.c.bf16 %v560, %v556
    %v615 = vpack.c.bf16 %v600, %v597
    %v616 = vpack.c.bf16 %v608, %v605
    %vm617 = vcmask 261120
    %v619 = vsel %vm617, %v611, 0
    %v622 = vsel %vm617, %v612, 0
    %v625 = vsel %vm617, %v613, 0
    %v628 = vsel %vm617, %v614, 0
    %630 = vmatprep.subr.bf16.mxu0 0
    %631 = vmatpush1.bf16.xpose.msra.mxu0 %v625
    %632 = vmatprep.subr.bf16.mxu0 0
    %633 = vmatpush1.bf16.xpose.msra.mxu0 %v628
    %634 = vmatprep.subr.bf16.mxu0 0
    %635 = vmatpush1.bf16.xpose.msra.mxu0 0
    %636 = vmatprep.subr.bf16.mxu0 0
    %637 = vmatpush1.bf16.xpose.msra.mxu0 0
    %638 = vmatprep.subr.bf16.mxu0 0
    %639 = vmatpush1.bf16.xpose.msra.mxu0 0
    %640 = vmatprep.subr.bf16.mxu0 0
    %641 = vmatpush1.bf16.xpose.msra.mxu0 0
    %642 = vmatprep.subr.bf16.mxu0 0
    %643 = vmatpush1.bf16.xpose.msra.mxu0 0
    %644 = vmatprep.subr.bf16.mxu0 0
    %645 = vmatpush1.bf16.xpose.msra.mxu0 0
    %646 = vmatprep.subr.bf16.mxu0 0
    %647 = vmatpush1.bf16.xpose.msra.mxu0 0
    %648 = vmatprep.subr.bf16.mxu0 0
    %649 = vmatpush1.bf16.xpose.msra.mxu0 0
    %650 = vmatprep.subr.bf16.mxu0 0
    %651 = vmatpush1.bf16.xpose.msra.mxu0 0
    %652 = vmatprep.subr.bf16.mxu0 0
    %653 = vmatpush1.bf16.xpose.msra.mxu0 0
    %654 = vmatprep.subr.bf16.mxu0 0
    %655 = vmatpush1.bf16.xpose.msra.mxu0 0
    %656 = vmatprep.subr.bf16.mxu0 0
    %657 = vmatpush1.bf16.xpose.msra.mxu0 0
    %658 = vmatprep.subr.bf16.mxu0 0
    %659 = vmatpush1.bf16.xpose.msra.mxu0 0
    %660 = vmatprep.subr.bf16.mxu0 0
    %661 = vmatpush1.bf16.xpose.msra.mxu0 0
    %662 = vmatprep.mubr.bf16.mxu0 0
    %663 = vmatmul.mubr.bf16.gmra.mrb[0].mxu0 %v619
    %v664 = vpop.f32.mrb[0].mxu0
    %v665 = vadd.f32 %v178, %v664
    %v666 = vpop.f32.mrb[0].mxu0
    %v667 = vpop.f32.mrb[0].mxu0
    %v668 = vadd.f32 %v179, %v667
    %v669 = vpop.f32.mrb[0].mxu0
    %670 = vmatprep.mubr.bf16.mxu0 0
    %671 = vmatmul.mubr.bf16.gmra.mrb[0].mxu0 %v622
    %v672 = vpop.f32.mrb[0].mxu0
    %v673 = vadd.f32 %v180, %v672
    %v674 = vpop.f32.mrb[0].mxu0
    %v675 = vpop.f32.mrb[0].mxu0
    %v676 = vadd.f32 %v181, %v675
    %v677 = vpop.f32.mrb[0].mxu0
    %678 = vdwg.mxu0
    %v679 = vsel %vm617, %v665, -inf
    %680 = vmax.xlane.f32.xlu0 %v679
    %v681 = vpop.xlane.xlu0 %680
    %v682 = vsel %vm617, %v668, -inf
    %683 = vmax.xlane.f32.xlu0 %v682
    %v684 = vpop.xlane.xlu0 %683
    %v685 = vsel %vm617, %v673, -inf
    %686 = vmax.xlane.f32.xlu0 %v685
    %v687 = vpop.xlane.xlu0 %686
    %v688 = vsel %vm617, %v676, -inf
    %689 = vmax.xlane.f32.xlu0 %v688
    %v690 = vpop.xlane.xlu0 %689
    %v691 = vsub.f32 %v665, %v681
    %v692 = vsub.f32 %v668, %v684
    %v693 = vsub.f32 %v673, %v687
    %v694 = vsub.f32 %v676, %v690
    %v695 = vmul.f32 %v691, 1.442695
    %v696 = vpow.pop %v695
    %v697 = vmul.f32 %v692, 1.442695
    %v698 = vpow.pop %v697
    %v699 = vmul.f32 %v693, 1.442695
    %v700 = vpow.pop %v699
    %v701 = vmul.f32 %v694, 1.442695
    %v702 = vpow.pop %v701
    %v703 = vsel %vm617, %v696, 0.0
    %704 = vadd.xlane.f32.xlu0 %v703
    %v705 = vpop.xlane.xlu0 %704
    %v706 = vsel %vm617, %v698, 0.0
    %707 = vadd.xlane.f32.xlu0 %v706
    %v708 = vpop.xlane.xlu0 %707
    %v709 = vsel %vm617, %v700, 0.0
    %710 = vadd.xlane.f32.xlu0 %v709
    %v711 = vpop.xlane.xlu0 %710
    %v712 = vsel %vm617, %v702, 0.0
    %713 = vadd.xlane.f32.xlu0 %v712
    %v714 = vpop.xlane.xlu0 %713
    %v715 = vpack.c.bf16 %v698, %v696
    %v716 = vpack.c.bf16 %v702, %v700
    %v718 = vsel %vm617, %v715, 0
    %v721 = vsel %vm617, %v716, 0
    %723 = vmatprep.subr.bf16.mxu0 0
    %724 = vmatpush1.bf16.msra.mxu0 %v615
    %725 = vmatprep.subr.bf16.mxu0 0
    %726 = vmatpush1.bf16.msra.mxu0 %v616
    %727 = vmatprep.subr.bf16.mxu0 0
    %728 = vmatpush1.bf16.msra.mxu0 0
    %729 = vmatprep.subr.bf16.mxu0 0
    %730 = vmatpush1.bf16.msra.mxu0 0
    %731 = vmatprep.subr.bf16.mxu0 0
    %732 = vmatpush1.bf16.msra.mxu0 0
    %733 = vmatprep.subr.bf16.mxu0 0
    %734 = vmatpush1.bf16.msra.mxu0 0
    %735 = vmatprep.subr.bf16.mxu0 0
    %736 = vmatpush1.bf16.msra.mxu0 0
    %737 = vmatprep.subr.bf16.mxu0 0
    %738 = vmatpush1.bf16.msra.mxu0 0
    %739 = vmatprep.subr.bf16.mxu0 0
    %740 = vmatpush1.bf16.msra.mxu0 0
    %741 = vmatprep.subr.bf16.mxu0 0
    %742 = vmatpush1.bf16.msra.mxu0 0
    %743 = vmatprep.subr.bf16.mxu0 0
    %744 = vmatpush1.bf16.msra.mxu0 0
    %745 = vmatprep.subr.bf16.mxu0 0
    %746 = vmatpush1.bf16.msra.mxu0 0
    %747 = vmatprep.subr.bf16.mxu0 0
    %748 = vmatpush1.bf16.msra.mxu0 0
    %749 = vmatprep.subr.bf16.mxu0 0
    %750 = vmatpush1.bf16.msra.mxu0 0
    %751 = vmatprep.subr.bf16.mxu0 0
    %752 = vmatpush1.bf16.msra.mxu0 0
    %753 = vmatprep.subr.bf16.mxu0 0
    %754 = vmatpush1.bf16.msra.mxu0 0
    %755 = vmatprep.mubr.bf16.mxu0 0
    %756 = vmatmul.mubr.bf16.gmra.mrb[0].mxu0 %v718
    %v757 = vpop.f32.mrb[0].mxu0
    %v758 = vadd.f32 0.0, %v757
    %v759 = vpop.f32.mrb[0].mxu0
    %v760 = vpop.f32.mrb[0].mxu0
    %v761 = vadd.f32 0.0, %v760
    %v762 = vpop.f32.mrb[0].mxu0
    %763 = vmatprep.mubr.bf16.mxu0 0
    %764 = vmatmul.mubr.bf16.gmra.mrb[0].mxu0 %v721
    %v765 = vpop.f32.mrb[0].mxu0
    %v766 = vadd.f32 0.0, %v765
    %v767 = vpop.f32.mrb[0].mxu0
    %v768 = vpop.f32.mrb[0].mxu0
    %v769 = vadd.f32 0.0, %v768
    %v770 = vpop.f32.mrb[0].mxu0
    %771 = vdwg.mxu0
    %v772 = vrcp.pop %v705
    %v773 = vrcp.pop %v708
    %v774 = vrcp.pop %v711
    %v775 = vrcp.pop %v714
    %v776 = vmul.f32 %v758, %v772
    %v777 = vmul.f32 %v761, %v773
    %v778 = vmul.f32 %v766, %v774
    %v779 = vmul.f32 %v769, %v775
    %782 = vrot.lane.b32.xlu0 %v611, 96
    %v783 = vpop.permute.xlu0 %782
    %784 = vrot.lane.b32.xlu0 %v612, 96
    %v785 = vpop.permute.xlu0 %784
    %788 = vrot.lane.b32.xlu0 %v613, 96
    %v789 = vpop.permute.xlu0 %788
    %790 = vrot.lane.b32.xlu0 %v614, 96
    %v791 = vpop.permute.xlu0 %790
    %v793 = vsel %vm617, %v783, 0
    %v796 = vsel %vm617, %v785, 0
    %v799 = vsel %vm617, %v789, 0
    %v802 = vsel %vm617, %v791, 0
    %804 = vmatprep.subr.bf16.mxu0 0
    %805 = vmatpush1.bf16.xpose.msra.mxu0 %v799
    %806 = vmatprep.subr.bf16.mxu0 0
    %807 = vmatpush1.bf16.xpose.msra.mxu0 %v802
    %808 = vmatprep.subr.bf16.mxu0 0
    %809 = vmatpush1.bf16.xpose.msra.mxu0 0
    %810 = vmatprep.subr.bf16.mxu0 0
    %811 = vmatpush1.bf16.xpose.msra.mxu0 0
    %812 = vmatprep.subr.bf16.mxu0 0
    %813 = vmatpush1.bf16.xpose.msra.mxu0 0
    %814 = vmatprep.subr.bf16.mxu0 0
    %815 = vmatpush1.bf16.xpose.msra.mxu0 0
    %816 = vmatprep.subr.bf16.mxu0 0
    %817 = vmatpush1.bf16.xpose.msra.mxu0 0
    %818 = vmatprep.subr.bf16.mxu0 0
    %819 = vmatpush1.bf16.xpose.msra.mxu0 0
    %820 = vmatprep.subr.bf16.mxu0 0
    %821 = vmatpush1.bf16.xpose.msra.mxu0 0
    %822 = vmatprep.subr.bf16.mxu0 0
    %823 = vmatpush1.bf16.xpose.msra.mxu0 0
    %824 = vmatprep.subr.bf16.mxu0 0
    %825 = vmatpush1.bf16.xpose.msra.mxu0 0
    %826 = vmatprep.subr.bf16.mxu0 0
    %827 = vmatpush1.bf16.xpose.msra.mxu0 0
    %828 = vmatprep.subr.bf16.mxu0 0
    %829 = vmatpush1.bf16.xpose.msra.mxu0 0
    %830 = vmatprep.subr.bf16.mxu0 0
    %831 = vmatpush1.bf16.xpose.msra.mxu0 0
    %832 = vmatprep.subr.bf16.mxu0 0
    %833 = vmatpush1.bf16.xpose.msra.mxu0 0
    %834 = vmatprep.subr.bf16.mxu0 0
    %835 = vmatpush1.bf16.xpose.msra.mxu0 0
    %836 = vmatprep.mubr.bf16.mxu0 0
    %837 = vmatmul.mubr.bf16.gmra.mrb[0].mxu0 %v793
    %v838 = vpop.f32.mrb[0].mxu0
    %v839 = vadd.f32 %v178, %v838
    %v840 = vpop.f32.mrb[0].mxu0
    %v841 = vpop.f32.mrb[0].mxu0
    %v842 = vadd.f32 %v179, %v841
    %v843 = vpop.f32.mrb[0].mxu0
    %844 = vmatprep.mubr.bf16.mxu0 0
    %845 = vmatmul.mubr.bf16.gmra.mrb[0].mxu0 %v796
    %v846 = vpop.f32.mrb[0].mxu0
    %v847 = vadd.f32 %v180, %v846
    %v848 = vpop.f32.mrb[0].mxu0
    %v849 = vpop.f32.mrb[0].mxu0
    %v850 = vadd.f32 %v181, %v849
    %v851 = vpop.f32.mrb[0].mxu0
    %852 = vdwg.mxu0
    %v853 = vsel %vm617, %v839, -inf
    %854 = vmax.xlane.f32.xlu0 %v853
    %v855 = vpop.xlane.xlu0 %854
    %v856 = vsel %vm617, %v842, -inf
    %857 = vmax.xlane.f32.xlu0 %v856
    %v858 = vpop.xlane.xlu0 %857
    %v859 = vsel %vm617, %v847, -inf
    %860 = vmax.xlane.f32.xlu0 %v859
    %v861 = vpop.xlane.xlu0 %860
    %v862 = vsel %vm617, %v850, -inf
    %863 = vmax.xlane.f32.xlu0 %v862
    %v864 = vpop.xlane.xlu0 %863
    %v865 = vsub.f32 %v839, %v855
    %v866 = vsub.f32 %v842, %v858
    %v867 = vsub.f32 %v847, %v861
    %v868 = vsub.f32 %v850, %v864
    %v869 = vmul.f32 %v865, 1.442695
    %v870 = vpow.pop %v869
    %v871 = vmul.f32 %v866, 1.442695
    %v872 = vpow.pop %v871
    %v873 = vmul.f32 %v867, 1.442695
    %v874 = vpow.pop %v873
    %v875 = vmul.f32 %v868, 1.442695
    %v876 = vpow.pop %v875
    %v877 = vsel %vm617, %v870, 0.0
    %878 = vadd.xlane.f32.xlu0 %v877
    %v879 = vpop.xlane.xlu0 %878
    %v880 = vsel %vm617, %v872, 0.0
    %881 = vadd.xlane.f32.xlu0 %v880
    %v882 = vpop.xlane.xlu0 %881
    %v883 = vsel %vm617, %v874, 0.0
    %884 = vadd.xlane.f32.xlu0 %v883
    %v885 = vpop.xlane.xlu0 %884
    %v886 = vsel %vm617, %v876, 0.0
    %887 = vadd.xlane.f32.xlu0 %v886
    %v888 = vpop.xlane.xlu0 %887
    %v889 = vpack.c.bf16 %v872, %v870
    %v890 = vpack.c.bf16 %v876, %v874
    %893 = vrot.lane.b32.xlu0 %v615, 96
    %v894 = vpop.permute.xlu0 %893
    %895 = vrot.lane.b32.xlu0 %v616, 96
    %v896 = vpop.permute.xlu0 %895
    %v900 = vsel %vm617, %v889, 0
    %v903 = vsel %vm617, %v890, 0
    %905 = vmatprep.subr.bf16.mxu0 0
    %906 = vmatpush1.bf16.msra.mxu0 %v894
    %907 = vmatprep.subr.bf16.mxu0 0
    %908 = vmatpush1.bf16.msra.mxu0 %v896
    %909 = vmatprep.subr.bf16.mxu0 0
    %910 = vmatpush1.bf16.msra.mxu0 0
    %911 = vmatprep.subr.bf16.mxu0 0
    %912 = vmatpush1.bf16.msra.mxu0 0
    %913 = vmatprep.subr.bf16.mxu0 0
    %914 = vmatpush1.bf16.msra.mxu0 0
    %915 = vmatprep.subr.bf16.mxu0 0
    %916 = vmatpush1.bf16.msra.mxu0 0
    %917 = vmatprep.subr.bf16.mxu0 0
    %918 = vmatpush1.bf16.msra.mxu0 0
    %919 = vmatprep.subr.bf16.mxu0 0
    %920 = vmatpush1.bf16.msra.mxu0 0
    %921 = vmatprep.subr.bf16.mxu0 0
    %922 = vmatpush1.bf16.msra.mxu0 0
    %923 = vmatprep.subr.bf16.mxu0 0
    %924 = vmatpush1.bf16.msra.mxu0 0
    %925 = vmatprep.subr.bf16.mxu0 0
    %926 = vmatpush1.bf16.msra.mxu0 0
    %927 = vmatprep.subr.bf16.mxu0 0
    %928 = vmatpush1.bf16.msra.mxu0 0
    %929 = vmatprep.subr.bf16.mxu0 0
    %930 = vmatpush1.bf16.msra.mxu0 0
    %931 = vmatprep.subr.bf16.mxu0 0
    %932 = vmatpush1.bf16.msra.mxu0 0
    %933 = vmatprep.subr.bf16.mxu0 0
    %934 = vmatpush1.bf16.msra.mxu0 0
    %935 = vmatprep.subr.bf16.mxu0 0
    %936 = vmatpush1.bf16.msra.mxu0 0
    %937 = vmatprep.mubr.bf16.mxu0 0
    %938 = vmatmul.mubr.bf16.gmra.mrb[0].mxu0 %v900
    %v939 = vpop.f32.mrb[0].mxu0
    %v940 = vadd.f32 0.0, %v939
    %v941 = vpop.f32.mrb[0].mxu0
    %v942 = vpop.f32.mrb[0].mxu0
    %v943 = vadd.f32 0.0, %v942
    %v944 = vpop.f32.mrb[0].mxu0
    %945 = vmatprep.mubr.bf16.mxu0 0
    %946 = vmatmul.mubr.bf16.gmra.mrb[0].mxu0 %v903
    %v947 = vpop.f32.mrb[0].mxu0
    %v948 = vadd.f32 0.0, %v947
    %v949 = vpop.f32.mrb[0].mxu0
    %v950 = vpop.f32.mrb[0].mxu0
    %v951 = vadd.f32 0.0, %v950
    %v952 = vpop.f32.mrb[0].mxu0
    %953 = vdwg.mxu0
    %v954 = vrcp.pop %v879
    %v955 = vrcp.pop %v882
    %v956 = vrcp.pop %v885
    %v957 = vrcp.pop %v888
    %v958 = vmul.f32 %v940, %v954
    %v959 = vmul.f32 %v943, %v955
    %v960 = vmul.f32 %v948, %v956
    %v961 = vmul.f32 %v951, %v957
    %962 = vrot.lane.b32.xlu0 %v611, 64
    %v963 = vpop.permute.xlu0 %962
    %964 = vrot.lane.b32.xlu0 %v612, 64
    %v965 = vpop.permute.xlu0 %964
    %966 = vrot.lane.b32.xlu0 %v613, 64
    %v967 = vpop.permute.xlu0 %966
    %968 = vrot.lane.b32.xlu0 %v614, 64
    %v969 = vpop.permute.xlu0 %968
    %v971 = vsel %vm617, %v963, 0
    %v974 = vsel %vm617, %v965, 0
    %v977 = vsel %vm617, %v967, 0
    %v980 = vsel %vm617, %v969, 0
    %982 = vmatprep.subr.bf16.mxu0 0
    %983 = vmatpush1.bf16.xpose.msra.mxu0 %v977
    %984 = vmatprep.subr.bf16.mxu0 0
    %985 = vmatpush1.bf16.xpose.msra.mxu0 %v980
    %986 = vmatprep.subr.bf16.mxu0 0
    %987 = vmatpush1.bf16.xpose.msra.mxu0 0
    %988 = vmatprep.subr.bf16.mxu0 0
    %989 = vmatpush1.bf16.xpose.msra.mxu0 0
    %990 = vmatprep.subr.bf16.mxu0 0
    %991 = vmatpush1.bf16.xpose.msra.mxu0 0
    %992 = vmatprep.subr.bf16.mxu0 0
    %993 = vmatpush1.bf16.xpose.msra.mxu0 0
    %994 = vmatprep.subr.bf16.mxu0 0
    %995 = vmatpush1.bf16.xpose.msra.mxu0 0
    %996 = vmatprep.subr.bf16.mxu0 0
    %997 = vmatpush1.bf16.xpose.msra.mxu0 0
    %998 = vmatprep.subr.bf16.mxu0 0
    %999 = vmatpush1.bf16.xpose.msra.mxu0 0
    %1000 = vmatprep.subr.bf16.mxu0 0
    %1001 = vmatpush1.bf16.xpose.msra.mxu0 0
    %1002 = vmatprep.subr.bf16.mxu0 0
    %1003 = vmatpush1.bf16.xpose.msra.mxu0 0
    %1004 = vmatprep.subr.bf16.mxu0 0
    %1005 = vmatpush1.bf16.xpose.msra.mxu0 0
    %1006 = vmatprep.subr.bf16.mxu0 0
    %1007 = vmatpush1.bf16.xpose.msra.mxu0 0
    %1008 = vmatprep.subr.bf16.mxu0 0
    %1009 = vmatpush1.bf16.xpose.msra.mxu0 0
    %1010 = vmatprep.subr.bf16.mxu0 0
    %1011 = vmatpush1.bf16.xpose.msra.mxu0 0
    %1012 = vmatprep.subr.bf16.mxu0 0
    %1013 = vmatpush1.bf16.xpose.msra.mxu0 0
    %1014 = vmatprep.mubr.bf16.mxu0 0
    %1015 = vmatmul.mubr.bf16.gmra.mrb[0].mxu0 %v971
    %v1016 = vpop.f32.mrb[0].mxu0
    %v1017 = vadd.f32 %v178, %v1016
    %v1018 = vpop.f32.mrb[0].mxu0
    %v1019 = vpop.f32.mrb[0].mxu0
    %v1020 = vadd.f32 %v179, %v1019
    %v1021 = vpop.f32.mrb[0].mxu0
    %1022 = vmatprep.mubr.bf16.mxu0 0
    %1023 = vmatmul.mubr.bf16.gmra.mrb[0].mxu0 %v974
    %v1024 = vpop.f32.mrb[0].mxu0
    %v1025 = vadd.f32 %v180, %v1024
    %v1026 = vpop.f32.mrb[0].mxu0
    %v1027 = vpop.f32.mrb[0].mxu0
    %v1028 = vadd.f32 %v181, %v1027
    %v1029 = vpop.f32.mrb[0].mxu0
    %1030 = vdwg.mxu0
    %v1031 = vsel %vm617, %v1017, -inf
    %1032 = vmax.xlane.f32.xlu0 %v1031
    %v1033 = vpop.xlane.xlu0 %1032
    %v1034 = vsel %vm617, %v1020, -inf
    %1035 = vmax.xlane.f32.xlu0 %v1034
    %v1036 = vpop.xlane.xlu0 %1035
    %v1037 = vsel %vm617, %v1025, -inf
    %1038 = vmax.xlane.f32.xlu0 %v1037
    %v1039 = vpop.xlane.xlu0 %1038
    %v1040 = vsel %vm617, %v1028, -inf
    %1041 = vmax.xlane.f32.xlu0 %v1040
    %v1042 = vpop.xlane.xlu0 %1041
    %v1043 = vsub.f32 %v1017, %v1033
    %v1044 = vsub.f32 %v1020, %v1036
    %v1045 = vsub.f32 %v1025, %v1039
    %v1046 = vsub.f32 %v1028, %v1042
    %v1047 = vmul.f32 %v1043, 1.442695
    %v1048 = vpow.pop %v1047
    %v1049 = vmul.f32 %v1044, 1.442695
    %v1050 = vpow.pop %v1049
    %v1051 = vmul.f32 %v1045, 1.442695
    %v1052 = vpow.pop %v1051
    %v1053 = vmul.f32 %v1046, 1.442695
    %v1054 = vpow.pop %v1053
    %v1055 = vsel %vm617, %v1048, 0.0
    %1056 = vadd.xlane.f32.xlu0 %v1055
    %v1057 = vpop.xlane.xlu0 %1056
    %v1058 = vsel %vm617, %v1050, 0.0
    %1059 = vadd.xlane.f32.xlu0 %v1058
    %v1060 = vpop.xlane.xlu0 %1059
    %v1061 = vsel %vm617, %v1052, 0.0
    %1062 = vadd.xlane.f32.xlu0 %v1061
    %v1063 = vpop.xlane.xlu0 %1062
    %v1064 = vsel %vm617, %v1054, 0.0
    %1065 = vadd.xlane.f32.xlu0 %v1064
    %v1066 = vpop.xlane.xlu0 %1065
    %v1067 = vpack.c.bf16 %v1050, %v1048
    %v1068 = vpack.c.bf16 %v1054, %v1052
    %1069 = vrot.lane.b32.xlu0 %v615, 64
    %v1070 = vpop.permute.xlu0 %1069
    %1071 = vrot.lane.b32.xlu0 %v616, 64
    %v1072 = vpop.permute.xlu0 %1071
    %v1076 = vsel %vm617, %v1067, 0
    %v1079 = vsel %vm617, %v1068, 0
    %1081 = vmatprep.subr.bf16.mxu0 0
    %1082 = vmatpush1.bf16.msra.mxu0 %v1070
    %1083 = vmatprep.subr.bf16.mxu0 0
    %1084 = vmatpush1.bf16.msra.mxu0 %v1072
    %1085 = vmatprep.subr.bf16.mxu0 0
    %1086 = vmatpush1.bf16.msra.mxu0 0
    %1087 = vmatprep.subr.bf16.mxu0 0
    %1088 = vmatpush1.bf16.msra.mxu0 0
    %1089 = vmatprep.subr.bf16.mxu0 0
    %1090 = vmatpush1.bf16.msra.mxu0 0
    %1091 = vmatprep.subr.bf16.mxu0 0
    %1092 = vmatpush1.bf16.msra.mxu0 0
    %1093 = vmatprep.subr.bf16.mxu0 0
    %1094 = vmatpush1.bf16.msra.mxu0 0
    %1095 = vmatprep.subr.bf16.mxu0 0
    %1096 = vmatpush1.bf16.msra.mxu0 0
    %1097 = vmatprep.subr.bf16.mxu0 0
    %1098 = vmatpush1.bf16.msra.mxu0 0
    %1099 = vmatprep.subr.bf16.mxu0 0
    %1100 = vmatpush1.bf16.msra.mxu0 0
    %1101 = vmatprep.subr.bf16.mxu0 0
    %1102 = vmatpush1.bf16.msra.mxu0 0
    %1103 = vmatprep.subr.bf16.mxu0 0
    %1104 = vmatpush1.bf16.msra.mxu0 0
    %1105 = vmatprep.subr.bf16.mxu0 0
    %1106 = vmatpush1.bf16.msra.mxu0 0
    %1107 = vmatprep.subr.bf16.mxu0 0
    %1108 = vmatpush1.bf16.msra.mxu0 0
    %1109 = vmatprep.subr.bf16.mxu0 0
    %1110 = vmatpush1.bf16.msra.mxu0 0
    %1111 = vmatprep.subr.bf16.mxu0 0
    %1112 = vmatpush1.bf16.msra.mxu0 0
    %1113 = vmatprep.mubr.bf16.mxu0 0
    %1114 = vmatmul.mubr.bf16.gmra.mrb[0].mxu0 %v1076
    %v1115 = vpop.f32.mrb[0].mxu0
    %v1116 = vadd.f32 0.0, %v1115
    %v1117 = vpop.f32.mrb[0].mxu0
    %v1118 = vpop.f32.mrb[0].mxu0
    %v1119 = vadd.f32 0.0, %v1118
    %v1120 = vpop.f32.mrb[0].mxu0
    %1121 = vmatprep.mubr.bf16.mxu0 0
    %1122 = vmatmul.mubr.bf16.gmra.mrb[0].mxu0 %v1079
    %v1123 = vpop.f32.mrb[0].mxu0
    %v1124 = vadd.f32 0.0, %v1123
    %v1125 = vpop.f32.mrb[0].mxu0
    %v1126 = vpop.f32.mrb[0].mxu0
    %v1127 = vadd.f32 0.0, %v1126
    %v1128 = vpop.f32.mrb[0].mxu0
    %1129 = vdwg.mxu0
    %v1130 = vrcp.pop %v1057
    %v1131 = vrcp.pop %v1060
    %v1132 = vrcp.pop %v1063
    %v1133 = vrcp.pop %v1066
    %v1134 = vmul.f32 %v1116, %v1130
    %v1135 = vmul.f32 %v1119, %v1131
    %v1136 = vmul.f32 %v1124, %v1132
    %v1137 = vmul.f32 %v1127, %v1133
    %1138 = vrot.lane.b32.xlu0 %v611, 32
    %v1139 = vpop.permute.xlu0 %1138
    %1140 = vrot.lane.b32.xlu0 %v612, 32
    %v1141 = vpop.permute.xlu0 %1140
    %1142 = vrot.lane.b32.xlu0 %v613, 32
    %v1143 = vpop.permute.xlu0 %1142
    %1144 = vrot.lane.b32.xlu0 %v614, 32
    %v1145 = vpop.permute.xlu0 %1144
    %v1147 = vsel %vm617, %v1139, 0
    %v1150 = vsel %vm617, %v1141, 0
    %v1153 = vsel %vm617, %v1143, 0
    %v1156 = vsel %vm617, %v1145, 0
    %1158 = vmatprep.subr.bf16.mxu0 0
    %1159 = vmatpush1.bf16.xpose.msra.mxu0 %v1153
    %1160 = vmatprep.subr.bf16.mxu0 0
    %1161 = vmatpush1.bf16.xpose.msra.mxu0 %v1156
    %1162 = vmatprep.subr.bf16.mxu0 0
    %1163 = vmatpush1.bf16.xpose.msra.mxu0 0
    %1164 = vmatprep.subr.bf16.mxu0 0
    %1165 = vmatpush1.bf16.xpose.msra.mxu0 0
    %1166 = vmatprep.subr.bf16.mxu0 0
    %1167 = vmatpush1.bf16.xpose.msra.mxu0 0
    %1168 = vmatprep.subr.bf16.mxu0 0
    %1169 = vmatpush1.bf16.xpose.msra.mxu0 0
    %1170 = vmatprep.subr.bf16.mxu0 0
    %1171 = vmatpush1.bf16.xpose.msra.mxu0 0
    %1172 = vmatprep.subr.bf16.mxu0 0
    %1173 = vmatpush1.bf16.xpose.msra.mxu0 0
    %1174 = vmatprep.subr.bf16.mxu0 0
    %1175 = vmatpush1.bf16.xpose.msra.mxu0 0
    %1176 = vmatprep.subr.bf16.mxu0 0
    %1177 = vmatpush1.bf16.xpose.msra.mxu0 0
    %1178 = vmatprep.subr.bf16.mxu0 0
    %1179 = vmatpush1.bf16.xpose.msra.mxu0 0
    %1180 = vmatprep.subr.bf16.mxu0 0
    %1181 = vmatpush1.bf16.xpose.msra.mxu0 0
    %1182 = vmatprep.subr.bf16.mxu0 0
    %1183 = vmatpush1.bf16.xpose.msra.mxu0 0
    %1184 = vmatprep.subr.bf16.mxu0 0
    %1185 = vmatpush1.bf16.xpose.msra.mxu0 0
    %1186 = vmatprep.subr.bf16.mxu0 0
    %1187 = vmatpush1.bf16.xpose.msra.mxu0 0
    %1188 = vmatprep.subr.bf16.mxu0 0
    %1189 = vmatpush1.bf16.xpose.msra.mxu0 0
    %1190 = vmatprep.mubr.bf16.mxu0 0
    %1191 = vmatmul.mubr.bf16.gmra.mrb[0].mxu0 %v1147
    %v1192 = vpop.f32.mrb[0].mxu0
    %v1193 = vadd.f32 %v178, %v1192
    %v1194 = vpop.f32.mrb[0].mxu0
    %v1195 = vpop.f32.mrb[0].mxu0
    %v1196 = vadd.f32 %v179, %v1195
    %v1197 = vpop.f32.mrb[0].mxu0
    %1198 = vmatprep.mubr.bf16.mxu0 0
    %1199 = vmatmul.mubr.bf16.gmra.mrb[0].mxu0 %v1150
    %v1200 = vpop.f32.mrb[0].mxu0
    %v1201 = vadd.f32 %v180, %v1200
    %v1202 = vpop.f32.mrb[0].mxu0
    %v1203 = vpop.f32.mrb[0].mxu0
    %v1204 = vadd.f32 %v181, %v1203
    %v1205 = vpop.f32.mrb[0].mxu0
    %1206 = vdwg.mxu0
    %v1207 = vsel %vm617, %v1193, -inf
    %1208 = vmax.xlane.f32.xlu0 %v1207
    %v1209 = vpop.xlane.xlu0 %1208
    %v1210 = vsel %vm617, %v1196, -inf
    %1211 = vmax.xlane.f32.xlu0 %v1210
    %v1212 = vpop.xlane.xlu0 %1211
    %v1213 = vsel %vm617, %v1201, -inf
    %1214 = vmax.xlane.f32.xlu0 %v1213
    %v1215 = vpop.xlane.xlu0 %1214
    %v1216 = vsel %vm617, %v1204, -inf
    %1217 = vmax.xlane.f32.xlu0 %v1216
    %v1218 = vpop.xlane.xlu0 %1217
    %v1219 = vsub.f32 %v1193, %v1209
    %v1220 = vsub.f32 %v1196, %v1212
    %v1221 = vsub.f32 %v1201, %v1215
    %v1222 = vsub.f32 %v1204, %v1218
    %v1223 = vmul.f32 %v1219, 1.442695
    %v1224 = vpow.pop %v1223
    %v1225 = vmul.f32 %v1220, 1.442695
    %v1226 = vpow.pop %v1225
    %v1227 = vmul.f32 %v1221, 1.442695
    %v1228 = vpow.pop %v1227
    %v1229 = vmul.f32 %v1222, 1.442695
    %v1230 = vpow.pop %v1229
    %v1231 = vsel %vm617, %v1224, 0.0
    %1232 = vadd.xlane.f32.xlu0 %v1231
    %v1233 = vpop.xlane.xlu0 %1232
    %v1234 = vsel %vm617, %v1226, 0.0
    %1235 = vadd.xlane.f32.xlu0 %v1234
    %v1236 = vpop.xlane.xlu0 %1235
    %v1237 = vsel %vm617, %v1228, 0.0
    %1238 = vadd.xlane.f32.xlu0 %v1237
    %v1239 = vpop.xlane.xlu0 %1238
    %v1240 = vsel %vm617, %v1230, 0.0
    %1241 = vadd.xlane.f32.xlu0 %v1240
    %v1242 = vpop.xlane.xlu0 %1241
    %v1243 = vpack.c.bf16 %v1226, %v1224
    %v1244 = vpack.c.bf16 %v1230, %v1228
    %1245 = vrot.lane.b32.xlu0 %v615, 32
    %v1246 = vpop.permute.xlu0 %1245
    %1247 = vrot.lane.b32.xlu0 %v616, 32
    %v1248 = vpop.permute.xlu0 %1247
    %v1252 = vsel %vm617, %v1243, 0
    %v1255 = vsel %vm617, %v1244, 0
    %1257 = vmatprep.subr.bf16.mxu0 0
    %1258 = vmatpush1.bf16.msra.mxu0 %v1246
    %1259 = vmatprep.subr.bf16.mxu0 0
    %1260 = vmatpush1.bf16.msra.mxu0 %v1248
    %1261 = vmatprep.subr.bf16.mxu0 0
    %1262 = vmatpush1.bf16.msra.mxu0 0
    %1263 = vmatprep.subr.bf16.mxu0 0
    %1264 = vmatpush1.bf16.msra.mxu0 0
    %1265 = vmatprep.subr.bf16.mxu0 0
    %1266 = vmatpush1.bf16.msra.mxu0 0
    %1267 = vmatprep.subr.bf16.mxu0 0
    %1268 = vmatpush1.bf16.msra.mxu0 0
    %1269 = vmatprep.subr.bf16.mxu0 0
    %1270 = vmatpush1.bf16.msra.mxu0 0
    %1271 = vmatprep.subr.bf16.mxu0 0
    %1272 = vmatpush1.bf16.msra.mxu0 0
    %1273 = vmatprep.subr.bf16.mxu0 0
    %1274 = vmatpush1.bf16.msra.mxu0 0
    %1275 = vmatprep.subr.bf16.mxu0 0
    %1276 = vmatpush1.bf16.msra.mxu0 0
    %1277 = vmatprep.subr.bf16.mxu0 0
    %1278 = vmatpush1.bf16.msra.mxu0 0
    %1279 = vmatprep.subr.bf16.mxu0 0
    %1280 = vmatpush1.bf16.msra.mxu0 0
    %1281 = vmatprep.subr.bf16.mxu0 0
    %1282 = vmatpush1.bf16.msra.mxu0 0
    %1283 = vmatprep.subr.bf16.mxu0 0
    %1284 = vmatpush1.bf16.msra.mxu0 0
    %1285 = vmatprep.subr.bf16.mxu0 0
    %1286 = vmatpush1.bf16.msra.mxu0 0
    %1287 = vmatprep.subr.bf16.mxu0 0
    %1288 = vmatpush1.bf16.msra.mxu0 0
    %1289 = vmatprep.mubr.bf16.mxu0 0
    %1290 = vmatmul.mubr.bf16.gmra.mrb[0].mxu0 %v1252
    %v1291 = vpop.f32.mrb[0].mxu0
    %v1292 = vadd.f32 0.0, %v1291
    %v1293 = vpop.f32.mrb[0].mxu0
    %v1294 = vpop.f32.mrb[0].mxu0
    %v1295 = vadd.f32 0.0, %v1294
    %v1296 = vpop.f32.mrb[0].mxu0
    %1297 = vmatprep.mubr.bf16.mxu0 0
    %1298 = vmatmul.mubr.bf16.gmra.mrb[0].mxu0 %v1255
    %v1299 = vpop.f32.mrb[0].mxu0
    %v1300 = vadd.f32 0.0, %v1299
    %v1301 = vpop.f32.mrb[0].mxu0
    %v1302 = vpop.f32.mrb[0].mxu0
    %v1303 = vadd.f32 0.0, %v1302
    %v1304 = vpop.f32.mrb[0].mxu0
    %1305 = vdwg.mxu0
    %v1306 = vrcp.pop %v1233
    %v1307 = vrcp.pop %v1236
    %v1308 = vrcp.pop %v1239
    %v1309 = vrcp.pop %v1242
    %v1310 = vmul.f32 %v1292, %v1306
    %v1311 = vmul.f32 %v1295, %v1307
    %v1312 = vmul.f32 %v1300, %v1308
    %v1313 = vmul.f32 %v1303, %v1309
    %1318 = vrot.lane.b32.xlu0 %v958, 32
    %v1319 = vpop.permute.xlu0 %1318
    %1320 = vrot.lane.b32.xlu0 %v959, 32
    %v1321 = vpop.permute.xlu0 %1320
    %1322 = vrot.lane.b32.xlu0 %v960, 32
    %v1323 = vpop.permute.xlu0 %1322
    %1324 = vrot.lane.b32.xlu0 %v961, 32
    %v1325 = vpop.permute.xlu0 %1324
    %1334 = vrot.lane.b32.xlu0 %v1134, 64
    %v1335 = vpop.permute.xlu0 %1334
    %1336 = vrot.lane.b32.xlu0 %v1135, 64
    %v1337 = vpop.permute.xlu0 %1336
    %1338 = vrot.lane.b32.xlu0 %v1136, 64
    %v1339 = vpop.permute.xlu0 %1338
    %1340 = vrot.lane.b32.xlu0 %v1137, 64
    %v1341 = vpop.permute.xlu0 %1340
    %1350 = vrot.lane.b32.xlu0 %v1310, 96
    %v1351 = vpop.permute.xlu0 %1350
    %1352 = vrot.lane.b32.xlu0 %v1311, 96
    %v1353 = vpop.permute.xlu0 %1352
    %1354 = vrot.lane.b32.xlu0 %v1312, 96
    %v1355 = vpop.permute.xlu0 %1354
    %1356 = vrot.lane.b32.xlu0 %v1313, 96
    %v1357 = vpop.permute.xlu0 %1356
    %v1362 = vsel %vm617, %v776, %v1319
    %v1363 = vsel %vm617, %v777, %v1321
    %v1364 = vsel %vm617, %v778, %v1323
    %v1365 = vsel %vm617, %v779, %v1325
    %vm1366 = vcmask 523264
    %v1367 = vsel %vm1366, %v1362, %v1335
    %v1368 = vsel %vm1366, %v1363, %v1337
    %v1369 = vsel %vm1366, %v1364, %v1339
    %v1370 = vsel %vm1366, %v1365, %v1341
    %vm1371 = vcmask 785408
    %v1372 = vsel %vm1371, %v1367, %v1351
    %v1373 = vsel %vm1371, %v1368, %v1353
    %v1374 = vsel %vm1371, %v1369, %v1355
    %v1375 = vsel %vm1371, %v1370, %v1357
    %v1376 = vpack.c.bf16 %v1373, %v1372
    %v1377 = vpack.c.bf16 %v1375, %v1374
    %v1378 = vld [vmem:[#allocation13] sm:$0xf]
    %v1379 = vld [vmem:[#allocation13 + $0x4] sm:$0xf]
    %v1380 = vld [vmem:[#allocation13 + $0x8] sm:$0xf]
    %v1381 = vld [vmem:[#allocation13 + $0xc] sm:$0xf]
    %v1382 = vld [vmem:[#allocation13 + $0x10] sm:$0xf]
    %v1383 = vld [vmem:[#allocation13 + $0x14] sm:$0xf]
    %v1384 = vld [vmem:[#allocation13 + $0x18] sm:$0xf]
    %v1385 = vld [vmem:[#allocation13 + $0x1c] sm:$0xf]
    %v1386 = vld [vmem:[#allocation13 + $0x20] sm:$0xf]
    %v1387 = vld [vmem:[#allocation13 + $0x24] sm:$0xf]
    %v1388 = vld [vmem:[#allocation13 + $0x28] sm:$0xf]
    %v1389 = vld [vmem:[#allocation13 + $0x2c] sm:$0xf]
    %v1390 = vld [vmem:[#allocation13 + $0x30] sm:$0xf]
    %v1391 = vld [vmem:[#allocation13 + $0x34] sm:$0xf]
    %v1392 = vld [vmem:[#allocation13 + $0x38] sm:$0xf]
    %v1393 = vld [vmem:[#allocation13 + $0x3c] sm:$0xf]
    %v1394 = vld [vmem:[%s8] sm:$0x1]
    %v1396 = vlaneseq
    %v1397 = vshrl.u32 %v1396, 7
    %v1398 = vsub.s32 0, %v1397
    %v1399 = vrot.slane %v1394, %v1398
    %v1417 = vunpack.c.l.b16 %v1378
    %v1418 = vunpack.c.l.b16 %v1379
    %v1419 = vunpack.c.l.b16 %v1380
    %v1420 = vunpack.c.l.b16 %v1381
    %v1421 = vunpack.c.l.b16 %v1382
    %v1422 = vunpack.c.l.b16 %v1383
    %v1423 = vunpack.c.l.b16 %v1384
    %v1424 = vunpack.c.l.b16 %v1385
    %v1425 = vunpack.c.l.b16 %v1386
    %v1426 = vunpack.c.l.b16 %v1387
    %v1427 = vunpack.c.l.b16 %v1388
    %v1428 = vunpack.c.l.b16 %v1389
    %v1429 = vunpack.c.l.b16 %v1390
    %v1430 = vunpack.c.l.b16 %v1391
    %v1431 = vunpack.c.l.b16 %v1392
    %v1432 = vunpack.c.l.b16 %v1393
    %v1433 = vpack.c.b16 %v1418, %v1417
    %v1434 = vpack.c.b16 %v1420, %v1419
    %v1435 = vpack.c.b16 %v1422, %v1421
    %v1436 = vpack.c.b16 %v1424, %v1423
    %v1437 = vpack.c.b16 %v1426, %v1425
    %v1438 = vpack.c.b16 %v1428, %v1427
    %v1439 = vpack.c.b16 %v1430, %v1429
    %v1440 = vpack.c.b16 %v1432, %v1431
    %1449 = vmatprep.subr.bf16.mxu0 0
    %1450 = vmatpush1.bf16.msra.mxu0 %v1433
    %1451 = vmatprep.subr.bf16.mxu0 0
    %1452 = vmatpush1.bf16.msra.mxu0 %v1434
    %1453 = vmatprep.subr.bf16.mxu0 0
    %1454 = vmatpush1.bf16.msra.mxu0 %v1435
    %1455 = vmatprep.subr.bf16.mxu0 0
    %1456 = vmatpush1.bf16.msra.mxu0 %v1436
    %1457 = vmatprep.subr.bf16.mxu0 0
    %1458 = vmatpush1.bf16.msra.mxu0 %v1437
    %1459 = vmatprep.subr.bf16.mxu0 0
    %1460 = vmatpush1.bf16.msra.mxu0 %v1438
    %1461 = vmatprep.subr.bf16.mxu0 0
    %1462 = vmatpush1.bf16.msra.mxu0 %v1439
    %1463 = vmatprep.subr.bf16.mxu0 0
    %1464 = vmatpush1.bf16.msra.mxu0 %v1440
    %1465 = vmatprep.subr.bf16.mxu0 0
    %1466 = vmatpush1.bf16.msra.mxu0 0
    %1467 = vmatprep.subr.bf16.mxu0 0
    %1468 = vmatpush1.bf16.msra.mxu0 0
    %1469 = vmatprep.subr.bf16.mxu0 0
    %1470 = vmatpush1.bf16.msra.mxu0 0
    %1471 = vmatprep.subr.bf16.mxu0 0
    %1472 = vmatpush1.bf16.msra.mxu0 0
    %1473 = vmatprep.subr.bf16.mxu0 0
    %1474 = vmatpush1.bf16.msra.mxu0 0
    %1475 = vmatprep.subr.bf16.mxu0 0
    %1476 = vmatpush1.bf16.msra.mxu0 0
    %1477 = vmatprep.subr.bf16.mxu0 0
    %1478 = vmatpush1.bf16.msra.mxu0 0
    %1479 = vmatprep.subr.bf16.mxu0 0
    %1480 = vmatpush1.bf16.msra.mxu0 0
    %1481 = vmatprep.mubr.bf16.mxu0 0
    %1482 = vmatmul.mubr.bf16.gmra.mrb[0].mxu0 %v1376
    %v1483 = vpop.f32.mrb[0].mxu0
    %v1484 = vadd.f32 %v1399, %v1483
    %v1485 = vpop.f32.mrb[0].mxu0
    %v1486 = vpop.f32.mrb[0].mxu0
    %v1487 = vadd.f32 %v1399, %v1486
    %v1488 = vpop.f32.mrb[0].mxu0
    %1489 = vmatprep.mubr.bf16.mxu0 0
    %1490 = vmatmul.mubr.bf16.gmra.mrb[0].mxu0 %v1377
    %v1491 = vpop.f32.mrb[0].mxu0
    %v1492 = vadd.f32 %v1399, %v1491
    %v1493 = vpop.f32.mrb[0].mxu0
    %v1494 = vpop.f32.mrb[0].mxu0
    %v1495 = vadd.f32 %v1399, %v1494
    %v1496 = vpop.f32.mrb[0].mxu0
    %1497 = vdwg.mxu0
    %v1498 = vadd.f32 %v326, %v1484
    %v1499 = vadd.f32 %v327, %v1487
    %v1500 = vadd.f32 %v328, %v1492
    %v1501 = vadd.f32 %v329, %v1495
    %v1502 = vld [vmem:[%s9] sm:$0x1]
    %v1503 = vld [vmem:[%s10] sm:$0x1]
    %1504 = vadd.xlane.f32.xlu0 %v1498
    %v1505 = vpop.xlane.xlu0 %1504
    %1506 = vadd.xlane.f32.xlu0 %v1499
    %v1507 = vpop.xlane.xlu0 %1506
    %1508 = vadd.xlane.f32.xlu0 %v1500
    %v1509 = vpop.xlane.xlu0 %1508
    %1510 = vadd.xlane.f32.xlu0 %v1501
    %v1511 = vpop.xlane.xlu0 %1510
    %v1512 = vrcp.pop 128.0
    %v1513 = vmul.f32 %v1505, %v1512
    %v1514 = vmul.f32 %v1507, %v1512
    %v1515 = vmul.f32 %v1509, %v1512
    %v1516 = vmul.f32 %v1511, %v1512
    %v1517 = vmul.f32 %v1498, %v1498
    %v1518 = vmul.f32 %v1499, %v1499
    %v1519 = vmul.f32 %v1500, %v1500
    %v1520 = vmul.f32 %v1501, %v1501
    %1521 = vadd.xlane.f32.xlu0 %v1517
    %v1522 = vpop.xlane.xlu0 %1521
    %1523 = vadd.xlane.f32.xlu0 %v1518
    %v1524 = vpop.xlane.xlu0 %1523
    %1525 = vadd.xlane.f32.xlu0 %v1519
    %v1526 = vpop.xlane.xlu0 %1525
    %1527 = vadd.xlane.f32.xlu0 %v1520
    %v1528 = vpop.xlane.xlu0 %1527
    %v1529 = vmul.f32 %v1522, %v1512
    %v1530 = vmul.f32 %v1524, %v1512
    %v1531 = vmul.f32 %v1526, %v1512
    %v1532 = vmul.f32 %v1528, %v1512
    %v1533 = vmul.f32 %v1513, %v1513
    %v1534 = vmul.f32 %v1514, %v1514
    %v1535 = vmul.f32 %v1515, %v1515
    %v1536 = vmul.f32 %v1516, %v1516
    %v1537 = vsub.f32 %v1529, %v1533
    %v1538 = vsub.f32 %v1530, %v1534
    %v1539 = vsub.f32 %v1531, %v1535
    %v1540 = vsub.f32 %v1532, %v1536
    %v1541 = vsub.f32 %v1498, %v1513
    %v1542 = vsub.f32 %v1499, %v1514
    %v1543 = vsub.f32 %v1500, %v1515
    %v1544 = vsub.f32 %v1501, %v1516
    %v1545 = vadd.f32 %v1537, 1e-05
    %v1546 = vadd.f32 %v1538, 1e-05
    %v1547 = vadd.f32 %v1539, 1e-05
    %v1548 = vadd.f32 %v1540, 1e-05
    %v1549 = vrsqrt.pop %v1545
    %v1550 = vrsqrt.pop %v1546
    %v1551 = vrsqrt.pop %v1547
    %v1552 = vrsqrt.pop %v1548
    %v1553 = vmul.f32 %v1541, %v1549
    %v1554 = vmul.f32 %v1542, %v1550
    %v1555 = vmul.f32 %v1543, %v1551
    %v1556 = vmul.f32 %v1544, %v1552
    %v1558 = vlaneseq
    %v1559 = vshrl.u32 %v1558, 7
    %v1560 = vsub.s32 0, %v1559
    %v1561 = vrot.slane %v1502, %v1560
    %v1563 = vmul.f32 %v1553, %v1561
    %v1564 = vmul.f32 %v1554, %v1561
    %v1565 = vmul.f32 %v1555, %v1561
    %v1566 = vmul.f32 %v1556, %v1561
    %v1568 = vlaneseq
    %v1569 = vshrl.u32 %v1568, 7
    %v1570 = vsub.s32 0, %v1569
    %v1571 = vrot.slane %v1503, %v1570
    %v1573 = vadd.f32 %v1563, %v1571
    %v1574 = vadd.f32 %v1564, %v1571
    %v1575 = vadd.f32 %v1565, %v1571
    %v1576 = vadd.f32 %v1566, %v1571
    %v1577 = vpack.c.bf16 %v1574, %v1573
    %v1578 = vpack.c.bf16 %v1576, %v1575
    %v1579 = vld [vmem:[#allocation14] sm:$0xff]
    %v1580 = vld [vmem:[#allocation14 + $0x8] sm:$0xff]
    %v1581 = vld [vmem:[#allocation14 + $0x10] sm:$0xff]
    %v1582 = vld [vmem:[#allocation14 + $0x18] sm:$0xff]
    %v1583 = vld [vmem:[#allocation14 + $0x20] sm:$0xff]
    %v1584 = vld [vmem:[#allocation14 + $0x28] sm:$0xff]
    %v1585 = vld [vmem:[#allocation14 + $0x30] sm:$0xff]
    %v1586 = vld [vmem:[#allocation14 + $0x38] sm:$0xff]
    %v1587 = vld [vmem:[#allocation14 + $0x40] sm:$0xff]
    %v1588 = vld [vmem:[#allocation14 + $0x48] sm:$0xff]
    %v1589 = vld [vmem:[#allocation14 + $0x50] sm:$0xff]
    %v1590 = vld [vmem:[#allocation14 + $0x58] sm:$0xff]
    %v1591 = vld [vmem:[#allocation14 + $0x60] sm:$0xff]
    %v1592 = vld [vmem:[#allocation14 + $0x68] sm:$0xff]
    %v1593 = vld [vmem:[#allocation14 + $0x70] sm:$0xff]
    %v1594 = vld [vmem:[#allocation14 + $0x78] sm:$0xff]
    %v1595 = vld [vmem:[%s12] sm:$0x3]
    %v1597 = vlaneseq
    %v1598 = vshrl.u32 %v1597, 7
    %v1599 = vsub.s32 0, %v1598
    %v1600 = vrot.slane %v1595, %v1599
    %v1601 = vlaneseq
    %v1602 = vshrl.u32 %v1601, 7
    %v1603 = vsub.s32 1, %v1602
    %v1604 = vrot.slane %v1595, %v1603
    %v1623 = vunpack.c.l.b16 %v1579
    %v1624 = vunpack.c.h.b16 %v1579
    %v1625 = vunpack.c.l.b16 %v1580
    %v1626 = vunpack.c.h.b16 %v1580
    %v1627 = vunpack.c.l.b16 %v1581
    %v1628 = vunpack.c.h.b16 %v1581
    %v1629 = vunpack.c.l.b16 %v1582
    %v1630 = vunpack.c.h.b16 %v1582
    %v1631 = vunpack.c.l.b16 %v1583
    %v1632 = vunpack.c.h.b16 %v1583
    %v1633 = vunpack.c.l.b16 %v1584
    %v1634 = vunpack.c.h.b16 %v1584
    %v1635 = vunpack.c.l.b16 %v1585
    %v1636 = vunpack.c.h.b16 %v1585
    %v1637 = vunpack.c.l.b16 %v1586
    %v1638 = vunpack.c.h.b16 %v1586
    %v1639 = vunpack.c.l.b16 %v1587
    %v1640 = vunpack.c.h.b16 %v1587
    %v1641 = vunpack.c.l.b16 %v1588
    %v1642 = vunpack.c.h.b16 %v1588
    %v1643 = vunpack.c.l.b16 %v1589
    %v1644 = vunpack.c.h.b16 %v1589
    %v1645 = vunpack.c.l.b16 %v1590
    %v1646 = vunpack.c.h.b16 %v1590
    %v1647 = vunpack.c.l.b16 %v1591
    %v1648 = vunpack.c.h.b16 %v1591
    %v1649 = vunpack.c.l.b16 %v1592
    %v1650 = vunpack.c.h.b16 %v1592
    %v1651 = vunpack.c.l.b16 %v1593
    %v1652 = vunpack.c.h.b16 %v1593
    %v1653 = vunpack.c.l.b16 %v1594
    %v1654 = vunpack.c.h.b16 %v1594
    %v1655 = vpack.c.b16 %v1625, %v1623
    %v1656 = vpack.c.b16 %v1626, %v1624
    %v1657 = vpack.c.b16 %v1629, %v1627
    %v1658 = vpack.c.b16 %v1630, %v1628
    %v1659 = vpack.c.b16 %v1633, %v1631
    %v1660 = vpack.c.b16 %v1634, %v1632
    %v1661 = vpack.c.b16 %v1637, %v1635
    %v1662 = vpack.c.b16 %v1638, %v1636
    %v1663 = vpack.c.b16 %v1641, %v1639
    %v1664 = vpack.c.b16 %v1642, %v1640
    %v1665 = vpack.c.b16 %v1645, %v1643
    %v1666 = vpack.c.b16 %v1646, %v1644
    %v1667 = vpack.c.b16 %v1649, %v1647
    %v1668 = vpack.c.b16 %v1650, %v1648
    %v1669 = vpack.c.b16 %v1653, %v1651
    %v1670 = vpack.c.b16 %v1654, %v1652
    %1687 = vmatprep.subr.bf16.mxu0 %v1656
    %1688 = vmatpush1.bf16.msra.mxu0 %v1655
    %1689 = vmatprep.subr.bf16.mxu0 %v1658
    %1690 = vmatpush1.bf16.msra.mxu0 %v1657
    %1691 = vmatprep.subr.bf16.mxu0 %v1660
    %1692 = vmatpush1.bf16.msra.mxu0 %v1659
    %1693 = vmatprep.subr.bf16.mxu0 %v1662
    %1694 = vmatpush1.bf16.msra.mxu0 %v1661
    %1695 = vmatprep.subr.bf16.mxu0 %v1664
    %1696 = vmatpush1.bf16.msra.mxu0 %v1663
    %1697 = vmatprep.subr.bf16.mxu0 %v1666
    %1698 = vmatpush1.bf16.msra.mxu0 %v1665
    %1699 = vmatprep.subr.bf16.mxu0 %v1668
    %1700 = vmatpush1.bf16.msra.mxu0 %v1667
    %1701 = vmatprep.subr.bf16.mxu0 %v1670
    %1702 = vmatpush1.bf16.msra.mxu0 %v1669
    %1703 = vmatprep.subr.bf16.mxu0 0
    %1704 = vmatpush1.bf16.msra.mxu0 0
    %1705 = vmatprep.subr.bf16.mxu0 0
    %1706 = vmatpush1.bf16.msra.mxu0 0
    %1707 = vmatprep.subr.bf16.mxu0 0
    %1708 = vmatpush1.bf16.msra.mxu0 0
    %1709 = vmatprep.subr.bf16.mxu0 0
    %1710 = vmatpush1.bf16.msra.mxu0 0
    %1711 = vmatprep.subr.bf16.mxu0 0
    %1712 = vmatpush1.bf16.msra.mxu0 0
    %1713 = vmatprep.subr.bf16.mxu0 0
    %1714 = vmatpush1.bf16.msra.mxu0 0
    %1715 = vmatprep.subr.bf16.mxu0 0
    %1716 = vmatpush1.bf16.msra.mxu0 0
    %1717 = vmatprep.subr.bf16.mxu0 0
    %1718 = vmatpush1.bf16.msra.mxu0 0
    %1719 = vmatprep.mubr.bf16.mxu0 0
    %1720 = vmatmul.mubr.bf16.gmra.mrb[0].mxu0 %v1577
    %v1721 = vpop.f32.mrb[0].mxu0
    %v1722 = vadd.f32 %v1600, %v1721
    %v1723 = vpop.f32.mrb[0].mxu0
    %v1724 = vadd.f32 %v1604, %v1723
    %v1725 = vpop.f32.mrb[0].mxu0
    %v1726 = vadd.f32 %v1600, %v1725
    %v1727 = vpop.f32.mrb[0].mxu0
    %v1728 = vadd.f32 %v1604, %v1727
    %1729 = vmatprep.mubr.bf16.mxu0 0
    %1730 = vmatmul.mubr.bf16.gmra.mrb[0].mxu0 %v1578
    %v1731 = vpop.f32.mrb[0].mxu0
    %v1732 = vadd.f32 %v1600, %v1731
    %v1733 = vpop.f32.mrb[0].mxu0
    %v1734 = vadd.f32 %v1604, %v1733
    %v1735 = vpop.f32.mrb[0].mxu0
    %v1736 = vadd.f32 %v1600, %v1735
    %v1737 = vpop.f32.mrb[0].mxu0
    %v1738 = vadd.f32 %v1604, %v1737
    %1739 = vdwg.mxu0
    %v1740 = vmax.f32 %v1722, 0.0
    %v1741 = vmax.f32 %v1724, 0.0
    %v1742 = vmax.f32 %v1726, 0.0
    %v1743 = vmax.f32 %v1728, 0.0
    %v1744 = vmax.f32 %v1732, 0.0
    %v1745 = vmax.f32 %v1734, 0.0
    %v1746 = vmax.f32 %v1736, 0.0
    %v1747 = vmax.f32 %v1738, 0.0
    %v1748 = vpack.c.bf16 %v1742, %v1740
    %v1749 = vpack.c.bf16 %v1743, %v1741
    %v1750 = vpack.c.bf16 %v1746, %v1744
    %v1751 = vpack.c.bf16 %v1747, %v1745
    %v1752 = vld [vmem:[#allocation16] sm:$0xf]
    %v1753 = vld [vmem:[#allocation16 + $0x4] sm:$0xf]
    %v1754 = vld [vmem:[#allocation16 + $0x8] sm:$0xf]
    %v1755 = vld [vmem:[#allocation16 + $0xc] sm:$0xf]
    %v1756 = vld [vmem:[#allocation16 + $0x10] sm:$0xf]
    %v1757 = vld [vmem:[#allocation16 + $0x14] sm:$0xf]
    %v1758 = vld [vmem:[#allocation16 + $0x18] sm:$0xf]
    %v1759 = vld [vmem:[#allocation16 + $0x1c] sm:$0xf]
    %v1760 = vld [vmem:[#allocation16 + $0x20] sm:$0xf]
    %v1761 = vld [vmem:[#allocation16 + $0x24] sm:$0xf]
    %v1762 = vld [vmem:[#allocation16 + $0x28] sm:$0xf]
    %v1763 = vld [vmem:[#allocation16 + $0x2c] sm:$0xf]
    %v1764 = vld [vmem:[#allocation16 + $0x30] sm:$0xf]
    %v1765 = vld [vmem:[#allocation16 + $0x34] sm:$0xf]
    %v1766 = vld [vmem:[#allocation16 + $0x38] sm:$0xf]
    %v1767 = vld [vmem:[#allocation16 + $0x3c] sm:$0xf]
    %v1768 = vld [vmem:[#allocation16 + $0x40] sm:$0xf]
    %v1769 = vld [vmem:[#allocation16 + $0x44] sm:$0xf]
    %v1770 = vld [vmem:[#allocation16 + $0x48] sm:$0xf]
    %v1771 = vld [vmem:[#allocation16 + $0x4c] sm:$0xf]
    %v1772 = vld [vmem:[#allocation16 + $0x50] sm:$0xf]
    %v1773 = vld [vmem:[#allocation16 + $0x54] sm:$0xf]
    %v1774 = vld [vmem:[#allocation16 + $0x58] sm:$0xf]
    %v1775 = vld [vmem:[#allocation16 + $0x5c] sm:$0xf]
    %v1776 = vld [vmem:[#allocation16 + $0x60] sm:$0xf]
    %v1777 = vld [vmem:[#allocation16 + $0x64] sm:$0xf]
    %v1778 = vld [vmem:[#allocation16 + $0x68] sm:$0xf]
    %v1779 = vld [vmem:[#allocation16 + $0x6c] sm:$0xf]
    %v1780 = vld [vmem:[#allocation16 + $0x70] sm:$0xf]
    %v1781 = vld [vmem:[#allocation16 + $0x74] sm:$0xf]
    %v1782 = vld [vmem:[#allocation16 + $0x78] sm:$0xf]
    %v1783 = vld [vmem:[#allocation16 + $0x7c] sm:$0xf]
    %v1784 = vld [vmem:[%s14] sm:$0x1]
    %v1786 = vlaneseq
    %v1787 = vshrl.u32 %v1786, 7
    %v1788 = vsub.s32 0, %v1787
    %v1789 = vrot.slane %v1784, %v1788
    %v1823 = vunpack.c.l.b16 %v1752
    %v1824 = vunpack.c.l.b16 %v1753
    %v1825 = vunpack.c.l.b16 %v1754
    %v1826 = vunpack.c.l.b16 %v1755
    %v1827 = vunpack.c.l.b16 %v1756
    %v1828 = vunpack.c.l.b16 %v1757
    %v1829 = vunpack.c.l.b16 %v1758
    %v1830 = vunpack.c.l.b16 %v1759
    %v1831 = vunpack.c.l.b16 %v1760
    %v1832 = vunpack.c.l.b16 %v1761
    %v1833 = vunpack.c.l.b16 %v1762
    %v1834 = vunpack.c.l.b16 %v1763
    %v1835 = vunpack.c.l.b16 %v1764
    %v1836 = vunpack.c.l.b16 %v1765
    %v1837 = vunpack.c.l.b16 %v1766
    %v1838 = vunpack.c.l.b16 %v1767
    %v1839 = vunpack.c.l.b16 %v1768
    %v1840 = vunpack.c.l.b16 %v1769
    %v1841 = vunpack.c.l.b16 %v1770
    %v1842 = vunpack.c.l.b16 %v1771
    %v1843 = vunpack.c.l.b16 %v1772
    %v1844 = vunpack.c.l.b16 %v1773
    %v1845 = vunpack.c.l.b16 %v1774
    %v1846 = vunpack.c.l.b16 %v1775
    %v1847 = vunpack.c.l.b16 %v1776
    %v1848 = vunpack.c.l.b16 %v1777
    %v1849 = vunpack.c.l.b16 %v1778
    %v1850 = vunpack.c.l.b16 %v1779
    %v1851 = vunpack.c.l.b16 %v1780
    %v1852 = vunpack.c.l.b16 %v1781
    %v1853 = vunpack.c.l.b16 %v1782
    %v1854 = vunpack.c.l.b16 %v1783
    %v1855 = vpack.c.b16 %v1824, %v1823
    %v1856 = vpack.c.b16 %v1826, %v1825
    %v1857 = vpack.c.b16 %v1828, %v1827
    %v1858 = vpack.c.b16 %v1830, %v1829
    %v1859 = vpack.c.b16 %v1832, %v1831
    %v1860 = vpack.c.b16 %v1834, %v1833
    %v1861 = vpack.c.b16 %v1836, %v1835
    %v1862 = vpack.c.b16 %v1838, %v1837
    %v1863 = vpack.c.b16 %v1840, %v1839
    %v1864 = vpack.c.b16 %v1842, %v1841
    %v1865 = vpack.c.b16 %v1844, %v1843
    %v1866 = vpack.c.b16 %v1846, %v1845
    %v1867 = vpack.c.b16 %v1848, %v1847
    %v1868 = vpack.c.b16 %v1850, %v1849
    %v1869 = vpack.c.b16 %v1852, %v1851
    %v1870 = vpack.c.b16 %v1854, %v1853
    %1887 = vmatprep.subr.bf16.mxu0 0
    %1888 = vmatpush1.bf16.msra.mxu0 %v1855
    %1889 = vmatprep.subr.bf16.mxu0 0
    %1890 = vmatpush1.bf16.msra.mxu0 %v1856
    %1891 = vmatprep.subr.bf16.mxu0 0
    %1892 = vmatpush1.bf16.msra.mxu0 %v1857
    %1893 = vmatprep.subr.bf16.mxu0 0
    %1894 = vmatpush1.bf16.msra.mxu0 %v1858
    %1895 = vmatprep.subr.bf16.mxu0 0
    %1896 = vmatpush1.bf16.msra.mxu0 %v1859
    %1897 = vmatprep.subr.bf16.mxu0 0
    %1898 = vmatpush1.bf16.msra.mxu0 %v1860
    %1899 = vmatprep.subr.bf16.mxu0 0
    %1900 = vmatpush1.bf16.msra.mxu0 %v1861
    %1901 = vmatprep.subr.bf16.mxu0 0
    %1902 = vmatpush1.bf16.msra.mxu0 %v1862
    %1903 = vmatprep.subr.bf16.mxu0 0
    %1904 = vmatpush1.bf16.msra.mxu0 %v1863
    %1905 = vmatprep.subr.bf16.mxu0 0
    %1906 = vmatpush1.bf16.msra.mxu0 %v1864
    %1907 = vmatprep.subr.bf16.mxu0 0
    %1908 = vmatpush1.bf16.msra.mxu0 %v1865
    %1909 = vmatprep.subr.bf16.mxu0 0
    %1910 = vmatpush1.bf16.msra.mxu0 %v1866
    %1911 = vmatprep.subr.bf16.mxu0 0
    %1912 = vmatpush1.bf16.msra.mxu0 %v1867
    %1913 = vmatprep.subr.bf16.mxu0 0
    %1914 = vmatpush1.bf16.msra.mxu0 %v1868
    %1915 = vmatprep.subr.bf16.mxu0 0
    %1916 = vmatpush1.bf16.msra.mxu0 %v1869
    %1917 = vmatprep.subr.bf16.mxu0 0
    %1918 = vmatpush1.bf16.msra.mxu0 %v1870
    %1919 = vmatprep.mubr.bf16.mxu0 %v1749
    %1920 = vmatmul.mubr.bf16.gmra.mrb[0].mxu0 %v1748
    %v1921 = vpop.f32.mrb[0].mxu0
    %v1922 = vadd.f32 %v1789, %v1921
    %v1923 = vpop.f32.mrb[0].mxu0
    %v1924 = vpop.f32.mrb[0].mxu0
    %v1925 = vadd.f32 %v1789, %v1924
    %v1926 = vpop.f32.mrb[0].mxu0
    %1927 = vmatprep.mubr.bf16.mxu0 %v1751
    %1928 = vmatmul.mubr.bf16.gmra.mrb[0].mxu0 %v1750
    %v1929 = vpop.f32.mrb[0].mxu0
    %v1930 = vadd.f32 %v1789, %v1929
    %v1931 = vpop.f32.mrb[0].mxu0
    %v1932 = vpop.f32.mrb[0].mxu0
    %v1933 = vadd.f32 %v1789, %v1932
    %v1934 = vpop.f32.mrb[0].mxu0
    %1935 = vdwg.mxu0
    %v1936 = vadd.f32 %v1573, %v1922
    %v1937 = vadd.f32 %v1574, %v1925
    %v1938 = vadd.f32 %v1575, %v1930
    %v1939 = vadd.f32 %v1576, %v1933
    %v1940 = vld [vmem:[%s15] sm:$0x1]
    %v1941 = vld [vmem:[%s16] sm:$0x1]
    %1942 = vadd.xlane.f32.xlu0 %v1936
    %v1943 = vpop.xlane.xlu0 %1942
    %1944 = vadd.xlane.f32.xlu0 %v1937
    %v1945 = vpop.xlane.xlu0 %1944
    %1946 = vadd.xlane.f32.xlu0 %v1938
    %v1947 = vpop.xlane.xlu0 %1946
    %1948 = vadd.xlane.f32.xlu0 %v1939
    %v1949 = vpop.xlane.xlu0 %1948
    %v1950 = vmul.f32 %v1943, %v1512
    %v1951 = vmul.f32 %v1945, %v1512
    %v1952 = vmul.f32 %v1947, %v1512
    %v1953 = vmul.f32 %v1949, %v1512
    %v1954 = vmul.f32 %v1936, %v1936
    %v1955 = vmul.f32 %v1937, %v1937
    %v1956 = vmul.f32 %v1938, %v1938
    %v1957 = vmul.f32 %v1939, %v1939
    %1958 = vadd.xlane.f32.xlu0 %v1954
    %v1959 = vpop.xlane.xlu0 %1958
    %1960 = vadd.xlane.f32.xlu0 %v1955
    %v1961 = vpop.xlane.xlu0 %1960
    %1962 = vadd.xlane.f32.xlu0 %v1956
    %v1963 = vpop.xlane.xlu0 %1962
    %1964 = vadd.xlane.f32.xlu0 %v1957
    %v1965 = vpop.xlane.xlu0 %1964
    %v1966 = vmul.f32 %v1959, %v1512
    %v1967 = vmul.f32 %v1961, %v1512
    %v1968 = vmul.f32 %v1963, %v1512
    %v1969 = vmul.f32 %v1965, %v1512
    %v1970 = vmul.f32 %v1950, %v1950
    %v1971 = vmul.f32 %v1951, %v1951
    %v1972 = vmul.f32 %v1952, %v1952
    %v1973 = vmul.f32 %v1953, %v1953
    %v1974 = vsub.f32 %v1966, %v1970
    %v1975 = vsub.f32 %v1967, %v1971
    %v1976 = vsub.f32 %v1968, %v1972
    %v1977 = vsub.f32 %v1969, %v1973
    %v1978 = vsub.f32 %v1936, %v1950
    %v1979 = vsub.f32 %v1937, %v1951
    %v1980 = vsub.f32 %v1938, %v1952
    %v1981 = vsub.f32 %v1939, %v1953
    %v1982 = vadd.f32 %v1974, 1e-05
    %v1983 = vadd.f32 %v1975, 1e-05
    %v1984 = vadd.f32 %v1976, 1e-05
    %v1985 = vadd.f32 %v1977, 1e-05
    %v1986 = vrsqrt.pop %v1982
    %v1987 = vrsqrt.pop %v1983
    %v1988 = vrsqrt.pop %v1984
    %v1989 = vrsqrt.pop %v1985
    %v1990 = vmul.f32 %v1978, %v1986
    %v1991 = vmul.f32 %v1979, %v1987
    %v1992 = vmul.f32 %v1980, %v1988
    %v1993 = vmul.f32 %v1981, %v1989
    %v1995 = vlaneseq
    %v1996 = vshrl.u32 %v1995, 7
    %v1997 = vsub.s32 0, %v1996
    %v1998 = vrot.slane %v1940, %v1997
    %v2000 = vmul.f32 %v1990, %v1998
    %v2001 = vmul.f32 %v1991, %v1998
    %v2002 = vmul.f32 %v1992, %v1998
    %v2003 = vmul.f32 %v1993, %v1998
    %v2005 = vlaneseq
    %v2006 = vshrl.u32 %v2005, 7
    %v2007 = vsub.s32 0, %v2006
    %v2008 = vrot.slane %v1941, %v2007
    %v2010 = vadd.f32 %v2000, %v2008
    %v2011 = vadd.f32 %v2001, %v2008
    %v2012 = vadd.f32 %v2002, %v2008
    %v2013 = vadd.f32 %v2003, %v2008
    %v2014 = vpack.c.bf16 %v2011, %v2010
    %v2015 = vpack.c.bf16 %v2013, %v2012
    %s2016 = scalar_lea.vmem [#allocation11], 192
    %v2017 = vld [vmem:[%s2016] sm:$0xff]
    %v2018 = vld [vmem:[%s2016 + $0x8] sm:$0xf]
    %v2019 = vld [vmem:[%s2016 + $0xc] sm:$0xff]
    %v2020 = vld [vmem:[%s2016 + $0x14] sm:$0xf]
    %v2021 = vld [vmem:[%s2016 + $0x18] sm:$0xff]
    %v2022 = vld [vmem:[%s2016 + $0x20] sm:$0xf]
    %v2023 = vld [vmem:[%s2016 + $0x24] sm:$0xff]
    %v2024 = vld [vmem:[%s2016 + $0x2c] sm:$0xf]
    %v2025 = vld [vmem:[%s2016 + $0x30] sm:$0xff]
    %v2026 = vld [vmem:[%s2016 + $0x38] sm:$0xf]
    %v2027 = vld [vmem:[%s2016 + $0x3c] sm:$0xff]
    %v2028 = vld [vmem:[%s2016 + $0x44] sm:$0xf]
    %v2029 = vld [vmem:[%s2016 + $0x48] sm:$0xff]
    %v2030 = vld [vmem:[%s2016 + $0x50] sm:$0xf]
    %v2031 = vld [vmem:[%s2016 + $0x54] sm:$0xff]
    %v2032 = vld [vmem:[%s2016 + $0x5c] sm:$0xf]
    %v2033 = vld [vmem:[%s2016 + $0x60] sm:$0xff]
    %v2034 = vld [vmem:[%s2016 + $0x68] sm:$0xf]
    %v2035 = vld [vmem:[%s2016 + $0x6c] sm:$0xff]
    %v2036 = vld [vmem:[%s2016 + $0x74] sm:$0xf]
    %v2037 = vld [vmem:[%s2016 + $0x78] sm:$0xff]
    %v2038 = vld [vmem:[%s2016 + $0x80] sm:$0xf]
    %v2039 = vld [vmem:[%s2016 + $0x84] sm:$0xff]
    %v2040 = vld [vmem:[%s2016 + $0x8c] sm:$0xf]
    %v2041 = vld [vmem:[%s2016 + $0x90] sm:$0xff]
    %v2042 = vld [vmem:[%s2016 + $0x98] sm:$0xf]
    %v2043 = vld [vmem:[%s2016 + $0x9c] sm:$0xff]
    %v2044 = vld [vmem:[%s2016 + $0xa4] sm:$0xf]
    %v2045 = vld [vmem:[%s2016 + $0xa8] sm:$0xff]
    %v2046 = vld [vmem:[%s2016 + $0xb0] sm:$0xf]
    %v2047 = vld [vmem:[%s2016 + $0xb4] sm:$0xff]
    %v2048 = vld [vmem:[%s2016 + $0xbc] sm:$0xf]
    %s2049 = scalar_lea.vmem %s6, 3
    %v2050 = vld [vmem:[%s2049] sm:$0x7]
    %v2052 = vlaneseq
    %v2053 = vshrl.u32 %v2052, 7
    %v2054 = vsub.s32 0, %v2053
    %v2055 = vrot.slane %v2050, %v2054
    %v2056 = vlaneseq
    %v2057 = vshrl.u32 %v2056, 7
    %v2058 = vsub.s32 1, %v2057
    %v2059 = vrot.slane %v2050, %v2058
    %v2060 = vlaneseq
    %v2061 = vshrl.u32 %v2060, 7
    %v2062 = vsub.s32 2, %v2061
    %v2063 = vrot.slane %v2050, %v2062
    %v2099 = vunpack.c.l.b16 %v2017
    %v2100 = vunpack.c.h.b16 %v2017
    %v2101 = vunpack.c.l.b16 %v2018
    %v2102 = vunpack.c.l.b16 %v2019
    %v2103 = vunpack.c.h.b16 %v2019
    %v2104 = vunpack.c.l.b16 %v2020
    %v2105 = vunpack.c.l.b16 %v2021
    %v2106 = vunpack.c.h.b16 %v2021
    %v2107 = vunpack.c.l.b16 %v2022
    %v2108 = vunpack.c.l.b16 %v2023
    %v2109 = vunpack.c.h.b16 %v2023
    %v2110 = vunpack.c.l.b16 %v2024
    %v2111 = vunpack.c.l.b16 %v2025
    %v2112 = vunpack.c.h.b16 %v2025
    %v2113 = vunpack.c.l.b16 %v2026
    %v2114 = vunpack.c.l.b16 %v2027
    %v2115 = vunpack.c.h.b16 %v2027
    %v2116 = vunpack.c.l.b16 %v2028
    %v2117 = vunpack.c.l.b16 %v2029
    %v2118 = vunpack.c.h.b16 %v2029
    %v2119 = vunpack.c.l.b16 %v2030
    %v2120 = vunpack.c.l.b16 %v2031
    %v2121 = vunpack.c.h.b16 %v2031
    %v2122 = vunpack.c.l.b16 %v2032
    %v2123 = vunpack.c.l.b16 %v2033
    %v2124 = vunpack.c.h.b16 %v2033
    %v2125 = vunpack.c.l.b16 %v2034
    %v2126 = vunpack.c.l.b16 %v2035
    %v2127 = vunpack.c.h.b16 %v2035
    %v2128 = vunpack.c.l.b16 %v2036
    %v2129 = vunpack.c.l.b16 %v2037
    %v2130 = vunpack.c.h.b16 %v2037
    %v2131 = vunpack.c.l.b16 %v2038
    %v2132 = vunpack.c.l.b16 %v2039
    %v2133 = vunpack.c.h.b16 %v2039
    %v2134 = vunpack.c.l.b16 %v2040
    %v2135 = vunpack.c.l.b16 %v2041
    %v2136 = vunpack.c.h.b16 %v2041
    %v2137 = vunpack.c.l.b16 %v2042
    %v2138 = vunpack.c.l.b16 %v2043
    %v2139 = vunpack.c.h.b16 %v2043
    %v2140 = vunpack.c.l.b16 %v2044
    %v2141 = vunpack.c.l.b16 %v2045
    %v2142 = vunpack.c.h.b16 %v2045
    %v2143 = vunpack.c.l.b16 %v2046
    %v2144 = vunpack.c.l.b16 %v2047
    %v2145 = vunpack.c.h.b16 %v2047
    %v2146 = vunpack.c.l.b16 %v2048
    %v2147 = vpack.c.b16 %v2102, %v2099
    %v2148 = vpack.c.b16 %v2103, %v2100
    %v2149 = vpack.c.b16 %v2104, %v2101
    %v2150 = vpack.c.b16 %v2108, %v2105
    %v2151 = vpack.c.b16 %v2109, %v2106
    %v2152 = vpack.c.b16 %v2110, %v2107
    %v2153 = vpack.c.b16 %v2114, %v2111
    %v2154 = vpack.c.b16 %v2115, %v2112
    %v2155 = vpack.c.b16 %v2116, %v2113
    %v2156 = vpack.c.b16 %v2120, %v2117
    %v2157 = vpack.c.b16 %v2121, %v2118
    %v2158 = vpack.c.b16 %v2122, %v2119
    %v2159 = vpack.c.b16 %v2126, %v2123
    %v2160 = vpack.c.b16 %v2127, %v2124
    %v2161 = vpack.c.b16 %v2128, %v2125
    %v2162 = vpack.c.b16 %v2132, %v2129
    %v2163 = vpack.c.b16 %v2133, %v2130
    %v2164 = vpack.c.b16 %v2134, %v2131
    %v2165 = vpack.c.b16 %v2138, %v2135
    %v2166 = vpack.c.b16 %v2139, %v2136
    %v2167 = vpack.c.b16 %v2140, %v2137
    %v2168 = vpack.c.b16 %v2144, %v2141
    %v2169 = vpack.c.b16 %v2145, %v2142
    %v2170 = vpack.c.b16 %v2146, %v2143
    %2195 = vmatprep.subr.bf16.mxu0 %v2148
    %2196 = vmatpush1.bf16.msra.mxu0 %v2147
    %2197 = vmatprep.subr.bf16.mxu0 %v2151
    %2198 = vmatpush1.bf16.msra.mxu0 %v2150
    %2199 = vmatprep.subr.bf16.mxu0 %v2154
    %2200 = vmatpush1.bf16.msra.mxu0 %v2153
    %2201 = vmatprep.subr.bf16.mxu0 %v2157
    %2202 = vmatpush1.bf16.msra.mxu0 %v2156
    %2203 = vmatprep.subr.bf16.mxu0 %v2160
    %2204 = vmatpush1.bf16.msra.mxu0 %v2159
    %2205 = vmatprep.subr.bf16.mxu0 %v2163
    %2206 = vmatpush1.bf16.msra.mxu0 %v2162
    %2207 = vmatprep.subr.bf16.mxu0 %v2166
    %2208 = vmatpush1.bf16.msra.mxu0 %v2165
    %2209 = vmatprep.subr.bf16.mxu0 %v2169
    %2210 = vmatpush1.bf16.msra.mxu0 %v2168
    %2211 = vmatprep.subr.bf16.mxu0 0
    %2212 = vmatpush1.bf16.msra.mxu0 0
    %2213 = vmatprep.subr.bf16.mxu0 0
    %2214 = vmatpush1.bf16.msra.mxu0 0
    %2215 = vmatprep.subr.bf16.mxu0 0
    %2216 = vmatpush1.bf16.msra.mxu0 0
    %2217 = vmatprep.subr.bf16.mxu0 0
    %2218 = vmatpush1.bf16.msra.mxu0 0
    %2219 = vmatprep.subr.bf16.mxu0 0
    %2220 = vmatpush1.bf16.msra.mxu0 0
    %2221 = vmatprep.subr.bf16.mxu0 0
    %2222 = vmatpush1.bf16.msra.mxu0 0
    %2223 = vmatprep.subr.bf16.mxu0 0
    %2224 = vmatpush1.bf16.msra.mxu0 0
    %2225 = vmatprep.subr.bf16.mxu0 0
    %2226 = vmatpush1.bf16.msra.mxu0 0
    %2227 = vmatprep.mubr.bf16.mxu0 0
    %2228 = vmatmul.mubr.bf16.gmra.mrb[0].mxu0 %v2014
    %v2229 = vpop.f32.mrb[0].mxu0
    %v2230 = vadd.f32 %v2055, %v2229
    %v2231 = vpop.f32.mrb[0].mxu0
    %v2232 = vadd.f32 %v2059, %v2231
    %v2233 = vpop.f32.mrb[0].mxu0
    %v2234 = vadd.f32 %v2055, %v2233
    %v2235 = vpop.f32.mrb[0].mxu0
    %v2236 = vadd.f32 %v2059, %v2235
    %2237 = vmatprep.mubr.bf16.mxu0 0
    %2238 = vmatmul.mubr.bf16.gmra.mrb[0].mxu0 %v2015
    %v2239 = vpop.f32.mrb[0].mxu0
    %v2240 = vadd.f32 %v2055, %v2239
    %v2241 = vpop.f32.mrb[0].mxu0
    %v2242 = vadd.f32 %v2059, %v2241
    %v2243 = vpop.f32.mrb[0].mxu0
    %v2244 = vadd.f32 %v2055, %v2243
    %v2245 = vpop.f32.mrb[0].mxu0
    %v2246 = vadd.f32 %v2059, %v2245
    %2247 = vdwg.mxu0
    %2248 = vmatprep.subr.bf16.mxu0 0
    %2249 = vmatpush1.bf16.msra.mxu0 %v2149
    %2250 = vmatprep.subr.bf16.mxu0 0
    %2251 = vmatpush1.bf16.msra.mxu0 %v2152
    %2252 = vmatprep.subr.bf16.mxu0 0
    %2253 = vmatpush1.bf16.msra.mxu0 %v2155
    %2254 = vmatprep.subr.bf16.mxu0 0
    %2255 = vmatpush1.bf16.msra.mxu0 %v2158
    %2256 = vmatprep.subr.bf16.mxu0 0
    %2257 = vmatpush1.bf16.msra.mxu0 %v2161
    %2258 = vmatprep.subr.bf16.mxu0 0
    %2259 = vmatpush1.bf16.msra.mxu0 %v2164
    %2260 = vmatprep.subr.bf16.mxu0 0
    %2261 = vmatpush1.bf16.msra.mxu0 %v2167
    %2262 = vmatprep.subr.bf16.mxu0 0
    %2263 = vmatpush1.bf16.msra.mxu0 %v2170
    %2264 = vmatprep.subr.bf16.mxu0 0
    %2265 = vmatpush1.bf16.msra.mxu0 0
    %2266 = vmatprep.subr.bf16.mxu0 0
    %2267 = vmatpush1.bf16.msra.mxu0 0
    %2268 = vmatprep.subr.bf16.mxu0 0
    %2269 = vmatpush1.bf16.msra.mxu0 0
    %2270 = vmatprep.subr.bf16.mxu0 0
    %2271 = vmatpush1.bf16.msra.mxu0 0
    %2272 = vmatprep.subr.bf16.mxu0 0
    %2273 = vmatpush1.bf16.msra.mxu0 0
    %2274 = vmatprep.subr.bf16.mxu0 0
    %2275 = vmatpush1.bf16.msra.mxu0 0
    %2276 = vmatprep.subr.bf16.mxu0 0
    %2277 = vmatpush1.bf16.msra.mxu0 0
    %2278 = vmatprep.subr.bf16.mxu0 0
    %2279 = vmatpush1.bf16.msra.mxu0 0
    %2280 = vmatprep.mubr.bf16.mxu0 0
    %2281 = vmatmul.mubr.bf16.gmra.mrb[0].mxu0 %v2014
    %v2282 = vpop.f32.mrb[0].mxu0
    %v2283 = vadd.f32 %v2063, %v2282
    %v2284 = vpop.f32.mrb[0].mxu0
    %v2285 = vpop.f32.mrb[0].mxu0
    %v2286 = vadd.f32 %v2063, %v2285
    %v2287 = vpop.f32.mrb[0].mxu0
    %2288 = vmatprep.mubr.bf16.mxu0 0
    %2289 = vmatmul.mubr.bf16.gmra.mrb[0].mxu0 %v2015
    %v2290 = vpop.f32.mrb[0].mxu0
    %v2291 = vadd.f32 %v2063, %v2290
    %v2292 = vpop.f32.mrb[0].mxu0
    %v2293 = vpop.f32.mrb[0].mxu0
    %v2294 = vadd.f32 %v2063, %v2293
    %v2295 = vpop.f32.mrb[0].mxu0
    %2296 = vdwg.mxu0
    %v2297 = vpack.c.bf16 %v2234, %v2230
    %v2298 = vpack.c.bf16 %v2244, %v2240
    %v2299 = vpack.c.bf16 %v2236, %v2232
    %v2300 = vpack.c.bf16 %v2246, %v2242
    %v2301 = vpack.c.bf16 %v2286, %v2283
    %v2302 = vpack.c.bf16 %v2294, %v2291
    %v2304 = vsel %vm617, %v2297, 0
    %v2307 = vsel %vm617, %v2298, 0
    %v2310 = vsel %vm617, %v2299, 0
    %v2313 = vsel %vm617, %v2300, 0
    %2315 = vmatprep.subr.bf16.mxu0 0
    %2316 = vmatpush1.bf16.xpose.msra.mxu0 %v2310
    %2317 = vmatprep.subr.bf16.mxu0 0
    %2318 = vmatpush1.bf16.xpose.msra.mxu0 %v2313
    %2319 = vmatprep.subr.bf16.mxu0 0
    %2320 = vmatpush1.bf16.xpose.msra.mxu0 0
    %2321 = vmatprep.subr.bf16.mxu0 0
    %2322 = vmatpush1.bf16.xpose.msra.mxu0 0
    %2323 = vmatprep.subr.bf16.mxu0 0
    %2324 = vmatpush1.bf16.xpose.msra.mxu0 0
    %2325 = vmatprep.subr.bf16.mxu0 0
    %2326 = vmatpush1.bf16.xpose.msra.mxu0 0
    %2327 = vmatprep.subr.bf16.mxu0 0
    %2328 = vmatpush1.bf16.xpose.msra.mxu0 0
    %2329 = vmatprep.subr.bf16.mxu0 0
    %2330 = vmatpush1.bf16.xpose.msra.mxu0 0
    %2331 = vmatprep.subr.bf16.mxu0 0
    %2332 = vmatpush1.bf16.xpose.msra.mxu0 0
    %2333 = vmatprep.subr.bf16.mxu0 0
    %2334 = vmatpush1.bf16.xpose.msra.mxu0 0
    %2335 = vmatprep.subr.bf16.mxu0 0
    %2336 = vmatpush1.bf16.xpose.msra.mxu0 0
    %2337 = vmatprep.subr.bf16.mxu0 0
    %2338 = vmatpush1.bf16.xpose.msra.mxu0 0
    %2339 = vmatprep.subr.bf16.mxu0 0
    %2340 = vmatpush1.bf16.xpose.msra.mxu0 0
    %2341 = vmatprep.subr.bf16.mxu0 0
    %2342 = vmatpush1.bf16.xpose.msra.mxu0 0
    %2343 = vmatprep.subr.bf16.mxu0 0
    %2344 = vmatpush1.bf16.xpose.msra.mxu0 0
    %2345 = vmatprep.subr.bf16.mxu0 0
    %2346 = vmatpush1.bf16.xpose.msra.mxu0 0
    %2347 = vmatprep.mubr.bf16.mxu0 0
    %2348 = vmatmul.mubr.bf16.gmra.mrb[0].mxu0 %v2304
    %v2349 = vpop.f32.mrb[0].mxu0
    %v2350 = vadd.f32 %v178, %v2349
    %v2351 = vpop.f32.mrb[0].mxu0
    %v2352 = vpop.f32.mrb[0].mxu0
    %v2353 = vadd.f32 %v179, %v2352
    %v2354 = vpop.f32.mrb[0].mxu0
    %2355 = vmatprep.mubr.bf16.mxu0 0
    %2356 = vmatmul.mubr.bf16.gmra.mrb[0].mxu0 %v2307
    %v2357 = vpop.f32.mrb[0].mxu0
    %v2358 = vadd.f32 %v180, %v2357
    %v2359 = vpop.f32.mrb[0].mxu0
    %v2360 = vpop.f32.mrb[0].mxu0
    %v2361 = vadd.f32 %v181, %v2360
    %v2362 = vpop.f32.mrb[0].mxu0
    %2363 = vdwg.mxu0
    %v2364 = vsel %vm617, %v2350, -inf
    %2365 = vmax.xlane.f32.xlu0 %v2364
    %v2366 = vpop.xlane.xlu0 %2365
    %v2367 = vsel %vm617, %v2353, -inf
    %2368 = vmax.xlane.f32.xlu0 %v2367
    %v2369 = vpop.xlane.xlu0 %2368
    %v2370 = vsel %vm617, %v2358, -inf
    %2371 = vmax.xlane.f32.xlu0 %v2370
    %v2372 = vpop.xlane.xlu0 %2371
    %v2373 = vsel %vm617, %v2361, -inf
    %2374 = vmax.xlane.f32.xlu0 %v2373
    %v2375 = vpop.xlane.xlu0 %2374
    %v2376 = vsub.f32 %v2350, %v2366
    %v2377 = vsub.f32 %v2353, %v2369
    %v2378 = vsub.f32 %v2358, %v2372
    %v2379 = vsub.f32 %v2361, %v2375
    %v2380 = vmul.f32 %v2376, 1.442695
    %v2381 = vpow.pop %v2380
    %v2382 = vmul.f32 %v2377, 1.442695
    %v2383 = vpow.pop %v2382
    %v2384 = vmul.f32 %v2378, 1.442695
    %v2385 = vpow.pop %v2384
    %v2386 = vmul.f32 %v2379, 1.442695
    %v2387 = vpow.pop %v2386
    %v2388 = vsel %vm617, %v2381, 0.0
    %2389 = vadd.xlane.f32.xlu0 %v2388
    %v2390 = vpop.xlane.xlu0 %2389
    %v2391 = vsel %vm617, %v2383, 0.0
    %2392 = vadd.xlane.f32.xlu0 %v2391
    %v2393 = vpop.xlane.xlu0 %2392
    %v2394 = vsel %vm617, %v2385, 0.0
    %2395 = vadd.xlane.f32.xlu0 %v2394
    %v2396 = vpop.xlane.xlu0 %2395
    %v2397 = vsel %vm617, %v2387, 0.0
    %2398 = vadd.xlane.f32.xlu0 %v2397
    %v2399 = vpop.xlane.xlu0 %2398
    %v2400 = vpack.c.bf16 %v2383, %v2381
    %v2401 = vpack.c.bf16 %v2387, %v2385
    %v2403 = vsel %vm617, %v2400, 0
    %v2406 = vsel %vm617, %v2401, 0
    %2408 = vmatprep.subr.bf16.mxu0 0
    %2409 = vmatpush1.bf16.msra.mxu0 %v2301
    %2410 = vmatprep.subr.bf16.mxu0 0
    %2411 = vmatpush1.bf16.msra.mxu0 %v2302
    %2412 = vmatprep.subr.bf16.mxu0 0
    %2413 = vmatpush1.bf16.msra.mxu0 0
    %2414 = vmatprep.subr.bf16.mxu0 0
    %2415 = vmatpush1.bf16.msra.mxu0 0
    %2416 = vmatprep.subr.bf16.mxu0 0
    %2417 = vmatpush1.bf16.msra.mxu0 0
    %2418 = vmatprep.subr.bf16.mxu0 0
    %2419 = vmatpush1.bf16.msra.mxu0 0
    %2420 = vmatprep.subr.bf16.mxu0 0
    %2421 = vmatpush1.bf16.msra.mxu0 0
    %2422 = vmatprep.subr.bf16.mxu0 0
    %2423 = vmatpush1.bf16.msra.mxu0 0
    %2424 = vmatprep.subr.bf16.mxu0 0
    %2425 = vmatpush1.bf16.msra.mxu0 0
    %2426 = vmatprep.subr.bf16.mxu0 0
    %2427 = vmatpush1.bf16.msra.mxu0 0
    %2428 = vmatprep.subr.bf16.mxu0 0
    %2429 = vmatpush1.bf16.msra.mxu0 0
    %2430 = vmatprep.subr.bf16.mxu0 0
    %2431 = vmatpush1.bf16.msra.mxu0 0
    %2432 = vmatprep.subr.bf16.mxu0 0
    %2433 = vmatpush1.bf16.msra.mxu0 0
    %2434 = vmatprep.subr.bf16.mxu0 0
    %2435 = vmatpush1.bf16.msra.mxu0 0
    %2436 = vmatprep.subr.bf16.mxu0 0
    %2437 = vmatpush1.bf16.msra.mxu0 0
    %2438 = vmatprep.subr.bf16.mxu0 0
    %2439 = vmatpush1.bf16.msra.mxu0 0
    %2440 = vmatprep.mubr.bf16.mxu0 0
    %2441 = vmatmul.mubr.bf16.gmra.mrb[0].mxu0 %v2403
    %v2442 = vpop.f32.mrb[0].mxu0
    %v2443 = vadd.f32 0.0, %v2442
    %v2444 = vpop.f32.mrb[0].mxu0
    %v2445 = vpop.f32.mrb[0].mxu0
    %v2446 = vadd.f32 0.0, %v2445
    %v2447 = vpop.f32.mrb[0].mxu0
    %2448 = vmatprep.mubr.bf16.mxu0 0
    %2449 = vmatmul.mubr.bf16.gmra.mrb[0].mxu0 %v2406
    %v2450 = vpop.f32.mrb[0].mxu0
    %v2451 = vadd.f32 0.0, %v2450
    %v2452 = vpop.f32.mrb[0].mxu0
    %v2453 = vpop.f32.mrb[0].mxu0
    %v2454 = vadd.f32 0.0, %v2453
    %v2455 = vpop.f32.mrb[0].mxu0
    %2456 = vdwg.mxu0
    %v2457 = vrcp.pop %v2390
    %v2458 = vrcp.pop %v2393
    %v2459 = vrcp.pop %v2396
    %v2460 = vrcp.pop %v2399
    %v2461 = vmul.f32 %v2443, %v2457
    %v2462 = vmul.f32 %v2446, %v2458
    %v2463 = vmul.f32 %v2451, %v2459
    %v2464 = vmul.f32 %v2454, %v2460
    %2467 = vrot.lane.b32.xlu0 %v2297, 96
    %v2468 = vpop.permute.xlu0 %2467
    %2469 = vrot.lane.b32.xlu0 %v2298, 96
    %v2470 = vpop.permute.xlu0 %2469
    %2473 = vrot.lane.b32.xlu0 %v2299, 96
    %v2474 = vpop.permute.xlu0 %2473
    %2475 = vrot.lane.b32.xlu0 %v2300, 96
    %v2476 = vpop.permute.xlu0 %2475
    %v2478 = vsel %vm617, %v2468, 0
    %v2481 = vsel %vm617, %v2470, 0
    %v2484 = vsel %vm617, %v2474, 0
    %v2487 = vsel %vm617, %v2476, 0
    %2489 = vmatprep.subr.bf16.mxu0 0
    %2490 = vmatpush1.bf16.xpose.msra.mxu0 %v2484
    %2491 = vmatprep.subr.bf16.mxu0 0
    %2492 = vmatpush1.bf16.xpose.msra.mxu0 %v2487
    %2493 = vmatprep.subr.bf16.mxu0 0
    %2494 = vmatpush1.bf16.xpose.msra.mxu0 0
    %2495 = vmatprep.subr.bf16.mxu0 0
    %2496 = vmatpush1.bf16.xpose.msra.mxu0 0
    %2497 = vmatprep.subr.bf16.mxu0 0
    %2498 = vmatpush1.bf16.xpose.msra.mxu0 0
    %2499 = vmatprep.subr.bf16.mxu0 0
    %2500 = vmatpush1.bf16.xpose.msra.mxu0 0
    %2501 = vmatprep.subr.bf16.mxu0 0
    %2502 = vmatpush1.bf16.xpose.msra.mxu0 0
    %2503 = vmatprep.subr.bf16.mxu0 0
    %2504 = vmatpush1.bf16.xpose.msra.mxu0 0
    %2505 = vmatprep.subr.bf16.mxu0 0
    %2506 = vmatpush1.bf16.xpose.msra.mxu0 0
    %2507 = vmatprep.subr.bf16.mxu0 0
    %2508 = vmatpush1.bf16.xpose.msra.mxu0 0
    %2509 = vmatprep.subr.bf16.mxu0 0
    %2510 = vmatpush1.bf16.xpose.msra.mxu0 0
    %2511 = vmatprep.subr.bf16.mxu0 0
    %2512 = vmatpush1.bf16.xpose.msra.mxu0 0
    %2513 = vmatprep.subr.bf16.mxu0 0
    %2514 = vmatpush1.bf16.xpose.msra.mxu0 0
    %2515 = vmatprep.subr.bf16.mxu0 0
    %2516 = vmatpush1.bf16.xpose.msra.mxu0 0
    %2517 = vmatprep.subr.bf16.mxu0 0
    %2518 = vmatpush1.bf16.xpose.msra.mxu0 0
    %2519 = vmatprep.subr.bf16.mxu0 0
    %2520 = vmatpush1.bf16.xpose.msra.mxu0 0
    %2521 = vmatprep.mubr.bf16.mxu0 0
    %2522 = vmatmul.mubr.bf16.gmra.mrb[0].mxu0 %v2478
    %v2523 = vpop.f32.mrb[0].mxu0
    %v2524 = vadd.f32 %v178, %v2523
    %v2525 = vpop.f32.mrb[0].mxu0
    %v2526 = vpop.f32.mrb[0].mxu0
    %v2527 = vadd.f32 %v179, %v2526
    %v2528 = vpop.f32.mrb[0].mxu0
    %2529 = vmatprep.mubr.bf16.mxu0 0
    %2530 = vmatmul.mubr.bf16.gmra.mrb[0].mxu0 %v2481
    %v2531 = vpop.f32.mrb[0].mxu0
    %v2532 = vadd.f32 %v180, %v2531
    %v2533 = vpop.f32.mrb[0].mxu0
    %v2534 = vpop.f32.mrb[0].mxu0
    %v2535 = vadd.f32 %v181, %v2534
    %v2536 = vpop.f32.mrb[0].mxu0
    %2537 = vdwg.mxu0
    %v2538 = vsel %vm617, %v2524, -inf
    %2539 = vmax.xlane.f32.xlu0 %v2538
    %v2540 = vpop.xlane.xlu0 %2539
    %v2541 = vsel %vm617, %v2527, -inf
    %2542 = vmax.xlane.f32.xlu0 %v2541
    %v2543 = vpop.xlane.xlu0 %2542
    %v2544 = vsel %vm617, %v2532, -inf
    %2545 = vmax.xlane.f32.xlu0 %v2544
    %v2546 = vpop.xlane.xlu0 %2545
    %v2547 = vsel %vm617, %v2535, -inf
    %2548 = vmax.xlane.f32.xlu0 %v2547
    %v2549 = vpop.xlane.xlu0 %2548
    %v2550 = vsub.f32 %v2524, %v2540
    %v2551 = vsub.f32 %v2527, %v2543
    %v2552 = vsub.f32 %v2532, %v2546
    %v2553 = vsub.f32 %v2535, %v2549
    %v2554 = vmul.f32 %v2550, 1.442695
    %v2555 = vpow.pop %v2554
    %v2556 = vmul.f32 %v2551, 1.442695
    %v2557 = vpow.pop %v2556
    %v2558 = vmul.f32 %v2552, 1.442695
    %v2559 = vpow.pop %v2558
    %v2560 = vmul.f32 %v2553, 1.442695
    %v2561 = vpow.pop %v2560
    %v2562 = vsel %vm617, %v2555, 0.0
    %2563 = vadd.xlane.f32.xlu0 %v2562
    %v2564 = vpop.xlane.xlu0 %2563
    %v2565 = vsel %vm617, %v2557, 0.0
    %2566 = vadd.xlane.f32.xlu0 %v2565
    %v2567 = vpop.xlane.xlu0 %2566
    %v2568 = vsel %vm617, %v2559, 0.0
    %2569 = vadd.xlane.f32.xlu0 %v2568
    %v2570 = vpop.xlane.xlu0 %2569
    %v2571 = vsel %vm617, %v2561, 0.0
    %2572 = vadd.xlane.f32.xlu0 %v2571
    %v2573 = vpop.xlane.xlu0 %2572
    %v2574 = vpack.c.bf16 %v2557, %v2555
    %v2575 = vpack.c.bf16 %v2561, %v2559
    %2578 = vrot.lane.b32.xlu0 %v2301, 96
    %v2579 = vpop.permute.xlu0 %2578
    %2580 = vrot.lane.b32.xlu0 %v2302, 96
    %v2581 = vpop.permute.xlu0 %2580
    %v2585 = vsel %vm617, %v2574, 0
    %v2588 = vsel %vm617, %v2575, 0
    %2590 = vmatprep.subr.bf16.mxu0 0
    %2591 = vmatpush1.bf16.msra.mxu0 %v2579
    %2592 = vmatprep.subr.bf16.mxu0 0
    %2593 = vmatpush1.bf16.msra.mxu0 %v2581
    %2594 = vmatprep.subr.bf16.mxu0 0
    %2595 = vmatpush1.bf16.msra.mxu0 0
    %2596 = vmatprep.subr.bf16.mxu0 0
    %2597 = vmatpush1.bf16.msra.mxu0 0
    %2598 = vmatprep.subr.bf16.mxu0 0
    %2599 = vmatpush1.bf16.msra.mxu0 0
    %2600 = vmatprep.subr.bf16.mxu0 0
    %2601 = vmatpush1.bf16.msra.mxu0 0
    %2602 = vmatprep.subr.bf16.mxu0 0
    %2603 = vmatpush1.bf16.msra.mxu0 0
    %2604 = vmatprep.subr.bf16.mxu0 0
    %2605 = vmatpush1.bf16.msra.mxu0 0
    %2606 = vmatprep.subr.bf16.mxu0 0
    %2607 = vmatpush1.bf16.msra.mxu0 0
    %2608 = vmatprep.subr.bf16.mxu0 0
    %2609 = vmatpush1.bf16.msra.mxu0 0
    %2610 = vmatprep.subr.bf16.mxu0 0
    %2611 = vmatpush1.bf16.msra.mxu0 0
    %2612 = vmatprep.subr.bf16.mxu0 0
    %2613 = vmatpush1.bf16.msra.mxu0 0
    %2614 = vmatprep.subr.bf16.mxu0 0
    %2615 = vmatpush1.bf16.msra.mxu0 0
    %2616 = vmatprep.subr.bf16.mxu0 0
    %2617 = vmatpush1.bf16.msra.mxu0 0
    %2618 = vmatprep.subr.bf16.mxu0 0
    %2619 = vmatpush1.bf16.msra.mxu0 0
    %2620 = vmatprep.subr.bf16.mxu0 0
    %2621 = vmatpush1.bf16.msra.mxu0 0
    %2622 = vmatprep.mubr.bf16.mxu0 0
    %2623 = vmatmul.mubr.bf16.gmra.mrb[0].mxu0 %v2585
    %v2624 = vpop.f32.mrb[0].mxu0
    %v2625 = vadd.f32 0.0, %v2624
    %v2626 = vpop.f32.mrb[0].mxu0
    %v2627 = vpop.f32.mrb[0].mxu0
    %v2628 = vadd.f32 0.0, %v2627
    %v2629 = vpop.f32.mrb[0].mxu0
    %2630 = vmatprep.mubr.bf16.mxu0 0
    %2631 = vmatmul.mubr.bf16.gmra.mrb[0].mxu0 %v2588
    %v2632 = vpop.f32.mrb[0].mxu0
    %v2633 = vadd.f32 0.0, %v2632
    %v2634 = vpop.f32.mrb[0].mxu0
    %v2635 = vpop.f32.mrb[0].mxu0
    %v2636 = vadd.f32 0.0, %v2635
    %v2637 = vpop.f32.mrb[0].mxu0
    %2638 = vdwg.mxu0
    %v2639 = vrcp.pop %v2564
    %v2640 = vrcp.pop %v2567
    %v2641 = vrcp.pop %v2570
    %v2642 = vrcp.pop %v2573
    %v2643 = vmul.f32 %v2625, %v2639
    %v2644 = vmul.f32 %v2628, %v2640
    %v2645 = vmul.f32 %v2633, %v2641
    %v2646 = vmul.f32 %v2636, %v2642
    %2647 = vrot.lane.b32.xlu0 %v2297, 64
    %v2648 = vpop.permute.xlu0 %2647
    %2649 = vrot.lane.b32.xlu0 %v2298, 64
    %v2650 = vpop.permute.xlu0 %2649
    %2651 = vrot.lane.b32.xlu0 %v2299, 64
    %v2652 = vpop.permute.xlu0 %2651
    %2653 = vrot.lane.b32.xlu0 %v2300, 64
    %v2654 = vpop.permute.xlu0 %2653
    %v2656 = vsel %vm617, %v2648, 0
    %v2659 = vsel %vm617, %v2650, 0
    %v2662 = vsel %vm617, %v2652, 0
    %v2665 = vsel %vm617, %v2654, 0
    %2667 = vmatprep.subr.bf16.mxu0 0
    %2668 = vmatpush1.bf16.xpose.msra.mxu0 %v2662
    %2669 = vmatprep.subr.bf16.mxu0 0
    %2670 = vmatpush1.bf16.xpose.msra.mxu0 %v2665
    %2671 = vmatprep.subr.bf16.mxu0 0
    %2672 = vmatpush1.bf16.xpose.msra.mxu0 0
    %2673 = vmatprep.subr.bf16.mxu0 0
    %2674 = vmatpush1.bf16.xpose.msra.mxu0 0
    %2675 = vmatprep.subr.bf16.mxu0 0
    %2676 = vmatpush1.bf16.xpose.msra.mxu0 0
    %2677 = vmatprep.subr.bf16.mxu0 0
    %2678 = vmatpush1.bf16.xpose.msra.mxu0 0
    %2679 = vmatprep.subr.bf16.mxu0 0
    %2680 = vmatpush1.bf16.xpose.msra.mxu0 0
    %2681 = vmatprep.subr.bf16.mxu0 0
    %2682 = vmatpush1.bf16.xpose.msra.mxu0 0
    %2683 = vmatprep.subr.bf16.mxu0 0
    %2684 = vmatpush1.bf16.xpose.msra.mxu0 0
    %2685 = vmatprep.subr.bf16.mxu0 0
    %2686 = vmatpush1.bf16.xpose.msra.mxu0 0
    %2687 = vmatprep.subr.bf16.mxu0 0
    %2688 = vmatpush1.bf16.xpose.msra.mxu0 0
    %2689 = vmatprep.subr.bf16.mxu0 0
    %2690 = vmatpush1.bf16.xpose.msra.mxu0 0
    %2691 = vmatprep.subr.bf16.mxu0 0
    %2692 = vmatpush1.bf16.xpose.msra.mxu0 0
    %2693 = vmatprep.subr.bf16.mxu0 0
    %2694 = vmatpush1.bf16.xpose.msra.mxu0 0
    %2695 = vmatprep.subr.bf16.mxu0 0
    %2696 = vmatpush1.bf16.xpose.msra.mxu0 0
    %2697 = vmatprep.subr.bf16.mxu0 0
    %2698 = vmatpush1.bf16.xpose.msra.mxu0 0
    %2699 = vmatprep.mubr.bf16.mxu0 0
    %2700 = vmatmul.mubr.bf16.gmra.mrb[0].mxu0 %v2656
    %v2701 = vpop.f32.mrb[0].mxu0
    %v2702 = vadd.f32 %v178, %v2701
    %v2703 = vpop.f32.mrb[0].mxu0
    %v2704 = vpop.f32.mrb[0].mxu0
    %v2705 = vadd.f32 %v179, %v2704
    %v2706 = vpop.f32.mrb[0].mxu0
    %2707 = vmatprep.mubr.bf16.mxu0 0
    %2708 = vmatmul.mubr.bf16.gmra.mrb[0].mxu0 %v2659
    %v2709 = vpop.f32.mrb[0].mxu0
    %v2710 = vadd.f32 %v180, %v2709
    %v2711 = vpop.f32.mrb[0].mxu0
    %v2712 = vpop.f32.mrb[0].mxu0
    %v2713 = vadd.f32 %v181, %v2712
    %v2714 = vpop.f32.mrb[0].mxu0
    %2715 = vdwg.mxu0
    %v2716 = vsel %vm617, %v2702, -inf
    %2717 = vmax.xlane.f32.xlu0 %v2716
    %v2718 = vpop.xlane.xlu0 %2717
    %v2719 = vsel %vm617, %v2705, -inf
    %2720 = vmax.xlane.f32.xlu0 %v2719
    %v2721 = vpop.xlane.xlu0 %2720
    %v2722 = vsel %vm617, %v2710, -inf
    %2723 = vmax.xlane.f32.xlu0 %v2722
    %v2724 = vpop.xlane.xlu0 %2723
    %v2725 = vsel %vm617, %v2713, -inf
    %2726 = vmax.xlane.f32.xlu0 %v2725
    %v2727 = vpop.xlane.xlu0 %2726
    %v2728 = vsub.f32 %v2702, %v2718
    %v2729 = vsub.f32 %v2705, %v2721
    %v2730 = vsub.f32 %v2710, %v2724
    %v2731 = vsub.f32 %v2713, %v2727
    %v2732 = vmul.f32 %v2728, 1.442695
    %v2733 = vpow.pop %v2732
    %v2734 = vmul.f32 %v2729, 1.442695
    %v2735 = vpow.pop %v2734
    %v2736 = vmul.f32 %v2730, 1.442695
    %v2737 = vpow.pop %v2736
    %v2738 = vmul.f32 %v2731, 1.442695
    %v2739 = vpow.pop %v2738
    %v2740 = vsel %vm617, %v2733, 0.0
    %2741 = vadd.xlane.f32.xlu0 %v2740
    %v2742 = vpop.xlane.xlu0 %2741
    %v2743 = vsel %vm617, %v2735, 0.0
    %2744 = vadd.xlane.f32.xlu0 %v2743
    %v2745 = vpop.xlane.xlu0 %2744
    %v2746 = vsel %vm617, %v2737, 0.0
    %2747 = vadd.xlane.f32.xlu0 %v2746
    %v2748 = vpop.xlane.xlu0 %2747
    %v2749 = vsel %vm617, %v2739, 0.0
    %2750 = vadd.xlane.f32.xlu0 %v2749
    %v2751 = vpop.xlane.xlu0 %2750
    %v2752 = vpack.c.bf16 %v2735, %v2733
    %v2753 = vpack.c.bf16 %v2739, %v2737
    %2754 = vrot.lane.b32.xlu0 %v2301, 64
    %v2755 = vpop.permute.xlu0 %2754
    %2756 = vrot.lane.b32.xlu0 %v2302, 64
    %v2757 = vpop.permute.xlu0 %2756
    %v2761 = vsel %vm617, %v2752, 0
    %v2764 = vsel %vm617, %v2753, 0
    %2766 = vmatprep.subr.bf16.mxu0 0
    %2767 = vmatpush1.bf16.msra.mxu0 %v2755
    %2768 = vmatprep.subr.bf16.mxu0 0
    %2769 = vmatpush1.bf16.msra.mxu0 %v2757
    %2770 = vmatprep.subr.bf16.mxu0 0
    %2771 = vmatpush1.bf16.msra.mxu0 0
    %2772 = vmatprep.subr.bf16.mxu0 0
    %2773 = vmatpush1.bf16.msra.mxu0 0
    %2774 = vmatprep.subr.bf16.mxu0 0
    %2775 = vmatpush1.bf16.msra.mxu0 0
    %2776 = vmatprep.subr.bf16.mxu0 0
    %2777 = vmatpush1.bf16.msra.mxu0 0
    %2778 = vmatprep.subr.bf16.mxu0 0
    %2779 = vmatpush1.bf16.msra.mxu0 0
    %2780 = vmatprep.subr.bf16.mxu0 0
    %2781 = vmatpush1.bf16.msra.mxu0 0
    %2782 = vmatprep.subr.bf16.mxu0 0
    %2783 = vmatpush1.bf16.msra.mxu0 0
    %2784 = vmatprep.subr.bf16.mxu0 0
    %2785 = vmatpush1.bf16.msra.mxu0 0
    %2786 = vmatprep.subr.bf16.mxu0 0
    %2787 = vmatpush1.bf16.msra.mxu0 0
    %2788 = vmatprep.subr.bf16.mxu0 0
    %2789 = vmatpush1.bf16.msra.mxu0 0
    %2790 = vmatprep.subr.bf16.mxu0 0
    %2791 = vmatpush1.bf16.msra.mxu0 0
    %2792 = vmatprep.subr.bf16.mxu0 0
    %2793 = vmatpush1.bf16.msra.mxu0 0
    %2794 = vmatprep.subr.bf16.mxu0 0
    %2795 = vmatpush1.bf16.msra.mxu0 0
    %2796 = vmatprep.subr.bf16.mxu0 0
    %2797 = vmatpush1.bf16.msra.mxu0 0
    %2798 = vmatprep.mubr.bf16.mxu0 0
    %2799 = vmatmul.mubr.bf16.gmra.mrb[0].mxu0 %v2761
    %v2800 = vpop.f32.mrb[0].mxu0
    %v2801 = vadd.f32 0.0, %v2800
    %v2802 = vpop.f32.mrb[0].mxu0
    %v2803 = vpop.f32.mrb[0].mxu0
    %v2804 = vadd.f32 0.0, %v2803
    %v2805 = vpop.f32.mrb[0].mxu0
    %2806 = vmatprep.mubr.bf16.mxu0 0
    %2807 = vmatmul.mubr.bf16.gmra.mrb[0].mxu0 %v2764
    %v2808 = vpop.f32.mrb[0].mxu0
    %v2809 = vadd.f32 0.0, %v2808
    %v2810 = vpop.f32.mrb[0].mxu0
    %v2811 = vpop.f32.mrb[0].mxu0
    %v2812 = vadd.f32 0.0, %v2811
    %v2813 = vpop.f32.mrb[0].mxu0
    %2814 = vdwg.mxu0
    %v2815 = vrcp.pop %v2742
    %v2816 = vrcp.pop %v2745
    %v2817 = vrcp.pop %v2748
    %v2818 = vrcp.pop %v2751
    %v2819 = vmul.f32 %v2801, %v2815
    %v2820 = vmul.f32 %v2804, %v2816
    %v2821 = vmul.f32 %v2809, %v2817
    %v2822 = vmul.f32 %v2812, %v2818
    %2823 = vrot.lane.b32.xlu0 %v2297, 32
    %v2824 = vpop.permute.xlu0 %2823
    %2825 = vrot.lane.b32.xlu0 %v2298, 32
    %v2826 = vpop.permute.xlu0 %2825
    %2827 = vrot.lane.b32.xlu0 %v2299, 32
    %v2828 = vpop.permute.xlu0 %2827
    %2829 = vrot.lane.b32.xlu0 %v2300, 32
    %v2830 = vpop.permute.xlu0 %2829
    %v2832 = vsel %vm617, %v2824, 0
    %v2835 = vsel %vm617, %v2826, 0
    %v2838 = vsel %vm617, %v2828, 0
    %v2841 = vsel %vm617, %v2830, 0
    %2843 = vmatprep.subr.bf16.mxu0 0
    %2844 = vmatpush1.bf16.xpose.msra.mxu0 %v2838
    %2845 = vmatprep.subr.bf16.mxu0 0
    %2846 = vmatpush1.bf16.xpose.msra.mxu0 %v2841
    %2847 = vmatprep.subr.bf16.mxu0 0
    %2848 = vmatpush1.bf16.xpose.msra.mxu0 0
    %2849 = vmatprep.subr.bf16.mxu0 0
    %2850 = vmatpush1.bf16.xpose.msra.mxu0 0
    %2851 = vmatprep.subr.bf16.mxu0 0
    %2852 = vmatpush1.bf16.xpose.msra.mxu0 0
    %2853 = vmatprep.subr.bf16.mxu0 0
    %2854 = vmatpush1.bf16.xpose.msra.mxu0 0
    %2855 = vmatprep.subr.bf16.mxu0 0
    %2856 = vmatpush1.bf16.xpose.msra.mxu0 0
    %2857 = vmatprep.subr.bf16.mxu0 0
    %2858 = vmatpush1.bf16.xpose.msra.mxu0 0
    %2859 = vmatprep.subr.bf16.mxu0 0
    %2860 = vmatpush1.bf16.xpose.msra.mxu0 0
    %2861 = vmatprep.subr.bf16.mxu0 0
    %2862 = vmatpush1.bf16.xpose.msra.mxu0 0
    %2863 = vmatprep.subr.bf16.mxu0 0
    %2864 = vmatpush1.bf16.xpose.msra.mxu0 0
    %2865 = vmatprep.subr.bf16.mxu0 0
    %2866 = vmatpush1.bf16.xpose.msra.mxu0 0
    %2867 = vmatprep.subr.bf16.mxu0 0
    %2868 = vmatpush1.bf16.xpose.msra.mxu0 0
    %2869 = vmatprep.subr.bf16.mxu0 0
    %2870 = vmatpush1.bf16.xpose.msra.mxu0 0
    %2871 = vmatprep.subr.bf16.mxu0 0
    %2872 = vmatpush1.bf16.xpose.msra.mxu0 0
    %2873 = vmatprep.subr.bf16.mxu0 0
    %2874 = vmatpush1.bf16.xpose.msra.mxu0 0
    %2875 = vmatprep.mubr.bf16.mxu0 0
    %2876 = vmatmul.mubr.bf16.gmra.mrb[0].mxu0 %v2832
    %v2877 = vpop.f32.mrb[0].mxu0
    %v2878 = vadd.f32 %v178, %v2877
    %v2879 = vpop.f32.mrb[0].mxu0
    %v2880 = vpop.f32.mrb[0].mxu0
    %v2881 = vadd.f32 %v179, %v2880
    %v2882 = vpop.f32.mrb[0].mxu0
    %2883 = vmatprep.mubr.bf16.mxu0 0
    %2884 = vmatmul.mubr.bf16.gmra.mrb[0].mxu0 %v2835
    %v2885 = vpop.f32.mrb[0].mxu0
    %v2886 = vadd.f32 %v180, %v2885
    %v2887 = vpop.f32.mrb[0].mxu0
    %v2888 = vpop.f32.mrb[0].mxu0
    %v2889 = vadd.f32 %v181, %v2888
    %v2890 = vpop.f32.mrb[0].mxu0
    %2891 = vdwg.mxu0
    %v2892 = vsel %vm617, %v2878, -inf
    %2893 = vmax.xlane.f32.xlu0 %v2892
    %v2894 = vpop.xlane.xlu0 %2893
    %v2895 = vsel %vm617, %v2881, -inf
    %2896 = vmax.xlane.f32.xlu0 %v2895
    %v2897 = vpop.xlane.xlu0 %2896
    %v2898 = vsel %vm617, %v2886, -inf
    %2899 = vmax.xlane.f32.xlu0 %v2898
    %v2900 = vpop.xlane.xlu0 %2899
    %v2901 = vsel %vm617, %v2889, -inf
    %2902 = vmax.xlane.f32.xlu0 %v2901
    %v2903 = vpop.xlane.xlu0 %2902
    %v2904 = vsub.f32 %v2878, %v2894
    %v2905 = vsub.f32 %v2881, %v2897
    %v2906 = vsub.f32 %v2886, %v2900
    %v2907 = vsub.f32 %v2889, %v2903
    %v2908 = vmul.f32 %v2904, 1.442695
    %v2909 = vpow.pop %v2908
    %v2910 = vmul.f32 %v2905, 1.442695
    %v2911 = vpow.pop %v2910
    %v2912 = vmul.f32 %v2906, 1.442695
    %v2913 = vpow.pop %v2912
    %v2914 = vmul.f32 %v2907, 1.442695
    %v2915 = vpow.pop %v2914
    %v2916 = vsel %vm617, %v2909, 0.0
    %2917 = vadd.xlane.f32.xlu0 %v2916
    %v2918 = vpop.xlane.xlu0 %2917
    %v2919 = vsel %vm617, %v2911, 0.0
    %2920 = vadd.xlane.f32.xlu0 %v2919
    %v2921 = vpop.xlane.xlu0 %2920
    %v2922 = vsel %vm617, %v2913, 0.0
    %2923 = vadd.xlane.f32.xlu0 %v2922
    %v2924 = vpop.xlane.xlu0 %2923
    %v2925 = vsel %vm617, %v2915, 0.0
    %2926 = vadd.xlane.f32.xlu0 %v2925
    %v2927 = vpop.xlane.xlu0 %2926
    %v2928 = vpack.c.bf16 %v2911, %v2909
    %v2929 = vpack.c.bf16 %v2915, %v2913
    %2930 = vrot.lane.b32.xlu0 %v2301, 32
    %v2931 = vpop.permute.xlu0 %2930
    %2932 = vrot.lane.b32.xlu0 %v2302, 32
    %v2933 = vpop.permute.xlu0 %2932
    %v2937 = vsel %vm617, %v2928, 0
    %v2940 = vsel %vm617, %v2929, 0
    %2942 = vmatprep.subr.bf16.mxu0 0
    %2943 = vmatpush1.bf16.msra.mxu0 %v2931
    %2944 = vmatprep.subr.bf16.mxu0 0
    %2945 = vmatpush1.bf16.msra.mxu0 %v2933
    %2946 = vmatprep.subr.bf16.mxu0 0
    %2947 = vmatpush1.bf16.msra.mxu0 0
    %2948 = vmatprep.subr.bf16.mxu0 0
    %2949 = vmatpush1.bf16.msra.mxu0 0
    %2950 = vmatprep.subr.bf16.mxu0 0
    %2951 = vmatpush1.bf16.msra.mxu0 0
    %2952 = vmatprep.subr.bf16.mxu0 0
    %2953 = vmatpush1.bf16.msra.mxu0 0
    %2954 = vmatprep.subr.bf16.mxu0 0
    %2955 = vmatpush1.bf16.msra.mxu0 0
    %2956 = vmatprep.subr.bf16.mxu0 0
    %2957 = vmatpush1.bf16.msra.mxu0 0
    %2958 = vmatprep.subr.bf16.mxu0 0
    %2959 = vmatpush1.bf16.msra.mxu0 0
    %2960 = vmatprep.subr.bf16.mxu0 0
    %2961 = vmatpush1.bf16.msra.mxu0 0
    %2962 = vmatprep.subr.bf16.mxu0 0
    %2963 = vmatpush1.bf16.msra.mxu0 0
    %2964 = vmatprep.subr.bf16.mxu0 0
    %2965 = vmatpush1.bf16.msra.mxu0 0
    %2966 = vmatprep.subr.bf16.mxu0 0
    %2967 = vmatpush1.bf16.msra.mxu0 0
    %2968 = vmatprep.subr.bf16.mxu0 0
    %2969 = vmatpush1.bf16.msra.mxu0 0
    %2970 = vmatprep.subr.bf16.mxu0 0
    %2971 = vmatpush1.bf16.msra.mxu0 0
    %2972 = vmatprep.subr.bf16.mxu0 0
    %2973 = vmatpush1.bf16.msra.mxu0 0
    %2974 = vmatprep.mubr.bf16.mxu0 0
    %2975 = vmatmul.mubr.bf16.gmra.mrb[0].mxu0 %v2937
    %v2976 = vpop.f32.mrb[0].mxu0
    %v2977 = vadd.f32 0.0, %v2976
    %v2978 = vpop.f32.mrb[0].mxu0
    %v2979 = vpop.f32.mrb[0].mxu0
    %v2980 = vadd.f32 0.0, %v2979
    %v2981 = vpop.f32.mrb[0].mxu0
    %2982 = vmatprep.mubr.bf16.mxu0 0
    %2983 = vmatmul.mubr.bf16.gmra.mrb[0].mxu0 %v2940
    %v2984 = vpop.f32.mrb[0].mxu0
    %v2985 = vadd.f32 0.0, %v2984
    %v2986 = vpop.f32.mrb[0].mxu0
    %v2987 = vpop.f32.mrb[0].mxu0
    %v2988 = vadd.f32 0.0, %v2987
    %v2989 = vpop.f32.mrb[0].mxu0
    %2990 = vdwg.mxu0
    %v2991 = vrcp.pop %v2918
    %v2992 = vrcp.pop %v2921
    %v2993 = vrcp.pop %v2924
    %v2994 = vrcp.pop %v2927
    %v2995 = vmul.f32 %v2977, %v2991
    %v2996 = vmul.f32 %v2980, %v2992
    %v2997 = vmul.f32 %v2985, %v2993
    %v2998 = vmul.f32 %v2988, %v2994
    %3003 = vrot.lane.b32.xlu0 %v2643, 32
    %v3004 = vpop.permute.xlu0 %3003
    %3005 = vrot.lane.b32.xlu0 %v2644, 32
    %v3006 = vpop.permute.xlu0 %3005
    %3007 = vrot.lane.b32.xlu0 %v2645, 32
    %v3008 = vpop.permute.xlu0 %3007
    %3009 = vrot.lane.b32.xlu0 %v2646, 32
    %v3010 = vpop.permute.xlu0 %3009
    %3019 = vrot.lane.b32.xlu0 %v2819, 64
    %v3020 = vpop.permute.xlu0 %3019
    %3021 = vrot.lane.b32.xlu0 %v2820, 64
    %v3022 = vpop.permute.xlu0 %3021
    %3023 = vrot.lane.b32.xlu0 %v2821, 64
    %v3024 = vpop.permute.xlu0 %3023
    %3025 = vrot.lane.b32.xlu0 %v2822, 64
    %v3026 = vpop.permute.xlu0 %3025
    %3035 = vrot.lane.b32.xlu0 %v2995, 96
    %v3036 = vpop.permute.xlu0 %3035
    %3037 = vrot.lane.b32.xlu0 %v2996, 96
    %v3038 = vpop.permute.xlu0 %3037
    %3039 = vrot.lane.b32.xlu0 %v2997, 96
    %v3040 = vpop.permute.xlu0 %3039
    %3041 = vrot.lane.b32.xlu0 %v2998, 96
    %v3042 = vpop.permute.xlu0 %3041
    %v3047 = vsel %vm617, %v2461, %v3004
    %v3048 = vsel %vm617, %v2462, %v3006
    %v3049 = vsel %vm617, %v2463, %v3008
    %v3050 = vsel %vm617, %v2464, %v3010
    %v3051 = vsel %vm1366, %v3047, %v3020
    %v3052 = vsel %vm1366, %v3048, %v3022
    %v3053 = vsel %vm1366, %v3049, %v3024
    %v3054 = vsel %vm1366, %v3050, %v3026
    %v3055 = vsel %vm1371, %v3051, %v3036
    %v3056 = vsel %vm1371, %v3052, %v3038
    %v3057 = vsel %vm1371, %v3053, %v3040
    %v3058 = vsel %vm1371, %v3054, %v3042
    %v3059 = vpack.c.bf16 %v3056, %v3055
    %v3060 = vpack.c.bf16 %v3058, %v3057
    %s3061 = scalar_lea.vmem [#allocation13], 64
    %v3062 = vld [vmem:[%s3061] sm:$0xf]
    %v3063 = vld [vmem:[%s3061 + $0x4] sm:$0xf]
    %v3064 = vld [vmem:[%s3061 + $0x8] sm:$0xf]
    %v3065 = vld [vmem:[%s3061 + $0xc] sm:$0xf]
    %v3066 = vld [vmem:[%s3061 + $0x10] sm:$0xf]
    %v3067 = vld [vmem:[%s3061 + $0x14] sm:$0xf]
    %v3068 = vld [vmem:[%s3061 + $0x18] sm:$0xf]
    %v3069 = vld [vmem:[%s3061 + $0x1c] sm:$0xf]
    %v3070 = vld [vmem:[%s3061 + $0x20] sm:$0xf]
    %v3071 = vld [vmem:[%s3061 + $0x24] sm:$0xf]
    %v3072 = vld [vmem:[%s3061 + $0x28] sm:$0xf]
    %v3073 = vld [vmem:[%s3061 + $0x2c] sm:$0xf]
    %v3074 = vld [vmem:[%s3061 + $0x30] sm:$0xf]
    %v3075 = vld [vmem:[%s3061 + $0x34] sm:$0xf]
    %v3076 = vld [vmem:[%s3061 + $0x38] sm:$0xf]
    %v3077 = vld [vmem:[%s3061 + $0x3c] sm:$0xf]
    %s3078 = scalar_lea.vmem %s8, 1
    %v3079 = vld [vmem:[%s3078] sm:$0x1]
    %v3081 = vlaneseq
    %v3082 = vshrl.u32 %v3081, 7
    %v3083 = vsub.s32 0, %v3082
    %v3084 = vrot.slane %v3079, %v3083
    %v3102 = vunpack.c.l.b16 %v3062
    %v3103 = vunpack.c.l.b16 %v3063
    %v3104 = vunpack.c.l.b16 %v3064
    %v3105 = vunpack.c.l.b16 %v3065
    %v3106 = vunpack.c.l.b16 %v3066
    %v3107 = vunpack.c.l.b16 %v3067
    %v3108 = vunpack.c.l.b16 %v3068
    %v3109 = vunpack.c.l.b16 %v3069
    %v3110 = vunpack.c.l.b16 %v3070
    %v3111 = vunpack.c.l.b16 %v3071
    %v3112 = vunpack.c.l.b16 %v3072
    %v3113 = vunpack.c.l.b16 %v3073
    %v3114 = vunpack.c.l.b16 %v3074
    %v3115 = vunpack.c.l.b16 %v3075
    %v3116 = vunpack.c.l.b16 %v3076
    %v3117 = vunpack.c.l.b16 %v3077
    %v3118 = vpack.c.b16 %v3103, %v3102
    %v3119 = vpack.c.b16 %v3105, %v3104
    %v3120 = vpack.c.b16 %v3107, %v3106
    %v3121 = vpack.c.b16 %v3109, %v3108
    %v3122 = vpack.c.b16 %v3111, %v3110
    %v3123 = vpack.c.b16 %v3113, %v3112
    %v3124 = vpack.c.b16 %v3115, %v3114
    %v3125 = vpack.c.b16 %v3117, %v3116
    %3134 = vmatprep.subr.bf16.mxu0 0
    %3135 = vmatpush1.bf16.msra.mxu0 %v3118
    %3136 = vmatprep.subr.bf16.mxu0 0
    %3137 = vmatpush1.bf16.msra.mxu0 %v3119
    %3138 = vmatprep.subr.bf16.mxu0 0
    %3139 = vmatpush1.bf16.msra.mxu0 %v3120
    %3140 = vmatprep.subr.bf16.mxu0 0
    %3141 = vmatpush1.bf16.msra.mxu0 %v3121
    %3142 = vmatprep.subr.bf16.mxu0 0
    %3143 = vmatpush1.bf16.msra.mxu0 %v3122
    %3144 = vmatprep.subr.bf16.mxu0 0
    %3145 = vmatpush1.bf16.msra.mxu0 %v3123
    %3146 = vmatprep.subr.bf16.mxu0 0
    %3147 = vmatpush1.bf16.msra.mxu0 %v3124
    %3148 = vmatprep.subr.bf16.mxu0 0
    %3149 = vmatpush1.bf16.msra.mxu0 %v3125
    %3150 = vmatprep.subr.bf16.mxu0 0
    %3151 = vmatpush1.bf16.msra.mxu0 0
    %3152 = vmatprep.subr.bf16.mxu0 0
    %3153 = vmatpush1.bf16.msra.mxu0 0
    %3154 = vmatprep.subr.bf16.mxu0 0
    %3155 = vmatpush1.bf16.msra.mxu0 0
    %3156 = vmatprep.subr.bf16.mxu0 0
    %3157 = vmatpush1.bf16.msra.mxu0 0
    %3158 = vmatprep.subr.bf16.mxu0 0
    %3159 = vmatpush1.bf16.msra.mxu0 0
    %3160 = vmatprep.subr.bf16.mxu0 0
    %3161 = vmatpush1.bf16.msra.mxu0 0
    %3162 = vmatprep.subr.bf16.mxu0 0
    %3163 = vmatpush1.bf16.msra.mxu0 0
    %3164 = vmatprep.subr.bf16.mxu0 0
    %3165 = vmatpush1.bf16.msra.mxu0 0
    %3166 = vmatprep.mubr.bf16.mxu0 0
    %3167 = vmatmul.mubr.bf16.gmra.mrb[0].mxu0 %v3059
    %v3168 = vpop.f32.mrb[0].mxu0
    %v3169 = vadd.f32 %v3084, %v3168
    %v3170 = vpop.f32.mrb[0].mxu0
    %v3171 = vpop.f32.mrb[0].mxu0
    %v3172 = vadd.f32 %v3084, %v3171
    %v3173 = vpop.f32.mrb[0].mxu0
    %3174 = vmatprep.mubr.bf16.mxu0 0
    %3175 = vmatmul.mubr.bf16.gmra.mrb[0].mxu0 %v3060
    %v3176 = vpop.f32.mrb[0].mxu0
    %v3177 = vadd.f32 %v3084, %v3176
    %v3178 = vpop.f32.mrb[0].mxu0
    %v3179 = vpop.f32.mrb[0].mxu0
    %v3180 = vadd.f32 %v3084, %v3179
    %v3181 = vpop.f32.mrb[0].mxu0
    %3182 = vdwg.mxu0
    %v3183 = vadd.f32 %v2010, %v3169
    %v3184 = vadd.f32 %v2011, %v3172
    %v3185 = vadd.f32 %v2012, %v3177
    %v3186 = vadd.f32 %v2013, %v3180
    %s3187 = scalar_lea.vmem %s9, 1
    %v3188 = vld [vmem:[%s3187] sm:$0x1]
    %s3189 = scalar_lea.vmem %s10, 1
    %v3190 = vld [vmem:[%s3189] sm:$0x1]
    %3191 = vadd.xlane.f32.xlu0 %v3183
    %v3192 = vpop.xlane.xlu0 %3191
    %3193 = vadd.xlane.f32.xlu0 %v3184
    %v3194 = vpop.xlane.xlu0 %3193
    %3195 = vadd.xlane.f32.xlu0 %v3185
    %v3196 = vpop.xlane.xlu0 %3195
    %3197 = vadd.xlane.f32.xlu0 %v3186
    %v3198 = vpop.xlane.xlu0 %3197
    %v3199 = vmul.f32 %v3192, %v1512
    %v3200 = vmul.f32 %v3194, %v1512
    %v3201 = vmul.f32 %v3196, %v1512
    %v3202 = vmul.f32 %v3198, %v1512
    %v3203 = vmul.f32 %v3183, %v3183
    %v3204 = vmul.f32 %v3184, %v3184
    %v3205 = vmul.f32 %v3185, %v3185
    %v3206 = vmul.f32 %v3186, %v3186
    %3207 = vadd.xlane.f32.xlu0 %v3203
    %v3208 = vpop.xlane.xlu0 %3207
    %3209 = vadd.xlane.f32.xlu0 %v3204
    %v3210 = vpop.xlane.xlu0 %3209
    %3211 = vadd.xlane.f32.xlu0 %v3205
    %v3212 = vpop.xlane.xlu0 %3211
    %3213 = vadd.xlane.f32.xlu0 %v3206
    %v3214 = vpop.xlane.xlu0 %3213
    %v3215 = vmul.f32 %v3208, %v1512
    %v3216 = vmul.f32 %v3210, %v1512
    %v3217 = vmul.f32 %v3212, %v1512
    %v3218 = vmul.f32 %v3214, %v1512
    %v3219 = vmul.f32 %v3199, %v3199
    %v3220 = vmul.f32 %v3200, %v3200
    %v3221 = vmul.f32 %v3201, %v3201
    %v3222 = vmul.f32 %v3202, %v3202
    %v3223 = vsub.f32 %v3215, %v3219
    %v3224 = vsub.f32 %v3216, %v3220
    %v3225 = vsub.f32 %v3217, %v3221
    %v3226 = vsub.f32 %v3218, %v3222
    %v3227 = vsub.f32 %v3183, %v3199
    %v3228 = vsub.f32 %v3184, %v3200
    %v3229 = vsub.f32 %v3185, %v3201
    %v3230 = vsub.f32 %v3186, %v3202
    %v3231 = vadd.f32 %v3223, 1e-05
    %v3232 = vadd.f32 %v3224, 1e-05
    %v3233 = vadd.f32 %v3225, 1e-05
    %v3234 = vadd.f32 %v3226, 1e-05
    %v3235 = vrsqrt.pop %v3231
    %v3236 = vrsqrt.pop %v3232
    %v3237 = vrsqrt.pop %v3233
    %v3238 = vrsqrt.pop %v3234
    %v3239 = vmul.f32 %v3227, %v3235
    %v3240 = vmul.f32 %v3228, %v3236
    %v3241 = vmul.f32 %v3229, %v3237
    %v3242 = vmul.f32 %v3230, %v3238
    %v3244 = vlaneseq
    %v3245 = vshrl.u32 %v3244, 7
    %v3246 = vsub.s32 0, %v3245
    %v3247 = vrot.slane %v3188, %v3246
    %v3249 = vmul.f32 %v3239, %v3247
    %v3250 = vmul.f32 %v3240, %v3247
    %v3251 = vmul.f32 %v3241, %v3247
    %v3252 = vmul.f32 %v3242, %v3247
    %v3254 = vlaneseq
    %v3255 = vshrl.u32 %v3254, 7
    %v3256 = vsub.s32 0, %v3255
    %v3257 = vrot.slane %v3190, %v3256
    %v3259 = vadd.f32 %v3249, %v3257
    %v3260 = vadd.f32 %v3250, %v3257
    %v3261 = vadd.f32 %v3251, %v3257
    %v3262 = vadd.f32 %v3252, %v3257
    %v3263 = vpack.c.bf16 %v3260, %v3259
    %v3264 = vpack.c.bf16 %v3262, %v3261
    %s3265 = scalar_lea.vmem [#allocation14], 128
    %v3266 = vld [vmem:[%s3265] sm:$0xff]
    %v3267 = vld [vmem:[%s3265 + $0x8] sm:$0xff]
    %v3268 = vld [vmem:[%s3265 + $0x10] sm:$0xff]
    %v3269 = vld [vmem:[%s3265 + $0x18] sm:$0xff]
    %v3270 = vld [vmem:[%s3265 + $0x20] sm:$0xff]
    %v3271 = vld [vmem:[%s3265 + $0x28] sm:$0xff]
    %v3272 = vld [vmem:[%s3265 + $0x30] sm:$0xff]
    %v3273 = vld [vmem:[%s3265 + $0x38] sm:$0xff]
    %v3274 = vld [vmem:[%s3265 + $0x40] sm:$0xff]
    %v3275 = vld [vmem:[%s3265 + $0x48] sm:$0xff]
    %v3276 = vld [vmem:[%s3265 + $0x50] sm:$0xff]
    %v3277 = vld [vmem:[%s3265 + $0x58] sm:$0xff]
    %v3278 = vld [vmem:[%s3265 + $0x60] sm:$0xff]
    %v3279 = vld [vmem:[%s3265 + $0x68] sm:$0xff]
    %v3280 = vld [vmem:[%s3265 + $0x70] sm:$0xff]
    %v3281 = vld [vmem:[%s3265 + $0x78] sm:$0xff]
    %s3282 = scalar_lea.vmem %s12, 2
    %v3283 = vld [vmem:[%s3282] sm:$0x3]
    %v3285 = vlaneseq
    %v3286 = vshrl.u32 %v3285, 7
    %v3287 = vsub.s32 0, %v3286
    %v3288 = vrot.slane %v3283, %v3287
    %v3289 = vlaneseq
    %v3290 = vshrl.u32 %v3289, 7
    %v3291 = vsub.s32 1, %v3290
    %v3292 = vrot.slane %v3283, %v3291
    %v3311 = vunpack.c.l.b16 %v3266
    %v3312 = vunpack.c.h.b16 %v3266
    %v3313 = vunpack.c.l.b16 %v3267
    %v3314 = vunpack.c.h.b16 %v3267
    %v3315 = vunpack.c.l.b16 %v3268
    %v3316 = vunpack.c.h.b16 %v3268
    %v3317 = vunpack.c.l.b16 %v3269
    %v3318 = vunpack.c.h.b16 %v3269
    %v3319 = vunpack.c.l.b16 %v3270
    %v3320 = vunpack.c.h.b16 %v3270
    %v3321 = vunpack.c.l.b16 %v3271
    %v3322 = vunpack.c.h.b16 %v3271
    %v3323 = vunpack.c.l.b16 %v3272
    %v3324 = vunpack.c.h.b16 %v3272
    %v3325 = vunpack.c.l.b16 %v3273
    %v3326 = vunpack.c.h.b16 %v3273
    %v3327 = vunpack.c.l.b16 %v3274
    %v3328 = vunpack.c.h.b16 %v3274
    %v3329 = vunpack.c.l.b16 %v3275
    %v3330 = vunpack.c.h.b16 %v3275
    %v3331 = vunpack.c.l.b16 %v3276
    %v3332 = vunpack.c.h.b16 %v3276
    %v3333 = vunpack.c.l.b16 %v3277
    %v3334 = vunpack.c.h.b16 %v3277
    %v3335 = vunpack.c.l.b16 %v3278
    %v3336 = vunpack.c.h.b16 %v3278
    %v3337 = vunpack.c.l.b16 %v3279
    %v3338 = vunpack.c.h.b16 %v3279
    %v3339 = vunpack.c.l.b16 %v3280
    %v3340 = vunpack.c.h.b16 %v3280
    %v3341 = vunpack.c.l.b16 %v3281
    %v3342 = vunpack.c.h.b16 %v3281
    %v3343 = vpack.c.b16 %v3313, %v3311
    %v3344 = vpack.c.b16 %v3314, %v3312
    %v3345 = vpack.c.b16 %v3317, %v3315
    %v3346 = vpack.c.b16 %v3318, %v3316
    %v3347 = vpack.c.b16 %v3321, %v3319
    %v3348 = vpack.c.b16 %v3322, %v3320
    %v3349 = vpack.c.b16 %v3325, %v3323
    %v3350 = vpack.c.b16 %v3326, %v3324
    %v3351 = vpack.c.b16 %v3329, %v3327
    %v3352 = vpack.c.b16 %v3330, %v3328
    %v3353 = vpack.c.b16 %v3333, %v3331
    %v3354 = vpack.c.b16 %v3334, %v3332
    %v3355 = vpack.c.b16 %v3337, %v3335
    %v3356 = vpack.c.b16 %v3338, %v3336
    %v3357 = vpack.c.b16 %v3341, %v3339
    %v3358 = vpack.c.b16 %v3342, %v3340
    %3375 = vmatprep.subr.bf16.mxu0 %v3344
    %3376 = vmatpush1.bf16.msra.mxu0 %v3343
    %3377 = vmatprep.subr.bf16.mxu0 %v3346
    %3378 = vmatpush1.bf16.msra.mxu0 %v3345
    %3379 = vmatprep.subr.bf16.mxu0 %v3348
    %3380 = vmatpush1.bf16.msra.mxu0 %v3347
    %3381 = vmatprep.subr.bf16.mxu0 %v3350
    %3382 = vmatpush1.bf16.msra.mxu0 %v3349
    %3383 = vmatprep.subr.bf16.mxu0 %v3352
    %3384 = vmatpush1.bf16.msra.mxu0 %v3351
    %3385 = vmatprep.subr.bf16.mxu0 %v3354
    %3386 = vmatpush1.bf16.msra.mxu0 %v3353
    %3387 = vmatprep.subr.bf16.mxu0 %v3356
    %3388 = vmatpush1.bf16.msra.mxu0 %v3355
    %3389 = vmatprep.subr.bf16.mxu0 %v3358
    %3390 = vmatpush1.bf16.msra.mxu0 %v3357
    %3391 = vmatprep.subr.bf16.mxu0 0
    %3392 = vmatpush1.bf16.msra.mxu0 0
    %3393 = vmatprep.subr.bf16.mxu0 0
    %3394 = vmatpush1.bf16.msra.mxu0 0
    %3395 = vmatprep.subr.bf16.mxu0 0
    %3396 = vmatpush1.bf16.msra.mxu0 0
    %3397 = vmatprep.subr.bf16.mxu0 0
    %3398 = vmatpush1.bf16.msra.mxu0 0
    %3399 = vmatprep.subr.bf16.mxu0 0
    %3400 = vmatpush1.bf16.msra.mxu0 0
    %3401 = vmatprep.subr.bf16.mxu0 0
    %3402 = vmatpush1.bf16.msra.mxu0 0
    %3403 = vmatprep.subr.bf16.mxu0 0
    %3404 = vmatpush1.bf16.msra.mxu0 0
    %3405 = vmatprep.subr.bf16.mxu0 0
    %3406 = vmatpush1.bf16.msra.mxu0 0
    %3407 = vmatprep.mubr.bf16.mxu0 0
    %3408 = vmatmul.mubr.bf16.gmra.mrb[0].mxu0 %v3263
    %v3409 = vpop.f32.mrb[0].mxu0
    %v3410 = vadd.f32 %v3288, %v3409
    %v3411 = vpop.f32.mrb[0].mxu0
    %v3412 = vadd.f32 %v3292, %v3411
    %v3413 = vpop.f32.mrb[0].mxu0
    %v3414 = vadd.f32 %v3288, %v3413
    %v3415 = vpop.f32.mrb[0].mxu0
    %v3416 = vadd.f32 %v3292, %v3415
    %3417 = vmatprep.mubr.bf16.mxu0 0
    %3418 = vmatmul.mubr.bf16.gmra.mrb[0].mxu0 %v3264
    %v3419 = vpop.f32.mrb[0].mxu0
    %v3420 = vadd.f32 %v3288, %v3419
    %v3421 = vpop.f32.mrb[0].mxu0
    %v3422 = vadd.f32 %v3292, %v3421
    %v3423 = vpop.f32.mrb[0].mxu0
    %v3424 = vadd.f32 %v3288, %v3423
    %v3425 = vpop.f32.mrb[0].mxu0
    %v3426 = vadd.f32 %v3292, %v3425
    %3427 = vdwg.mxu0
    %v3428 = vmax.f32 %v3410, 0.0
    %v3429 = vmax.f32 %v3412, 0.0
    %v3430 = vmax.f32 %v3414, 0.0
    %v3431 = vmax.f32 %v3416, 0.0
    %v3432 = vmax.f32 %v3420, 0.0
    %v3433 = vmax.f32 %v3422, 0.0
    %v3434 = vmax.f32 %v3424, 0.0
    %v3435 = vmax.f32 %v3426, 0.0
    %v3436 = vpack.c.bf16 %v3430, %v3428
    %v3437 = vpack.c.bf16 %v3431, %v3429
    %v3438 = vpack.c.bf16 %v3434, %v3432
    %v3439 = vpack.c.bf16 %v3435, %v3433
    %s3440 = scalar_lea.vmem [#allocation16], 128
    %v3441 = vld [vmem:[%s3440] sm:$0xf]
    %v3442 = vld [vmem:[%s3440 + $0x4] sm:$0xf]
    %v3443 = vld [vmem:[%s3440 + $0x8] sm:$0xf]
    %v3444 = vld [vmem:[%s3440 + $0xc] sm:$0xf]
    %v3445 = vld [vmem:[%s3440 + $0x10] sm:$0xf]
    %v3446 = vld [vmem:[%s3440 + $0x14] sm:$0xf]
    %v3447 = vld [vmem:[%s3440 + $0x18] sm:$0xf]
    %v3448 = vld [vmem:[%s3440 + $0x1c] sm:$0xf]
    %v3449 = vld [vmem:[%s3440 + $0x20] sm:$0xf]
    %v3450 = vld [vmem:[%s3440 + $0x24] sm:$0xf]
    %v3451 = vld [vmem:[%s3440 + $0x28] sm:$0xf]
    %v3452 = vld [vmem:[%s3440 + $0x2c] sm:$0xf]
    %v3453 = vld [vmem:[%s3440 + $0x30] sm:$0xf]
    %v3454 = vld [vmem:[%s3440 + $0x34] sm:$0xf]
    %v3455 = vld [vmem:[%s3440 + $0x38] sm:$0xf]
    %v3456 = vld [vmem:[%s3440 + $0x3c] sm:$0xf]
    %v3457 = vld [vmem:[%s3440 + $0x40] sm:$0xf]
    %v3458 = vld [vmem:[%s3440 + $0x44] sm:$0xf]
    %v3459 = vld [vmem:[%s3440 + $0x48] sm:$0xf]
    %v3460 = vld [vmem:[%s3440 + $0x4c] sm:$0xf]
    %v3461 = vld [vmem:[%s3440 + $0x50] sm:$0xf]
    %v3462 = vld [vmem:[%s3440 + $0x54] sm:$0xf]
    %v3463 = vld [vmem:[%s3440 + $0x58] sm:$0xf]
    %v3464 = vld [vmem:[%s3440 + $0x5c] sm:$0xf]
    %v3465 = vld [vmem:[%s3440 + $0x60] sm:$0xf]
    %v3466 = vld [vmem:[%s3440 + $0x64] sm:$0xf]
    %v3467 = vld [vmem:[%s3440 + $0x68] sm:$0xf]
    %v3468 = vld [vmem:[%s3440 + $0x6c] sm:$0xf]
    %v3469 = vld [vmem:[%s3440 + $0x70] sm:$0xf]
    %v3470 = vld [vmem:[%s3440 + $0x74] sm:$0xf]
    %v3471 = vld [vmem:[%s3440 + $0x78] sm:$0xf]
    %v3472 = vld [vmem:[%s3440 + $0x7c] sm:$0xf]
    %s3473 = scalar_lea.vmem %s14, 1
    %v3474 = vld [vmem:[%s3473] sm:$0x1]
    %v3476 = vlaneseq
    %v3477 = vshrl.u32 %v3476, 7
    %v3478 = vsub.s32 0, %v3477
    %v3479 = vrot.slane %v3474, %v3478
    %v3513 = vunpack.c.l.b16 %v3441
    %v3514 = vunpack.c.l.b16 %v3442
    %v3515 = vunpack.c.l.b16 %v3443
    %v3516 = vunpack.c.l.b16 %v3444
    %v3517 = vunpack.c.l.b16 %v3445
    %v3518 = vunpack.c.l.b16 %v3446
    %v3519 = vunpack.c.l.b16 %v3447
    %v3520 = vunpack.c.l.b16 %v3448
    %v3521 = vunpack.c.l.b16 %v3449
    %v3522 = vunpack.c.l.b16 %v3450
    %v3523 = vunpack.c.l.b16 %v3451
    %v3524 = vunpack.c.l.b16 %v3452
    %v3525 = vunpack.c.l.b16 %v3453
    %v3526 = vunpack.c.l.b16 %v3454
    %v3527 = vunpack.c.l.b16 %v3455
    %v3528 = vunpack.c.l.b16 %v3456
    %v3529 = vunpack.c.l.b16 %v3457
    %v3530 = vunpack.c.l.b16 %v3458
    %v3531 = vunpack.c.l.b16 %v3459
    %v3532 = vunpack.c.l.b16 %v3460
    %v3533 = vunpack.c.l.b16 %v3461
    %v3534 = vunpack.c.l.b16 %v3462
    %v3535 = vunpack.c.l.b16 %v3463
    %v3536 = vunpack.c.l.b16 %v3464
    %v3537 = vunpack.c.l.b16 %v3465
    %v3538 = vunpack.c.l.b16 %v3466
    %v3539 = vunpack.c.l.b16 %v3467
    %v3540 = vunpack.c.l.b16 %v3468
    %v3541 = vunpack.c.l.b16 %v3469
    %v3542 = vunpack.c.l.b16 %v3470
    %v3543 = vunpack.c.l.b16 %v3471
    %v3544 = vunpack.c.l.b16 %v3472
    %v3545 = vpack.c.b16 %v3514, %v3513
    %v3546 = vpack.c.b16 %v3516, %v3515
    %v3547 = vpack.c.b16 %v3518, %v3517
    %v3548 = vpack.c.b16 %v3520, %v3519
    %v3549 = vpack.c.b16 %v3522, %v3521
    %v3550 = vpack.c.b16 %v3524, %v3523
    %v3551 = vpack.c.b16 %v3526, %v3525
    %v3552 = vpack.c.b16 %v3528, %v3527
    %v3553 = vpack.c.b16 %v3530, %v3529
    %v3554 = vpack.c.b16 %v3532, %v3531
    %v3555 = vpack.c.b16 %v3534, %v3533
    %v3556 = vpack.c.b16 %v3536, %v3535
    %v3557 = vpack.c.b16 %v3538, %v3537
    %v3558 = vpack.c.b16 %v3540, %v3539
    %v3559 = vpack.c.b16 %v3542, %v3541
    %v3560 = vpack.c.b16 %v3544, %v3543
    %3577 = vmatprep.subr.bf16.mxu0 0
    %3578 = vmatpush1.bf16.msra.mxu0 %v3545
    %3579 = vmatprep.subr.bf16.mxu0 0
    %3580 = vmatpush1.bf16.msra.mxu0 %v3546
    %3581 = vmatprep.subr.bf16.mxu0 0
    %3582 = vmatpush1.bf16.msra.mxu0 %v3547
    %3583 = vmatprep.subr.bf16.mxu0 0
    %3584 = vmatpush1.bf16.msra.mxu0 %v3548
    %3585 = vmatprep.subr.bf16.mxu0 0
    %3586 = vmatpush1.bf16.msra.mxu0 %v3549
    %3587 = vmatprep.subr.bf16.mxu0 0
    %3588 = vmatpush1.bf16.msra.mxu0 %v3550
    %3589 = vmatprep.subr.bf16.mxu0 0
    %3590 = vmatpush1.bf16.msra.mxu0 %v3551
    %3591 = vmatprep.subr.bf16.mxu0 0
    %3592 = vmatpush1.bf16.msra.mxu0 %v3552
    %3593 = vmatprep.subr.bf16.mxu0 0
    %3594 = vmatpush1.bf16.msra.mxu0 %v3553
    %3595 = vmatprep.subr.bf16.mxu0 0
    %3596 = vmatpush1.bf16.msra.mxu0 %v3554
    %3597 = vmatprep.subr.bf16.mxu0 0
    %3598 = vmatpush1.bf16.msra.mxu0 %v3555
    %3599 = vmatprep.subr.bf16.mxu0 0
    %3600 = vmatpush1.bf16.msra.mxu0 %v3556
    %3601 = vmatprep.subr.bf16.mxu0 0
    %3602 = vmatpush1.bf16.msra.mxu0 %v3557
    %3603 = vmatprep.subr.bf16.mxu0 0
    %3604 = vmatpush1.bf16.msra.mxu0 %v3558
    %3605 = vmatprep.subr.bf16.mxu0 0
    %3606 = vmatpush1.bf16.msra.mxu0 %v3559
    %3607 = vmatprep.subr.bf16.mxu0 0
    %3608 = vmatpush1.bf16.msra.mxu0 %v3560
    %3609 = vmatprep.mubr.bf16.mxu0 %v3437
    %3610 = vmatmul.mubr.bf16.gmra.mrb[0].mxu0 %v3436
    %v3611 = vpop.f32.mrb[0].mxu0
    %v3612 = vadd.f32 %v3479, %v3611
    %v3613 = vpop.f32.mrb[0].mxu0
    %v3614 = vpop.f32.mrb[0].mxu0
    %v3615 = vadd.f32 %v3479, %v3614
    %v3616 = vpop.f32.mrb[0].mxu0
    %3617 = vmatprep.mubr.bf16.mxu0 %v3439
    %3618 = vmatmul.mubr.bf16.gmra.mrb[0].mxu0 %v3438
    %v3619 = vpop.f32.mrb[0].mxu0
    %v3620 = vadd.f32 %v3479, %v3619
    %v3621 = vpop.f32.mrb[0].mxu0
    %v3622 = vpop.f32.mrb[0].mxu0
    %v3623 = vadd.f32 %v3479, %v3622
    %v3624 = vpop.f32.mrb[0].mxu0
    %3625 = vdwg.mxu0
    %v3626 = vadd.f32 %v3259, %v3612
    %v3627 = vadd.f32 %v3260, %v3615
    %v3628 = vadd.f32 %v3261, %v3620
    %v3629 = vadd.f32 %v3262, %v3623
    %s3630 = scalar_lea.vmem %s15, 1
    %v3631 = vld [vmem:[%s3630] sm:$0x1]
    %s3632 = scalar_lea.vmem %s16, 1
    %v3633 = vld [vmem:[%s3632] sm:$0x1]
    %3634 = vadd.xlane.f32.xlu0 %v3626
    %v3635 = vpop.xlane.xlu0 %3634
    %3636 = vadd.xlane.f32.xlu0 %v3627
    %v3637 = vpop.xlane.xlu0 %3636
    %3638 = vadd.xlane.f32.xlu0 %v3628
    %v3639 = vpop.xlane.xlu0 %3638
    %3640 = vadd.xlane.f32.xlu0 %v3629
    %v3641 = vpop.xlane.xlu0 %3640
    %v3642 = vmul.f32 %v3635, %v1512
    %v3643 = vmul.f32 %v3637, %v1512
    %v3644 = vmul.f32 %v3639, %v1512
    %v3645 = vmul.f32 %v3641, %v1512
    %v3646 = vmul.f32 %v3626, %v3626
    %v3647 = vmul.f32 %v3627, %v3627
    %v3648 = vmul.f32 %v3628, %v3628
    %v3649 = vmul.f32 %v3629, %v3629
    %3650 = vadd.xlane.f32.xlu0 %v3646
    %v3651 = vpop.xlane.xlu0 %3650
    %3652 = vadd.xlane.f32.xlu0 %v3647
    %v3653 = vpop.xlane.xlu0 %3652
    %3654 = vadd.xlane.f32.xlu0 %v3648
    %v3655 = vpop.xlane.xlu0 %3654
    %3656 = vadd.xlane.f32.xlu0 %v3649
    %v3657 = vpop.xlane.xlu0 %3656
    %v3658 = vmul.f32 %v3651, %v1512
    %v3659 = vmul.f32 %v3653, %v1512
    %v3660 = vmul.f32 %v3655, %v1512
    %v3661 = vmul.f32 %v3657, %v1512
    %v3662 = vmul.f32 %v3642, %v3642
    %v3663 = vmul.f32 %v3643, %v3643
    %v3664 = vmul.f32 %v3644, %v3644
    %v3665 = vmul.f32 %v3645, %v3645
    %v3666 = vsub.f32 %v3658, %v3662
    %v3667 = vsub.f32 %v3659, %v3663
    %v3668 = vsub.f32 %v3660, %v3664
    %v3669 = vsub.f32 %v3661, %v3665
    %v3670 = vsub.f32 %v3626, %v3642
    %v3671 = vsub.f32 %v3627, %v3643
    %v3672 = vsub.f32 %v3628, %v3644
    %v3673 = vsub.f32 %v3629, %v3645
    %v3674 = vadd.f32 %v3666, 1e-05
    %v3675 = vadd.f32 %v3667, 1e-05
    %v3676 = vadd.f32 %v3668, 1e-05
    %v3677 = vadd.f32 %v3669, 1e-05
    %v3678 = vrsqrt.pop %v3674
    %v3679 = vrsqrt.pop %v3675
    %v3680 = vrsqrt.pop %v3676
    %v3681 = vrsqrt.pop %v3677
    %v3682 = vmul.f32 %v3670, %v3678
    %v3683 = vmul.f32 %v3671, %v3679
    %v3684 = vmul.f32 %v3672, %v3680
    %v3685 = vmul.f32 %v3673, %v3681
    %v3687 = vlaneseq
    %v3688 = vshrl.u32 %v3687, 7
    %v3689 = vsub.s32 0, %v3688
    %v3690 = vrot.slane %v3631, %v3689
    %v3692 = vmul.f32 %v3682, %v3690
    %v3693 = vmul.f32 %v3683, %v3690
    %v3694 = vmul.f32 %v3684, %v3690
    %v3695 = vmul.f32 %v3685, %v3690
    %v3697 = vlaneseq
    %v3698 = vshrl.u32 %v3697, 7
    %v3699 = vsub.s32 0, %v3698
    %v3700 = vrot.slane %v3633, %v3699
    %v3702 = vadd.f32 %v3692, %v3700
    %v3703 = vadd.f32 %v3693, %v3700
    %v3704 = vadd.f32 %v3694, %v3700
    %v3705 = vadd.f32 %v3695, %v3700
    %v3706 = vpack.c.bf16 %v3703, %v3702
    %v3707 = vpack.c.bf16 %v3705, %v3704
    %v3710 = vunpack.c.l.b16 %v3706
    %v3711 = vunpack.c.h.b16 %v3706
    %v3712 = vunpack.c.l.b16 %v3707
    %v3713 = vunpack.c.h.b16 %v3707
    %v3714 = vpack.c.b16 %v3710, %v3710
    %v3715 = vpack.c.b16 %v3711, %v3711
    %v3716 = vpack.c.b16 %v3712, %v3712
    %v3717 = vpack.c.b16 %v3713, %v3713
    %3722 = vst [vmem:[#allocation17] sm:$0xf] %v3714
    %3723 = vst [vmem:[#allocation17 + $0x4] sm:$0xf] %v3715
    %3724 = vst [vmem:[#allocation17 + $0x8] sm:$0xf] %v3716
    %3725 = vst [vmem:[#allocation17 + $0xc] sm:$0xf] %v3717
    // Predicated region
    $region106: #{tpu_custom_call.1} parent=1 // pred_check
      _
    $region107: #{tpu_custom_call.1} parent=1 // pred_check_branch
      %3727 = sbr.rel (0) target = $region109
    $region108: #{tpu_custom_call.1} parent=1 // pred_region
      %s3729 = ssub.s32 256, 256
      %3730 = vsyncadd [#allocation4], %s3729
      %s3731 = sshll.u32 [#allocation17], 4
      %s3732 = int_to_ptr.vmem [resolvable:$true] %s3731
      %3737 = dma.vmem_to_hbm [thread:$0]  %s3732, 256, %s17, [#allocation4], 64, 64, 4
    $region109: #{tpu_custom_call.1} parent=1 // pred_fallthru
      _
    // Predicated region
    $region110: #{tpu_custom_call.1} parent=1 // pred_check
      _
    $region111: #{tpu_custom_call.1} parent=1 // pred_check_branch
      %3739 = sbr.rel (0) target = $region113
    $region112: #{tpu_custom_call.1} parent=1 // pred_region
      %3740 = dma.done [#allocation4], 256
    $region113: #{tpu_custom_call.1} parent=1 // pred_fallthru
      _
    %3741 = vsyncpa [#allocation3], 1
    %3742 = vsyncpa [#allocation6], 1
    %3743 = vsyncpa [#allocation9], 1
    %3744 = vsyncpa [#allocation12], 1
    %3745 = vsyncpa [#allocation15], 1
    %3746 = vsyncpa [#allocation4], 1

</llo_original>
